<compile_context>
chip_gen: v7x
topology: tpu7x:2x2x1
jax: 0.10.0
libtpu: 0.0.40
codegen_flags: <defaults>
</compile_context>

<pallas_src>
import math

import jax
import jax.numpy as jnp
from jax.experimental import pallas as pl
from jax.experimental.pallas import tpu as pltpu


def _round_up(v, m):
    return (v + m - 1) // m * m


# ----------------------------------------------------------------------------
# Fused kernel: both bidirectional GRU stacks + fc head in one body.
# ----------------------------------------------------------------------------
def _make_bidir_gru_fc_kernel(T, BP, FEAT, GW, GOFF, L):
    def kernel(x_ref, wx_ref, wh_ref, b_ref, fcw_ref, fcb_ref, out_ref,
               buf_f0, buf_f1, buf_b0, buf_b1, xpf_ref, xpb_ref):
        # x_ref   : (T, BP, FEAT)   f32  time-major, zero-padded input
        # wx_ref  : (2, L, FEAT, GW) bf16 fused [Wz_x | Wg_x] per dir/layer
        # wh_ref  : (2, L, FEAT, GW) bf16 fused [Wz_h | Wg_h]
        # b_ref   : (2, L, 1, GW)   f32  fused (x-bias + h-bias)
        # fcw_ref : (2, FEAT, OUTP) f32  fc weight, split per direction slab
        # fcb_ref : (1, OUTP)       f32
        # out_ref : (BP, OUTP)      f32
        # buf_*   : (T, BP, FEAT)   f32  inter-layer sequences (ping-pong)
        # xp*_ref : (T, BP, GW)     f32  hoisted x-projection (+bias) per layer
        f_bufs = (buf_f0, buf_f1)
        b_bufs = (buf_b0, buf_b1)
        h_f_head = None
        h_b_head = None

        for l in range(L):
            in_f = x_ref if l == 0 else f_bufs[(l - 1) % 2]
            in_b = x_ref if l == 0 else b_bufs[(l - 1) % 2]
            last_layer = (l == L - 1)
            store_f = None if last_layer else f_bufs[l % 2]
            store_b = None if last_layer else b_bufs[l % 2]

            # Hoisted input projection (+ folded biases): one bf16 matmul per
            # direction per layer, off the serial recurrent chain.
            xf = in_f[...].reshape(T * BP, FEAT).astype(jnp.bfloat16)
            xpf_ref[...] = (
                jnp.dot(xf, wx_ref[0, l], preferred_element_type=jnp.float32)
                .reshape(T, BP, GW) + b_ref[0, l])
            xb = in_b[...].reshape(T * BP, FEAT).astype(jnp.bfloat16)
            xpb_ref[...] = (
                jnp.dot(xb, wx_ref[1, l], preferred_element_type=jnp.float32)
                .reshape(T, BP, GW) + b_ref[1, l])

            whf = wh_ref[0, l]                       # bf16 (FEAT, GW)
            whb = wh_ref[1, l]
            h_f = jnp.zeros((BP, GW), jnp.float32)   # each layer: zero hidden
            h_b = jnp.zeros((BP, GW), jnp.float32)

            # Statically unrolled time loop: fwd chain consumes index j, bwd
            # chain consumes the reversed index T-1-j.  Both chains are
            # independent within a step, so their latencies overlap.
            for j in range(T):
                pre_f = xpf_ref[j] + jnp.dot(
                    h_f.astype(jnp.bfloat16), whf,
                    preferred_element_type=jnp.float32)
                pre_b = xpb_ref[T - 1 - j] + jnp.dot(
                    h_b.astype(jnp.bfloat16), whb,
                    preferred_element_type=jnp.float32)
                # z preact lives in lanes [0,H); g preact in [GOFF, GOFF+H).
                # Half-vreg roll aligns g with z/h; garbage lanes >= H stay
                # bounded and are killed by zero-padded weight rows downstream.
                z_f = jax.nn.sigmoid(pre_f)
                z_b = jax.nn.sigmoid(pre_b)
                g_f = pltpu.roll(jnp.tanh(pre_f), shift=GOFF, axis=1)
                g_b = pltpu.roll(jnp.tanh(pre_b), shift=GOFF, axis=1)
                # NOTE: reference GRUCell's reset gate `ry` is never used in
                # its forward -> omitted.   h = g + z*(h-g) == z*h + (1-z)*g.
                h_f = g_f + z_f * (h_f - g_f)
                h_b = g_b + z_b * (h_b - g_b)
                if store_f is not None:              # last layer stores nothing
                    store_f[j] = h_f                 # processing order
                    store_b[j] = h_b
                if last_layer and j == 0:
                    h_b_head = h_b                   # outs_rev[0] of last layer
            if last_layer:
                h_f_head = h_f                       # outs[-1] of last layer

        # Fused fc head: concat([out_fwd, out_rev]) @ fc_w + fc_b expressed as
        # two f32 matmuls against the per-direction weight slabs (off the
        # serial chain, kept f32 for output precision).
        out_ref[...] = (
            jnp.dot(h_f_head, fcw_ref[0], preferred_element_type=jnp.float32)
            + jnp.dot(h_b_head, fcw_ref[1], preferred_element_type=jnp.float32)
            + fcb_ref[...])

    return kernel


def bidir_gru_fc(x_p, wx, wh, bb, fcw, fcb, *, T, BP, FEAT, GW, GOFF, L, OUTP):
    kernel = _make_bidir_gru_fc_kernel(T, BP, FEAT, GW, GOFF, L)
    return pl.pallas_call(
        kernel,
        out_shape=jax.ShapeDtypeStruct((BP, OUTP), jnp.float32),
        grid_spec=pltpu.PrefetchScalarGridSpec(
            num_scalar_prefetch=0,
            grid=(1,),
            in_specs=[
                pl.BlockSpec((T, BP, FEAT), lambda i: (0, 0, 0)),
                pl.BlockSpec((2, L, FEAT, GW), lambda i: (0, 0, 0, 0)),
                pl.BlockSpec((2, L, FEAT, GW), lambda i: (0, 0, 0, 0)),
                pl.BlockSpec((2, L, 1, GW), lambda i: (0, 0, 0, 0)),
                pl.BlockSpec((2, FEAT, OUTP), lambda i: (0, 0, 0)),
                pl.BlockSpec((1, OUTP), lambda i: (0, 0)),
            ],
            out_specs=pl.BlockSpec((BP, OUTP), lambda i: (0, 0)),
            scratch_shapes=[
                pltpu.VMEM((T, BP, FEAT), jnp.float32),   # fwd seq buf 0
                pltpu.VMEM((T, BP, FEAT), jnp.float32),   # fwd seq buf 1
                pltpu.VMEM((T, BP, FEAT), jnp.float32),   # bwd seq buf 0
                pltpu.VMEM((T, BP, FEAT), jnp.float32),   # bwd seq buf 1
                pltpu.VMEM((T, BP, GW), jnp.float32),     # xproj fwd
                pltpu.VMEM((T, BP, GW), jnp.float32),     # xproj bwd
            ]),
    )(x_p, wx, wh, bb, fcw, fcb)


# ----------------------------------------------------------------------------
# Host-side packing (lane-dense padding, fused gates, folded biases) + forward
# ----------------------------------------------------------------------------
def make_forward_fn(B, T, D, H, OUT, L):
    BP = _round_up(max(B, 8), 8)                 # >= 8 sublanes
    FEAT = _round_up(max(D, H, 128), 128)        # padded hidden/feature width
    GW = FEAT                                    # fused [z|g] gate slab width
    GOFF = GW // 2                               # g gate columns start here
    OUTP = _round_up(max(OUT, 128), 128)
    assert D <= FEAT and H <= FEAT
    assert FEAT == GW, "inter-layer buffers feed the next layer's wx directly"
    # TODO(synk): for H > GW//2 widen the slab to 2*FEAT and split at the
    # 128-lane vreg boundary instead of the half-vreg roll.
    assert H <= GOFF and 2 * GOFF == GW

    def pack_params(fwd_params, bwd_params, fc_w, fc_b):
        wx = jnp.zeros((2, L, FEAT, GW), jnp.float32)
        wh = jnp.zeros((2, L, FEAT, GW), jnp.float32)
        bb = jnp.zeros((2, L, 1, GW), jnp.float32)
        for d, plist in enumerate((fwd_params, bwd_params)):
            for l, p in enumerate(plist):
                din = p["wzx"].shape[0]
                wx = wx.at[d, l, :din, :H].set(p["wzx"])
                wx = wx.at[d, l, :din, GOFF:GOFF + H].set(p["wgx"])
                wh = wh.at[d, l, :H, :H].set(p["wzh"])
                wh = wh.at[d, l, :H, GOFF:GOFF + H].set(p["wgh"])
                bb = bb.at[d, l, 0, :H].set(p["bz"][0])
                bb = bb.at[d, l, 0, GOFF:GOFF + H].set(p["bg"][0])
        fcw = jnp.zeros((2, FEAT, OUTP), jnp.float32)
        fcw = fcw.at[0, :H, :OUT].set(fc_w[:H])     # forward-feature rows
        fcw = fcw.at[1, :H, :OUT].set(fc_w[H:])     # backward-feature rows
        fcb = jnp.zeros((1, OUTP), jnp.float32).at[0, :OUT].set(fc_b[0])
        # bf16 weights in HBM -> single-pass MXU matmuls, half the weight DMA.
        return wx.astype(jnp.bfloat16), wh.astype(jnp.bfloat16), bb, fcw, fcb

    @jax.jit
    def forward(x, wx, wh, bb, fcw, fcb):
        x_tm = jnp.transpose(x, (1, 0, 2))                        # (T, B, D)
        x_p = jnp.pad(x_tm, ((0, 0), (0, BP - B), (0, FEAT - D)))
        out_p = bidir_gru_fc(x_p, wx, wh, bb, fcw, fcb,
                             T=T, BP=BP, FEAT=FEAT, GW=GW, GOFF=GOFF,
                             L=L, OUTP=OUTP)
        return out_p[:B, :OUT]

    return pack_params, forward


# ----------------------------------------------------------------------------
# Deterministic parameter construction (mirrors reset_parameters: U(-std, std))
# ----------------------------------------------------------------------------
def make_gru_params(key, in_dim, hidden):
    std = 1.0 / math.sqrt(hidden)
    ks = jax.random.split(key, 12)
    u = lambda k, shape: jax.random.uniform(k, shape, jnp.float32, -std, std)
    # weights stored pre-transposed to (in, out) so kernels do x @ W + b
    params = {
        "wzx": u(ks[0], (in_dim, hidden)),
        "wzh": u(ks[1], (hidden, hidden)),
        "wgx": u(ks[2], (in_dim, hidden)),
        "wgh": u(ks[3], (hidden, hidden)),
        # combined biases: Linear-x bias + Linear-h bias
        "bz": (u(ks[4], (1, hidden)) + u(ks[5], (1, hidden))),
        "bg": (u(ks[6], (1, hidden)) + u(ks[7], (1, hidden))),
    }
    # reset-gate params exist in the PyTorch module but are unused in forward.
    _unused = (u(ks[8], (in_dim, hidden)), u(ks[9], (hidden, hidden)),
               u(ks[10], (1, hidden)), u(ks[11], (1, hidden)))
    del _unused
    return params


# ----------------------------------------------------------------------------
# Pure-JAX reference (for the in-script correctness checks)
# ----------------------------------------------------------------------------
def gru_layer_ref(seq, p, bf16_matmuls=False):
    T = seq.shape[0]
    B = seq.shape[1]
    H = p["wzh"].shape[0]

    def mm(a, w):
        if bf16_matmuls:
            return jnp.dot(a.astype(jnp.bfloat16), w.astype(jnp.bfloat16),
                           preferred_element_type=jnp.float32)
        return jnp.dot(a, w)

    h = jnp.zeros((B, H), jnp.float32)
    outs = []
    for t in range(T):
        x = seq[t]
        z = jax.nn.sigmoid(mm(x, p["wzx"]) + mm(h, p["wzh"]) + p["bz"])
        g = jnp.tanh(mm(x, p["wgx"]) + mm(h, p["wgh"]) + p["bg"])
        h = z * h + (1.0 - z) * g
        outs.append(h)
    return jnp.stack(outs, axis=0)


def forward_ref(x, fwd_params, bwd_params, fc_w, fc_b, bf16_matmuls=False):
    tmp = jnp.transpose(x, (1, 0, 2))
    for p in fwd_params:
        tmp = gru_layer_ref(tmp, p, bf16_matmuls)
    out_fwd = tmp[-1]
    tmp = jnp.transpose(x, (1, 0, 2))
    outs_rev = None
    for p in bwd_params:
        outs_rev = gru_layer_ref(tmp[::-1], p, bf16_matmuls)
        tmp = outs_rev
    out_rev = outs_rev[0]
    out = jnp.concatenate([out_fwd, out_rev], axis=1)
    return out @ fc_w + fc_b


# ----------------------------------------------------------------------------
if __name__ == "__main__":
    # small shapes consistent with the module's forward
    B, T = 4, 8
    INPUT_SIZE, HIDDEN, NUM_LAYERS, OUTPUT_SIZE = 16, 32, 2, 8

    root = jax.random.PRNGKey(0)
    kx, kf, kb, kfc = jax.random.split(root, 4)

    x = jax.random.normal(kx, (B, T, INPUT_SIZE), jnp.float32)

    fwd_keys = jax.random.split(kf, NUM_LAYERS)
    bwd_keys = jax.random.split(kb, NUM_LAYERS)
    fwd_params = [make_gru_params(fwd_keys[l],
                                  INPUT_SIZE if l == 0 else HIDDEN, HIDDEN)
                  for l in range(NUM_LAYERS)]
    bwd_params = [make_gru_params(bwd_keys[l],
                                  INPUT_SIZE if l == 0 else HIDDEN, HIDDEN)
                  for l in range(NUM_LAYERS)]

    std_fc = 1.0 / math.sqrt(2 * HIDDEN)
    k1, k2 = jax.random.split(kfc)
    fc_w = jax.random.uniform(k1, (2 * HIDDEN, OUTPUT_SIZE), jnp.float32,
                              -std_fc, std_fc)
    fc_b = jax.random.uniform(k2, (1, OUTPUT_SIZE), jnp.float32,
                              -std_fc, std_fc)
    # TODO(synk): att_fc (Linear(2H, 1)) is defined in __init__ but never used
    # in the reference forward, so it is not instantiated here.

    pack_params, forward = make_forward_fn(
        B, T, INPUT_SIZE, HIDDEN, OUTPUT_SIZE, NUM_LAYERS)
    packed = pack_params(fwd_params, bwd_params, fc_w, fc_b)

    out = jax.block_until_ready(forward(x, *packed))
    assert out.shape == (B, OUTPUT_SIZE)

    # Tight check vs a reference that applies the same intentional bf16
    # matmul-operand rounding (verifies dataflow / indexing / gate packing).
    ref_bf16 = forward_ref(x, fwd_params, bwd_params, fc_w, fc_b,
                           bf16_matmuls=True)
    assert jnp.allclose(out, ref_bf16, atol=2e-2, rtol=2e-2), \
        "mismatch vs bf16-matmul reference"

    # Loose sanity check vs the pure-f32 module semantics; bf16 operands are a
    # deliberate perf/precision tradeoff (expected deviation ~1e-2).
    ref_f32 = forward_ref(x, fwd_params, bwd_params, fc_w, fc_b,
                          bf16_matmuls=False)
    assert jnp.allclose(out, ref_f32, atol=2e-1, rtol=2e-1), \
        "mismatch vs f32 reference"

    print("KERNEL_OK")
</pallas_src>

<mosaic_0001>
module attributes {stable_mosaic.version = 11 : i64} {
  func.func @kernel(%arg0: i32, %arg1: memref<8x8x128xf32, #tpu.memory_space<vmem>>, %arg2: memref<2x2x128x128xbf16, #tpu.memory_space<vmem>>, %arg3: memref<2x2x128x128xbf16, #tpu.memory_space<vmem>>, %arg4: memref<2x2x1x128xf32, #tpu.memory_space<vmem>>, %arg5: memref<2x128x128xf32, #tpu.memory_space<vmem>>, %arg6: memref<1x128xf32, #tpu.memory_space<vmem>>, %arg7: memref<8x128xf32, #tpu.memory_space<vmem>>, %arg8: memref<8x8x128xf32, #tpu.memory_space<vmem>>, %arg9: memref<8x8x128xf32, #tpu.memory_space<vmem>>, %arg10: memref<8x8x128xf32, #tpu.memory_space<vmem>>, %arg11: memref<8x8x128xf32, #tpu.memory_space<vmem>>, %arg12: memref<8x8x128xf32, #tpu.memory_space<vmem>>, %arg13: memref<8x8x128xf32, #tpu.memory_space<vmem>>) attributes {dimension_semantics = [#tpu.dimension_semantics<arbitrary>], iteration_bounds = array<i64: 1>, scalar_prefetch = 0 : i64, scratch_operands = 6 : i64, tpu.core_type = #tpu.core_type<tc>, window_params = [{pipeline_mode = #tpu.pipeline_mode<synchronous>, transform_indices = @transform_0, window_bounds = array<i64: 8, 8, 128>}, {pipeline_mode = #tpu.pipeline_mode<synchronous>, transform_indices = @transform_1, window_bounds = array<i64: 2, 2, 128, 128>}, {pipeline_mode = #tpu.pipeline_mode<synchronous>, transform_indices = @transform_2, window_bounds = array<i64: 2, 2, 128, 128>}, {pipeline_mode = #tpu.pipeline_mode<synchronous>, transform_indices = @transform_3, window_bounds = array<i64: 2, 2, 1, 128>}, {pipeline_mode = #tpu.pipeline_mode<synchronous>, transform_indices = @transform_4, window_bounds = array<i64: 2, 128, 128>}, {pipeline_mode = #tpu.pipeline_mode<synchronous>, transform_indices = @transform_5, window_bounds = array<i64: 1, 128>}, {pipeline_mode = #tpu.pipeline_mode<synchronous>, transform_indices = @transform_6, window_bounds = array<i64: 8, 128>}]} {
    %c0 = arith.constant 0 : index
    %c0_0 = arith.constant 0 : index
    %c0_1 = arith.constant 0 : index
    %0 = vector.load %arg1[%c0, %c0_0, %c0_1] : memref<8x8x128xf32, #tpu.memory_space<vmem>>, vector<8x8x128xf32>
    %1 = vector.shape_cast %0 : vector<8x8x128xf32> to vector<64x128xf32>
    %2 = arith.truncf %1 : vector<64x128xf32> to vector<64x128xbf16>
    %c0_2 = arith.constant 0 : index
    %c0_3 = arith.constant 0 : index
    %c0_4 = arith.constant 0 : index
    %c0_5 = arith.constant 0 : index
    %3 = vector.load %arg2[%c0_2, %c0_3, %c0_4, %c0_5] : memref<2x2x128x128xbf16, #tpu.memory_space<vmem>>, vector<1x1x128x128xbf16>
    %4 = vector.shape_cast %3 : vector<1x1x128x128xbf16> to vector<128x128xbf16>
    %cst = arith.constant dense<0.000000e+00> : vector<64x128xf32>
    %5 = tpu.matmul %2, %4, %cst {dimension_numbers = #tpu.dot_dimension_numbers<[1], [0], [0], [1], [0, 0, 1, 1], [], []>} : vector<64x128xbf16>, vector<128x128xbf16>, vector<64x128xf32> -> vector<64x128xf32>
    %6 = vector.shape_cast %5 : vector<64x128xf32> to vector<8x8x128xf32>
    %c0_6 = arith.constant 0 : index
    %c0_7 = arith.constant 0 : index
    %c0_8 = arith.constant 0 : index
    %c0_9 = arith.constant 0 : index
    %7 = vector.load %arg4[%c0_6, %c0_7, %c0_8, %c0_9] : memref<2x2x1x128xf32, #tpu.memory_space<vmem>>, vector<1x1x1x128xf32>
    %8 = vector.shape_cast %7 : vector<1x1x1x128xf32> to vector<1x128xf32>
    %9 = vector.shape_cast %8 : vector<1x128xf32> to vector<1x1x128xf32>
    %10 = vector.broadcast %9 : vector<1x1x128xf32> to vector<8x8x128xf32>
    %11 = arith.addf %6, %10 : vector<8x8x128xf32>
    %c0_10 = arith.constant 0 : index
    %c0_11 = arith.constant 0 : index
    %c0_12 = arith.constant 0 : index
    %12 = vector.load %arg12[%c0_10, %c0_11, %c0_12] : memref<8x8x128xf32, #tpu.memory_space<vmem>>, vector<8x8x128xf32>
    tpu.vector_store %arg12[%c0_10, %c0_11, %c0_12], %11 {strides = array<i32>} : memref<8x8x128xf32, #tpu.memory_space<vmem>>, vector<8x8x128xf32>,
    %c0_13 = arith.constant 0 : index
    %c0_14 = arith.constant 0 : index
    %c0_15 = arith.constant 0 : index
    %13 = vector.load %arg1[%c0_13, %c0_14, %c0_15] : memref<8x8x128xf32, #tpu.memory_space<vmem>>, vector<8x8x128xf32>
    %14 = vector.shape_cast %13 : vector<8x8x128xf32> to vector<64x128xf32>
    %15 = arith.truncf %14 : vector<64x128xf32> to vector<64x128xbf16>
    %c1 = arith.constant 1 : index
    %c0_16 = arith.constant 0 : index
    %c0_17 = arith.constant 0 : index
    %c0_18 = arith.constant 0 : index
    %16 = vector.load %arg2[%c1, %c0_16, %c0_17, %c0_18] : memref<2x2x128x128xbf16, #tpu.memory_space<vmem>>, vector<1x1x128x128xbf16>
    %17 = vector.shape_cast %16 : vector<1x1x128x128xbf16> to vector<128x128xbf16>
    %cst_19 = arith.constant dense<0.000000e+00> : vector<64x128xf32>
    %18 = tpu.matmul %15, %17, %cst_19 {dimension_numbers = #tpu.dot_dimension_numbers<[1], [0], [0], [1], [0, 0, 1, 1], [], []>} : vector<64x128xbf16>, vector<128x128xbf16>, vector<64x128xf32> -> vector<64x128xf32>
    %19 = vector.shape_cast %18 : vector<64x128xf32> to vector<8x8x128xf32>
    %c1_20 = arith.constant 1 : index
    %c0_21 = arith.constant 0 : index
    %c0_22 = arith.constant 0 : index
    %c0_23 = arith.constant 0 : index
    %20 = vector.load %arg4[%c1_20, %c0_21, %c0_22, %c0_23] : memref<2x2x1x128xf32, #tpu.memory_space<vmem>>, vector<1x1x1x128xf32>
    %21 = vector.shape_cast %20 : vector<1x1x1x128xf32> to vector<1x128xf32>
    %22 = vector.shape_cast %21 : vector<1x128xf32> to vector<1x1x128xf32>
    %23 = vector.broadcast %22 : vector<1x1x128xf32> to vector<8x8x128xf32>
    %24 = arith.addf %19, %23 : vector<8x8x128xf32>
    %c0_24 = arith.constant 0 : index
    %c0_25 = arith.constant 0 : index
    %c0_26 = arith.constant 0 : index
    %25 = vector.load %arg13[%c0_24, %c0_25, %c0_26] : memref<8x8x128xf32, #tpu.memory_space<vmem>>, vector<8x8x128xf32>
    tpu.vector_store %arg13[%c0_24, %c0_25, %c0_26], %24 {strides = array<i32>} : memref<8x8x128xf32, #tpu.memory_space<vmem>>, vector<8x8x128xf32>,
    %c0_27 = arith.constant 0 : index
    %c0_28 = arith.constant 0 : index
    %c0_29 = arith.constant 0 : index
    %c0_30 = arith.constant 0 : index
    %26 = vector.load %arg3[%c0_27, %c0_28, %c0_29, %c0_30] : memref<2x2x128x128xbf16, #tpu.memory_space<vmem>>, vector<1x1x128x128xbf16>
    %27 = vector.shape_cast %26 : vector<1x1x128x128xbf16> to vector<128x128xbf16>
    %c1_31 = arith.constant 1 : index
    %c0_32 = arith.constant 0 : index
    %c0_33 = arith.constant 0 : index
    %c0_34 = arith.constant 0 : index
    %28 = vector.load %arg3[%c1_31, %c0_32, %c0_33, %c0_34] : memref<2x2x128x128xbf16, #tpu.memory_space<vmem>>, vector<1x1x128x128xbf16>
    %29 = vector.shape_cast %28 : vector<1x1x128x128xbf16> to vector<128x128xbf16>
    %cst_35 = arith.constant 0.000000e+00 : f32
    %30 = vector.broadcast %cst_35 : f32 to vector<8x128xf32>
    %cst_36 = arith.constant 0.000000e+00 : f32
    %31 = vector.broadcast %cst_36 : f32 to vector<8x128xf32>
    %c0_37 = arith.constant 0 : index
    %c0_38 = arith.constant 0 : index
    %c0_39 = arith.constant 0 : index
    %32 = vector.load %arg12[%c0_37, %c0_38, %c0_39] : memref<8x8x128xf32, #tpu.memory_space<vmem>>, vector<1x8x128xf32>
    %33 = vector.shape_cast %32 : vector<1x8x128xf32> to vector<8x128xf32>
    %34 = arith.truncf %30 : vector<8x128xf32> to vector<8x128xbf16>
    %cst_40 = arith.constant dense<0.000000e+00> : vector<8x128xf32>
    %35 = tpu.matmul %34, %27, %cst_40 {dimension_numbers = #tpu.dot_dimension_numbers<[1], [0], [0], [1], [0, 0, 1, 1], [], []>} : vector<8x128xbf16>, vector<128x128xbf16>, vector<8x128xf32> -> vector<8x128xf32>
    %36 = arith.addf %33, %35 : vector<8x128xf32>
    %c7 = arith.constant 7 : index
    %c0_41 = arith.constant 0 : index
    %c0_42 = arith.constant 0 : index
    %37 = vector.load %arg13[%c7, %c0_41, %c0_42] : memref<8x8x128xf32, #tpu.memory_space<vmem>>, vector<1x8x128xf32>
    %38 = vector.shape_cast %37 : vector<1x8x128xf32> to vector<8x128xf32>
    %39 = arith.truncf %31 : vector<8x128xf32> to vector<8x128xbf16>
    %cst_43 = arith.constant dense<0.000000e+00> : vector<8x128xf32>
    %40 = tpu.matmul %39, %29, %cst_43 {dimension_numbers = #tpu.dot_dimension_numbers<[1], [0], [0], [1], [0, 0, 1, 1], [], []>} : vector<8x128xbf16>, vector<128x128xbf16>, vector<8x128xf32> -> vector<8x128xf32>
    %41 = arith.addf %38, %40 : vector<8x128xf32>
    %42 = arith.negf %36 : vector<8x128xf32>
    %43 = math.exp %42 : vector<8x128xf32>
    %cst_44 = arith.constant 1.000000e+00 : f32
    %44 = vector.broadcast %cst_44 : f32 to vector<8x128xf32>
    %45 = arith.addf %44, %43 : vector<8x128xf32>
    %46 = arith.divf %44, %45 : vector<8x128xf32>
    %47 = arith.negf %41 : vector<8x128xf32>
    %48 = math.exp %47 : vector<8x128xf32>
    %cst_45 = arith.constant 1.000000e+00 : f32
    %49 = vector.broadcast %cst_45 : f32 to vector<8x128xf32>
    %50 = arith.addf %49, %48 : vector<8x128xf32>
    %51 = arith.divf %49, %50 : vector<8x128xf32>
    %52 = math.tanh %36 : vector<8x128xf32>
    %c64_i32 = arith.constant 64 : i32
    %53 = tpu.dynamic_rotate %52 by %c64_i32 dim 1 : vector<8x128xf32>, i32 -> vector<8x128xf32>
    %54 = math.tanh %41 : vector<8x128xf32>
    %c64_i32_46 = arith.constant 64 : i32
    %55 = tpu.dynamic_rotate %54 by %c64_i32_46 dim 1 : vector<8x128xf32>, i32 -> vector<8x128xf32>
    %56 = arith.subf %30, %53 : vector<8x128xf32>
    %57 = arith.mulf %46, %56 : vector<8x128xf32>
    %58 = arith.addf %53, %57 : vector<8x128xf32>
    %59 = arith.subf %31, %55 : vector<8x128xf32>
    %60 = arith.mulf %51, %59 : vector<8x128xf32>
    %61 = arith.addf %55, %60 : vector<8x128xf32>
    %c0_47 = arith.constant 0 : index
    %c0_48 = arith.constant 0 : index
    %c0_49 = arith.constant 0 : index
    %62 = vector.load %arg8[%c0_47, %c0_48, %c0_49] : memref<8x8x128xf32, #tpu.memory_space<vmem>>, vector<1x8x128xf32>
    %63 = vector.shape_cast %62 : vector<1x8x128xf32> to vector<8x128xf32>
    %64 = vector.shape_cast %58 : vector<8x128xf32> to vector<1x8x128xf32>
    tpu.vector_store %arg8[%c0_47, %c0_48, %c0_49], %64 {strides = array<i32>} : memref<8x8x128xf32, #tpu.memory_space<vmem>>, vector<1x8x128xf32>,
    %c0_50 = arith.constant 0 : index
    %c0_51 = arith.constant 0 : index
    %c0_52 = arith.constant 0 : index
    %65 = vector.load %arg10[%c0_50, %c0_51, %c0_52] : memref<8x8x128xf32, #tpu.memory_space<vmem>>, vector<1x8x128xf32>
    %66 = vector.shape_cast %65 : vector<1x8x128xf32> to vector<8x128xf32>
    %67 = vector.shape_cast %61 : vector<8x128xf32> to vector<1x8x128xf32>
    tpu.vector_store %arg10[%c0_50, %c0_51, %c0_52], %67 {strides = array<i32>} : memref<8x8x128xf32, #tpu.memory_space<vmem>>, vector<1x8x128xf32>,
    %c1_53 = arith.constant 1 : index
    %c0_54 = arith.constant 0 : index
    %c0_55 = arith.constant 0 : index
    %68 = vector.load %arg12[%c1_53, %c0_54, %c0_55] : memref<8x8x128xf32, #tpu.memory_space<vmem>>, vector<1x8x128xf32>
    %69 = vector.shape_cast %68 : vector<1x8x128xf32> to vector<8x128xf32>
    %70 = arith.truncf %58 : vector<8x128xf32> to vector<8x128xbf16>
    %cst_56 = arith.constant dense<0.000000e+00> : vector<8x128xf32>
    %71 = tpu.matmul %70, %27, %cst_56 {dimension_numbers = #tpu.dot_dimension_numbers<[1], [0], [0], [1], [0, 0, 1, 1], [], []>} : vector<8x128xbf16>, vector<128x128xbf16>, vector<8x128xf32> -> vector<8x128xf32>
    %72 = arith.addf %69, %71 : vector<8x128xf32>
    %c6 = arith.constant 6 : index
    %c0_57 = arith.constant 0 : index
    %c0_58 = arith.constant 0 : index
    %73 = vector.load %arg13[%c6, %c0_57, %c0_58] : memref<8x8x128xf32, #tpu.memory_space<vmem>>, vector<1x8x128xf32>
    %74 = vector.shape_cast %73 : vector<1x8x128xf32> to vector<8x128xf32>
    %75 = arith.truncf %61 : vector<8x128xf32> to vector<8x128xbf16>
    %cst_59 = arith.constant dense<0.000000e+00> : vector<8x128xf32>
    %76 = tpu.matmul %75, %29, %cst_59 {dimension_numbers = #tpu.dot_dimension_numbers<[1], [0], [0], [1], [0, 0, 1, 1], [], []>} : vector<8x128xbf16>, vector<128x128xbf16>, vector<8x128xf32> -> vector<8x128xf32>
    %77 = arith.addf %74, %76 : vector<8x128xf32>
    %78 = arith.negf %72 : vector<8x128xf32>
    %79 = math.exp %78 : vector<8x128xf32>
    %cst_60 = arith.constant 1.000000e+00 : f32
    %80 = vector.broadcast %cst_60 : f32 to vector<8x128xf32>
    %81 = arith.addf %80, %79 : vector<8x128xf32>
    %82 = arith.divf %80, %81 : vector<8x128xf32>
    %83 = arith.negf %77 : vector<8x128xf32>
    %84 = math.exp %83 : vector<8x128xf32>
    %cst_61 = arith.constant 1.000000e+00 : f32
    %85 = vector.broadcast %cst_61 : f32 to vector<8x128xf32>
    %86 = arith.addf %85, %84 : vector<8x128xf32>
    %87 = arith.divf %85, %86 : vector<8x128xf32>
    %88 = math.tanh %72 : vector<8x128xf32>
    %c64_i32_62 = arith.constant 64 : i32
    %89 = tpu.dynamic_rotate %88 by %c64_i32_62 dim 1 : vector<8x128xf32>, i32 -> vector<8x128xf32>
    %90 = math.tanh %77 : vector<8x128xf32>
    %c64_i32_63 = arith.constant 64 : i32
    %91 = tpu.dynamic_rotate %90 by %c64_i32_63 dim 1 : vector<8x128xf32>, i32 -> vector<8x128xf32>
    %92 = arith.subf %58, %89 : vector<8x128xf32>
    %93 = arith.mulf %82, %92 : vector<8x128xf32>
    %94 = arith.addf %89, %93 : vector<8x128xf32>
    %95 = arith.subf %61, %91 : vector<8x128xf32>
    %96 = arith.mulf %87, %95 : vector<8x128xf32>
    %97 = arith.addf %91, %96 : vector<8x128xf32>
    %c1_64 = arith.constant 1 : index
    %c0_65 = arith.constant 0 : index
    %c0_66 = arith.constant 0 : index
    %98 = vector.load %arg8[%c1_64, %c0_65, %c0_66] : memref<8x8x128xf32, #tpu.memory_space<vmem>>, vector<1x8x128xf32>
    %99 = vector.shape_cast %98 : vector<1x8x128xf32> to vector<8x128xf32>
    %100 = vector.shape_cast %94 : vector<8x128xf32> to vector<1x8x128xf32>
    tpu.vector_store %arg8[%c1_64, %c0_65, %c0_66], %100 {strides = array<i32>} : memref<8x8x128xf32, #tpu.memory_space<vmem>>, vector<1x8x128xf32>,
    %c1_67 = arith.constant 1 : index
    %c0_68 = arith.constant 0 : index
    %c0_69 = arith.constant 0 : index
    %101 = vector.load %arg10[%c1_67, %c0_68, %c0_69] : memref<8x8x128xf32, #tpu.memory_space<vmem>>, vector<1x8x128xf32>
    %102 = vector.shape_cast %101 : vector<1x8x128xf32> to vector<8x128xf32>
    %103 = vector.shape_cast %97 : vector<8x128xf32> to vector<1x8x128xf32>
    tpu.vector_store %arg10[%c1_67, %c0_68, %c0_69], %103 {strides = array<i32>} : memref<8x8x128xf32, #tpu.memory_space<vmem>>, vector<1x8x128xf32>,
    %c2 = arith.constant 2 : index
    %c0_70 = arith.constant 0 : index
    %c0_71 = arith.constant 0 : index
    %104 = vector.load %arg12[%c2, %c0_70, %c0_71] : memref<8x8x128xf32, #tpu.memory_space<vmem>>, vector<1x8x128xf32>
    %105 = vector.shape_cast %104 : vector<1x8x128xf32> to vector<8x128xf32>
    %106 = arith.truncf %94 : vector<8x128xf32> to vector<8x128xbf16>
    %cst_72 = arith.constant dense<0.000000e+00> : vector<8x128xf32>
    %107 = tpu.matmul %106, %27, %cst_72 {dimension_numbers = #tpu.dot_dimension_numbers<[1], [0], [0], [1], [0, 0, 1, 1], [], []>} : vector<8x128xbf16>, vector<128x128xbf16>, vector<8x128xf32> -> vector<8x128xf32>
    %108 = arith.addf %105, %107 : vector<8x128xf32>
    %c5 = arith.constant 5 : index
    %c0_73 = arith.constant 0 : index
    %c0_74 = arith.constant 0 : index
    %109 = vector.load %arg13[%c5, %c0_73, %c0_74] : memref<8x8x128xf32, #tpu.memory_space<vmem>>, vector<1x8x128xf32>
    %110 = vector.shape_cast %109 : vector<1x8x128xf32> to vector<8x128xf32>
    %111 = arith.truncf %97 : vector<8x128xf32> to vector<8x128xbf16>
    %cst_75 = arith.constant dense<0.000000e+00> : vector<8x128xf32>
    %112 = tpu.matmul %111, %29, %cst_75 {dimension_numbers = #tpu.dot_dimension_numbers<[1], [0], [0], [1], [0, 0, 1, 1], [], []>} : vector<8x128xbf16>, vector<128x128xbf16>, vector<8x128xf32> -> vector<8x128xf32>
    %113 = arith.addf %110, %112 : vector<8x128xf32>
    %114 = arith.negf %108 : vector<8x128xf32>
    %115 = math.exp %114 : vector<8x128xf32>
    %cst_76 = arith.constant 1.000000e+00 : f32
    %116 = vector.broadcast %cst_76 : f32 to vector<8x128xf32>
    %117 = arith.addf %116, %115 : vector<8x128xf32>
    %118 = arith.divf %116, %117 : vector<8x128xf32>
    %119 = arith.negf %113 : vector<8x128xf32>
    %120 = math.exp %119 : vector<8x128xf32>
    %cst_77 = arith.constant 1.000000e+00 : f32
    %121 = vector.broadcast %cst_77 : f32 to vector<8x128xf32>
    %122 = arith.addf %121, %120 : vector<8x128xf32>
    %123 = arith.divf %121, %122 : vector<8x128xf32>
    %124 = math.tanh %108 : vector<8x128xf32>
    %c64_i32_78 = arith.constant 64 : i32
    %125 = tpu.dynamic_rotate %124 by %c64_i32_78 dim 1 : vector<8x128xf32>, i32 -> vector<8x128xf32>
    %126 = math.tanh %113 : vector<8x128xf32>
    %c64_i32_79 = arith.constant 64 : i32
    %127 = tpu.dynamic_rotate %126 by %c64_i32_79 dim 1 : vector<8x128xf32>, i32 -> vector<8x128xf32>
    %128 = arith.subf %94, %125 : vector<8x128xf32>
    %129 = arith.mulf %118, %128 : vector<8x128xf32>
    %130 = arith.addf %125, %129 : vector<8x128xf32>
    %131 = arith.subf %97, %127 : vector<8x128xf32>
    %132 = arith.mulf %123, %131 : vector<8x128xf32>
    %133 = arith.addf %127, %132 : vector<8x128xf32>
    %c2_80 = arith.constant 2 : index
    %c0_81 = arith.constant 0 : index
    %c0_82 = arith.constant 0 : index
    %134 = vector.load %arg8[%c2_80, %c0_81, %c0_82] : memref<8x8x128xf32, #tpu.memory_space<vmem>>, vector<1x8x128xf32>
    %135 = vector.shape_cast %134 : vector<1x8x128xf32> to vector<8x128xf32>
    %136 = vector.shape_cast %130 : vector<8x128xf32> to vector<1x8x128xf32>
    tpu.vector_store %arg8[%c2_80, %c0_81, %c0_82], %136 {strides = array<i32>} : memref<8x8x128xf32, #tpu.memory_space<vmem>>, vector<1x8x128xf32>,
    %c2_83 = arith.constant 2 : index
    %c0_84 = arith.constant 0 : index
    %c0_85 = arith.constant 0 : index
    %137 = vector.load %arg10[%c2_83, %c0_84, %c0_85] : memref<8x8x128xf32, #tpu.memory_space<vmem>>, vector<1x8x128xf32>
    %138 = vector.shape_cast %137 : vector<1x8x128xf32> to vector<8x128xf32>
    %139 = vector.shape_cast %133 : vector<8x128xf32> to vector<1x8x128xf32>
    tpu.vector_store %arg10[%c2_83, %c0_84, %c0_85], %139 {strides = array<i32>} : memref<8x8x128xf32, #tpu.memory_space<vmem>>, vector<1x8x128xf32>,
    %c3 = arith.constant 3 : index
    %c0_86 = arith.constant 0 : index
    %c0_87 = arith.constant 0 : index
    %140 = vector.load %arg12[%c3, %c0_86, %c0_87] : memref<8x8x128xf32, #tpu.memory_space<vmem>>, vector<1x8x128xf32>
    %141 = vector.shape_cast %140 : vector<1x8x128xf32> to vector<8x128xf32>
    %142 = arith.truncf %130 : vector<8x128xf32> to vector<8x128xbf16>
    %cst_88 = arith.constant dense<0.000000e+00> : vector<8x128xf32>
    %143 = tpu.matmul %142, %27, %cst_88 {dimension_numbers = #tpu.dot_dimension_numbers<[1], [0], [0], [1], [0, 0, 1, 1], [], []>} : vector<8x128xbf16>, vector<128x128xbf16>, vector<8x128xf32> -> vector<8x128xf32>
    %144 = arith.addf %141, %143 : vector<8x128xf32>
    %c4 = arith.constant 4 : index
    %c0_89 = arith.constant 0 : index
    %c0_90 = arith.constant 0 : index
    %145 = vector.load %arg13[%c4, %c0_89, %c0_90] : memref<8x8x128xf32, #tpu.memory_space<vmem>>, vector<1x8x128xf32>
    %146 = vector.shape_cast %145 : vector<1x8x128xf32> to vector<8x128xf32>
    %147 = arith.truncf %133 : vector<8x128xf32> to vector<8x128xbf16>
    %cst_91 = arith.constant dense<0.000000e+00> : vector<8x128xf32>
    %148 = tpu.matmul %147, %29, %cst_91 {dimension_numbers = #tpu.dot_dimension_numbers<[1], [0], [0], [1], [0, 0, 1, 1], [], []>} : vector<8x128xbf16>, vector<128x128xbf16>, vector<8x128xf32> -> vector<8x128xf32>
    %149 = arith.addf %146, %148 : vector<8x128xf32>
    %150 = arith.negf %144 : vector<8x128xf32>
    %151 = math.exp %150 : vector<8x128xf32>
    %cst_92 = arith.constant 1.000000e+00 : f32
    %152 = vector.broadcast %cst_92 : f32 to vector<8x128xf32>
    %153 = arith.addf %152, %151 : vector<8x128xf32>
    %154 = arith.divf %152, %153 : vector<8x128xf32>
    %155 = arith.negf %149 : vector<8x128xf32>
    %156 = math.exp %155 : vector<8x128xf32>
    %cst_93 = arith.constant 1.000000e+00 : f32
    %157 = vector.broadcast %cst_93 : f32 to vector<8x128xf32>
    %158 = arith.addf %157, %156 : vector<8x128xf32>
    %159 = arith.divf %157, %158 : vector<8x128xf32>
    %160 = math.tanh %144 : vector<8x128xf32>
    %c64_i32_94 = arith.constant 64 : i32
    %161 = tpu.dynamic_rotate %160 by %c64_i32_94 dim 1 : vector<8x128xf32>, i32 -> vector<8x128xf32>
    %162 = math.tanh %149 : vector<8x128xf32>
    %c64_i32_95 = arith.constant 64 : i32
    %163 = tpu.dynamic_rotate %162 by %c64_i32_95 dim 1 : vector<8x128xf32>, i32 -> vector<8x128xf32>
    %164 = arith.subf %130, %161 : vector<8x128xf32>
    %165 = arith.mulf %154, %164 : vector<8x128xf32>
    %166 = arith.addf %161, %165 : vector<8x128xf32>
    %167 = arith.subf %133, %163 : vector<8x128xf32>
    %168 = arith.mulf %159, %167 : vector<8x128xf32>
    %169 = arith.addf %163, %168 : vector<8x128xf32>
    %c3_96 = arith.constant 3 : index
    %c0_97 = arith.constant 0 : index
    %c0_98 = arith.constant 0 : index
    %170 = vector.load %arg8[%c3_96, %c0_97, %c0_98] : memref<8x8x128xf32, #tpu.memory_space<vmem>>, vector<1x8x128xf32>
    %171 = vector.shape_cast %170 : vector<1x8x128xf32> to vector<8x128xf32>
    %172 = vector.shape_cast %166 : vector<8x128xf32> to vector<1x8x128xf32>
    tpu.vector_store %arg8[%c3_96, %c0_97, %c0_98], %172 {strides = array<i32>} : memref<8x8x128xf32, #tpu.memory_space<vmem>>, vector<1x8x128xf32>,
    %c3_99 = arith.constant 3 : index
    %c0_100 = arith.constant 0 : index
    %c0_101 = arith.constant 0 : index
    %173 = vector.load %arg10[%c3_99, %c0_100, %c0_101] : memref<8x8x128xf32, #tpu.memory_space<vmem>>, vector<1x8x128xf32>
    %174 = vector.shape_cast %173 : vector<1x8x128xf32> to vector<8x128xf32>
    %175 = vector.shape_cast %169 : vector<8x128xf32> to vector<1x8x128xf32>
    tpu.vector_store %arg10[%c3_99, %c0_100, %c0_101], %175 {strides = array<i32>} : memref<8x8x128xf32, #tpu.memory_space<vmem>>, vector<1x8x128xf32>,
    %c4_102 = arith.constant 4 : index
    %c0_103 = arith.constant 0 : index
    %c0_104 = arith.constant 0 : index
    %176 = vector.load %arg12[%c4_102, %c0_103, %c0_104] : memref<8x8x128xf32, #tpu.memory_space<vmem>>, vector<1x8x128xf32>
    %177 = vector.shape_cast %176 : vector<1x8x128xf32> to vector<8x128xf32>
    %178 = arith.truncf %166 : vector<8x128xf32> to vector<8x128xbf16>
    %cst_105 = arith.constant dense<0.000000e+00> : vector<8x128xf32>
    %179 = tpu.matmul %178, %27, %cst_105 {dimension_numbers = #tpu.dot_dimension_numbers<[1], [0], [0], [1], [0, 0, 1, 1], [], []>} : vector<8x128xbf16>, vector<128x128xbf16>, vector<8x128xf32> -> vector<8x128xf32>
    %180 = arith.addf %177, %179 : vector<8x128xf32>
    %c3_106 = arith.constant 3 : index
    %c0_107 = arith.constant 0 : index
    %c0_108 = arith.constant 0 : index
    %181 = vector.load %arg13[%c3_106, %c0_107, %c0_108] : memref<8x8x128xf32, #tpu.memory_space<vmem>>, vector<1x8x128xf32>
    %182 = vector.shape_cast %181 : vector<1x8x128xf32> to vector<8x128xf32>
    %183 = arith.truncf %169 : vector<8x128xf32> to vector<8x128xbf16>
    %cst_109 = arith.constant dense<0.000000e+00> : vector<8x128xf32>
    %184 = tpu.matmul %183, %29, %cst_109 {dimension_numbers = #tpu.dot_dimension_numbers<[1], [0], [0], [1], [0, 0, 1, 1], [], []>} : vector<8x128xbf16>, vector<128x128xbf16>, vector<8x128xf32> -> vector<8x128xf32>
    %185 = arith.addf %182, %184 : vector<8x128xf32>
    %186 = arith.negf %180 : vector<8x128xf32>
    %187 = math.exp %186 : vector<8x128xf32>
    %cst_110 = arith.constant 1.000000e+00 : f32
    %188 = vector.broadcast %cst_110 : f32 to vector<8x128xf32>
    %189 = arith.addf %188, %187 : vector<8x128xf32>
    %190 = arith.divf %188, %189 : vector<8x128xf32>
    %191 = arith.negf %185 : vector<8x128xf32>
    %192 = math.exp %191 : vector<8x128xf32>
    %cst_111 = arith.constant 1.000000e+00 : f32
    %193 = vector.broadcast %cst_111 : f32 to vector<8x128xf32>
    %194 = arith.addf %193, %192 : vector<8x128xf32>
    %195 = arith.divf %193, %194 : vector<8x128xf32>
    %196 = math.tanh %180 : vector<8x128xf32>
    %c64_i32_112 = arith.constant 64 : i32
    %197 = tpu.dynamic_rotate %196 by %c64_i32_112 dim 1 : vector<8x128xf32>, i32 -> vector<8x128xf32>
    %198 = math.tanh %185 : vector<8x128xf32>
    %c64_i32_113 = arith.constant 64 : i32
    %199 = tpu.dynamic_rotate %198 by %c64_i32_113 dim 1 : vector<8x128xf32>, i32 -> vector<8x128xf32>
    %200 = arith.subf %166, %197 : vector<8x128xf32>
    %201 = arith.mulf %190, %200 : vector<8x128xf32>
    %202 = arith.addf %197, %201 : vector<8x128xf32>
    %203 = arith.subf %169, %199 : vector<8x128xf32>
    %204 = arith.mulf %195, %203 : vector<8x128xf32>
    %205 = arith.addf %199, %204 : vector<8x128xf32>
    %c4_114 = arith.constant 4 : index
    %c0_115 = arith.constant 0 : index
    %c0_116 = arith.constant 0 : index
    %206 = vector.load %arg8[%c4_114, %c0_115, %c0_116] : memref<8x8x128xf32, #tpu.memory_space<vmem>>, vector<1x8x128xf32>
    %207 = vector.shape_cast %206 : vector<1x8x128xf32> to vector<8x128xf32>
    %208 = vector.shape_cast %202 : vector<8x128xf32> to vector<1x8x128xf32>
    tpu.vector_store %arg8[%c4_114, %c0_115, %c0_116], %208 {strides = array<i32>} : memref<8x8x128xf32, #tpu.memory_space<vmem>>, vector<1x8x128xf32>,
    %c4_117 = arith.constant 4 : index
    %c0_118 = arith.constant 0 : index
    %c0_119 = arith.constant 0 : index
    %209 = vector.load %arg10[%c4_117, %c0_118, %c0_119] : memref<8x8x128xf32, #tpu.memory_space<vmem>>, vector<1x8x128xf32>
    %210 = vector.shape_cast %209 : vector<1x8x128xf32> to vector<8x128xf32>
    %211 = vector.shape_cast %205 : vector<8x128xf32> to vector<1x8x128xf32>
    tpu.vector_store %arg10[%c4_117, %c0_118, %c0_119], %211 {strides = array<i32>} : memref<8x8x128xf32, #tpu.memory_space<vmem>>, vector<1x8x128xf32>,
    %c5_120 = arith.constant 5 : index
    %c0_121 = arith.constant 0 : index
    %c0_122 = arith.constant 0 : index
    %212 = vector.load %arg12[%c5_120, %c0_121, %c0_122] : memref<8x8x128xf32, #tpu.memory_space<vmem>>, vector<1x8x128xf32>
    %213 = vector.shape_cast %212 : vector<1x8x128xf32> to vector<8x128xf32>
    %214 = arith.truncf %202 : vector<8x128xf32> to vector<8x128xbf16>
    %cst_123 = arith.constant dense<0.000000e+00> : vector<8x128xf32>
    %215 = tpu.matmul %214, %27, %cst_123 {dimension_numbers = #tpu.dot_dimension_numbers<[1], [0], [0], [1], [0, 0, 1, 1], [], []>} : vector<8x128xbf16>, vector<128x128xbf16>, vector<8x128xf32> -> vector<8x128xf32>
    %216 = arith.addf %213, %215 : vector<8x128xf32>
    %c2_124 = arith.constant 2 : index
    %c0_125 = arith.constant 0 : index
    %c0_126 = arith.constant 0 : index
    %217 = vector.load %arg13[%c2_124, %c0_125, %c0_126] : memref<8x8x128xf32, #tpu.memory_space<vmem>>, vector<1x8x128xf32>
    %218 = vector.shape_cast %217 : vector<1x8x128xf32> to vector<8x128xf32>
    %219 = arith.truncf %205 : vector<8x128xf32> to vector<8x128xbf16>
    %cst_127 = arith.constant dense<0.000000e+00> : vector<8x128xf32>
    %220 = tpu.matmul %219, %29, %cst_127 {dimension_numbers = #tpu.dot_dimension_numbers<[1], [0], [0], [1], [0, 0, 1, 1], [], []>} : vector<8x128xbf16>, vector<128x128xbf16>, vector<8x128xf32> -> vector<8x128xf32>
    %221 = arith.addf %218, %220 : vector<8x128xf32>
    %222 = arith.negf %216 : vector<8x128xf32>
    %223 = math.exp %222 : vector<8x128xf32>
    %cst_128 = arith.constant 1.000000e+00 : f32
    %224 = vector.broadcast %cst_128 : f32 to vector<8x128xf32>
    %225 = arith.addf %224, %223 : vector<8x128xf32>
    %226 = arith.divf %224, %225 : vector<8x128xf32>
    %227 = arith.negf %221 : vector<8x128xf32>
    %228 = math.exp %227 : vector<8x128xf32>
    %cst_129 = arith.constant 1.000000e+00 : f32
    %229 = vector.broadcast %cst_129 : f32 to vector<8x128xf32>
    %230 = arith.addf %229, %228 : vector<8x128xf32>
    %231 = arith.divf %229, %230 : vector<8x128xf32>
    %232 = math.tanh %216 : vector<8x128xf32>
    %c64_i32_130 = arith.constant 64 : i32
    %233 = tpu.dynamic_rotate %232 by %c64_i32_130 dim 1 : vector<8x128xf32>, i32 -> vector<8x128xf32>
    %234 = math.tanh %221 : vector<8x128xf32>
    %c64_i32_131 = arith.constant 64 : i32
    %235 = tpu.dynamic_rotate %234 by %c64_i32_131 dim 1 : vector<8x128xf32>, i32 -> vector<8x128xf32>
    %236 = arith.subf %202, %233 : vector<8x128xf32>
    %237 = arith.mulf %226, %236 : vector<8x128xf32>
    %238 = arith.addf %233, %237 : vector<8x128xf32>
    %239 = arith.subf %205, %235 : vector<8x128xf32>
    %240 = arith.mulf %231, %239 : vector<8x128xf32>
    %241 = arith.addf %235, %240 : vector<8x128xf32>
    %c5_132 = arith.constant 5 : index
    %c0_133 = arith.constant 0 : index
    %c0_134 = arith.constant 0 : index
    %242 = vector.load %arg8[%c5_132, %c0_133, %c0_134] : memref<8x8x128xf32, #tpu.memory_space<vmem>>, vector<1x8x128xf32>
    %243 = vector.shape_cast %242 : vector<1x8x128xf32> to vector<8x128xf32>
    %244 = vector.shape_cast %238 : vector<8x128xf32> to vector<1x8x128xf32>
    tpu.vector_store %arg8[%c5_132, %c0_133, %c0_134], %244 {strides = array<i32>} : memref<8x8x128xf32, #tpu.memory_space<vmem>>, vector<1x8x128xf32>,
    %c5_135 = arith.constant 5 : index
    %c0_136 = arith.constant 0 : index
    %c0_137 = arith.constant 0 : index
    %245 = vector.load %arg10[%c5_135, %c0_136, %c0_137] : memref<8x8x128xf32, #tpu.memory_space<vmem>>, vector<1x8x128xf32>
    %246 = vector.shape_cast %245 : vector<1x8x128xf32> to vector<8x128xf32>
    %247 = vector.shape_cast %241 : vector<8x128xf32> to vector<1x8x128xf32>
    tpu.vector_store %arg10[%c5_135, %c0_136, %c0_137], %247 {strides = array<i32>} : memref<8x8x128xf32, #tpu.memory_space<vmem>>, vector<1x8x128xf32>,
    %c6_138 = arith.constant 6 : index
    %c0_139 = arith.constant 0 : index
    %c0_140 = arith.constant 0 : index
    %248 = vector.load %arg12[%c6_138, %c0_139, %c0_140] : memref<8x8x128xf32, #tpu.memory_space<vmem>>, vector<1x8x128xf32>
    %249 = vector.shape_cast %248 : vector<1x8x128xf32> to vector<8x128xf32>
    %250 = arith.truncf %238 : vector<8x128xf32> to vector<8x128xbf16>
    %cst_141 = arith.constant dense<0.000000e+00> : vector<8x128xf32>
    %251 = tpu.matmul %250, %27, %cst_141 {dimension_numbers = #tpu.dot_dimension_numbers<[1], [0], [0], [1], [0, 0, 1, 1], [], []>} : vector<8x128xbf16>, vector<128x128xbf16>, vector<8x128xf32> -> vector<8x128xf32>
    %252 = arith.addf %249, %251 : vector<8x128xf32>
    %c1_142 = arith.constant 1 : index
    %c0_143 = arith.constant 0 : index
    %c0_144 = arith.constant 0 : index
    %253 = vector.load %arg13[%c1_142, %c0_143, %c0_144] : memref<8x8x128xf32, #tpu.memory_space<vmem>>, vector<1x8x128xf32>
    %254 = vector.shape_cast %253 : vector<1x8x128xf32> to vector<8x128xf32>
    %255 = arith.truncf %241 : vector<8x128xf32> to vector<8x128xbf16>
    %cst_145 = arith.constant dense<0.000000e+00> : vector<8x128xf32>
    %256 = tpu.matmul %255, %29, %cst_145 {dimension_numbers = #tpu.dot_dimension_numbers<[1], [0], [0], [1], [0, 0, 1, 1], [], []>} : vector<8x128xbf16>, vector<128x128xbf16>, vector<8x128xf32> -> vector<8x128xf32>
    %257 = arith.addf %254, %256 : vector<8x128xf32>
    %258 = arith.negf %252 : vector<8x128xf32>
    %259 = math.exp %258 : vector<8x128xf32>
    %cst_146 = arith.constant 1.000000e+00 : f32
    %260 = vector.broadcast %cst_146 : f32 to vector<8x128xf32>
    %261 = arith.addf %260, %259 : vector<8x128xf32>
    %262 = arith.divf %260, %261 : vector<8x128xf32>
    %263 = arith.negf %257 : vector<8x128xf32>
    %264 = math.exp %263 : vector<8x128xf32>
    %cst_147 = arith.constant 1.000000e+00 : f32
    %265 = vector.broadcast %cst_147 : f32 to vector<8x128xf32>
    %266 = arith.addf %265, %264 : vector<8x128xf32>
    %267 = arith.divf %265, %266 : vector<8x128xf32>
    %268 = math.tanh %252 : vector<8x128xf32>
    %c64_i32_148 = arith.constant 64 : i32
    %269 = tpu.dynamic_rotate %268 by %c64_i32_148 dim 1 : vector<8x128xf32>, i32 -> vector<8x128xf32>
    %270 = math.tanh %257 : vector<8x128xf32>
    %c64_i32_149 = arith.constant 64 : i32
    %271 = tpu.dynamic_rotate %270 by %c64_i32_149 dim 1 : vector<8x128xf32>, i32 -> vector<8x128xf32>
    %272 = arith.subf %238, %269 : vector<8x128xf32>
    %273 = arith.mulf %262, %272 : vector<8x128xf32>
    %274 = arith.addf %269, %273 : vector<8x128xf32>
    %275 = arith.subf %241, %271 : vector<8x128xf32>
    %276 = arith.mulf %267, %275 : vector<8x128xf32>
    %277 = arith.addf %271, %276 : vector<8x128xf32>
    %c6_150 = arith.constant 6 : index
    %c0_151 = arith.constant 0 : index
    %c0_152 = arith.constant 0 : index
    %278 = vector.load %arg8[%c6_150, %c0_151, %c0_152] : memref<8x8x128xf32, #tpu.memory_space<vmem>>, vector<1x8x128xf32>
    %279 = vector.shape_cast %278 : vector<1x8x128xf32> to vector<8x128xf32>
    %280 = vector.shape_cast %274 : vector<8x128xf32> to vector<1x8x128xf32>
    tpu.vector_store %arg8[%c6_150, %c0_151, %c0_152], %280 {strides = array<i32>} : memref<8x8x128xf32, #tpu.memory_space<vmem>>, vector<1x8x128xf32>,
    %c6_153 = arith.constant 6 : index
    %c0_154 = arith.constant 0 : index
    %c0_155 = arith.constant 0 : index
    %281 = vector.load %arg10[%c6_153, %c0_154, %c0_155] : memref<8x8x128xf32, #tpu.memory_space<vmem>>, vector<1x8x128xf32>
    %282 = vector.shape_cast %281 : vector<1x8x128xf32> to vector<8x128xf32>
    %283 = vector.shape_cast %277 : vector<8x128xf32> to vector<1x8x128xf32>
    tpu.vector_store %arg10[%c6_153, %c0_154, %c0_155], %283 {strides = array<i32>} : memref<8x8x128xf32, #tpu.memory_space<vmem>>, vector<1x8x128xf32>,
    %c7_156 = arith.constant 7 : index
    %c0_157 = arith.constant 0 : index
    %c0_158 = arith.constant 0 : index
    %284 = vector.load %arg12[%c7_156, %c0_157, %c0_158] : memref<8x8x128xf32, #tpu.memory_space<vmem>>, vector<1x8x128xf32>
    %285 = vector.shape_cast %284 : vector<1x8x128xf32> to vector<8x128xf32>
    %286 = arith.truncf %274 : vector<8x128xf32> to vector<8x128xbf16>
    %cst_159 = arith.constant dense<0.000000e+00> : vector<8x128xf32>
    %287 = tpu.matmul %286, %27, %cst_159 {dimension_numbers = #tpu.dot_dimension_numbers<[1], [0], [0], [1], [0, 0, 1, 1], [], []>} : vector<8x128xbf16>, vector<128x128xbf16>, vector<8x128xf32> -> vector<8x128xf32>
    %288 = arith.addf %285, %287 : vector<8x128xf32>
    %c0_160 = arith.constant 0 : index
    %c0_161 = arith.constant 0 : index
    %c0_162 = arith.constant 0 : index
    %289 = vector.load %arg13[%c0_160, %c0_161, %c0_162] : memref<8x8x128xf32, #tpu.memory_space<vmem>>, vector<1x8x128xf32>
    %290 = vector.shape_cast %289 : vector<1x8x128xf32> to vector<8x128xf32>
    %291 = arith.truncf %277 : vector<8x128xf32> to vector<8x128xbf16>
    %cst_163 = arith.constant dense<0.000000e+00> : vector<8x128xf32>
    %292 = tpu.matmul %291, %29, %cst_163 {dimension_numbers = #tpu.dot_dimension_numbers<[1], [0], [0], [1], [0, 0, 1, 1], [], []>} : vector<8x128xbf16>, vector<128x128xbf16>, vector<8x128xf32> -> vector<8x128xf32>
    %293 = arith.addf %290, %292 : vector<8x128xf32>
    %294 = arith.negf %288 : vector<8x128xf32>
    %295 = math.exp %294 : vector<8x128xf32>
    %cst_164 = arith.constant 1.000000e+00 : f32
    %296 = vector.broadcast %cst_164 : f32 to vector<8x128xf32>
    %297 = arith.addf %296, %295 : vector<8x128xf32>
    %298 = arith.divf %296, %297 : vector<8x128xf32>
    %299 = arith.negf %293 : vector<8x128xf32>
    %300 = math.exp %299 : vector<8x128xf32>
    %cst_165 = arith.constant 1.000000e+00 : f32
    %301 = vector.broadcast %cst_165 : f32 to vector<8x128xf32>
    %302 = arith.addf %301, %300 : vector<8x128xf32>
    %303 = arith.divf %301, %302 : vector<8x128xf32>
    %304 = math.tanh %288 : vector<8x128xf32>
    %c64_i32_166 = arith.constant 64 : i32
    %305 = tpu.dynamic_rotate %304 by %c64_i32_166 dim 1 : vector<8x128xf32>, i32 -> vector<8x128xf32>
    %306 = math.tanh %293 : vector<8x128xf32>
    %c64_i32_167 = arith.constant 64 : i32
    %307 = tpu.dynamic_rotate %306 by %c64_i32_167 dim 1 : vector<8x128xf32>, i32 -> vector<8x128xf32>
    %308 = arith.subf %274, %305 : vector<8x128xf32>
    %309 = arith.mulf %298, %308 : vector<8x128xf32>
    %310 = arith.addf %305, %309 : vector<8x128xf32>
    %311 = arith.subf %277, %307 : vector<8x128xf32>
    %312 = arith.mulf %303, %311 : vector<8x128xf32>
    %313 = arith.addf %307, %312 : vector<8x128xf32>
    %c7_168 = arith.constant 7 : index
    %c0_169 = arith.constant 0 : index
    %c0_170 = arith.constant 0 : index
    %314 = vector.load %arg8[%c7_168, %c0_169, %c0_170] : memref<8x8x128xf32, #tpu.memory_space<vmem>>, vector<1x8x128xf32>
    %315 = vector.shape_cast %314 : vector<1x8x128xf32> to vector<8x128xf32>
    %316 = vector.shape_cast %310 : vector<8x128xf32> to vector<1x8x128xf32>
    tpu.vector_store %arg8[%c7_168, %c0_169, %c0_170], %316 {strides = array<i32>} : memref<8x8x128xf32, #tpu.memory_space<vmem>>, vector<1x8x128xf32>,
    %c7_171 = arith.constant 7 : index
    %c0_172 = arith.constant 0 : index
    %c0_173 = arith.constant 0 : index
    %317 = vector.load %arg10[%c7_171, %c0_172, %c0_173] : memref<8x8x128xf32, #tpu.memory_space<vmem>>, vector<1x8x128xf32>
    %318 = vector.shape_cast %317 : vector<1x8x128xf32> to vector<8x128xf32>
    %319 = vector.shape_cast %313 : vector<8x128xf32> to vector<1x8x128xf32>
    tpu.vector_store %arg10[%c7_171, %c0_172, %c0_173], %319 {strides = array<i32>} : memref<8x8x128xf32, #tpu.memory_space<vmem>>, vector<1x8x128xf32>,
    %c0_174 = arith.constant 0 : index
    %c0_175 = arith.constant 0 : index
    %c0_176 = arith.constant 0 : index
    %320 = vector.load %arg8[%c0_174, %c0_175, %c0_176] : memref<8x8x128xf32, #tpu.memory_space<vmem>>, vector<8x8x128xf32>
    %321 = vector.shape_cast %320 : vector<8x8x128xf32> to vector<64x128xf32>
    %322 = arith.truncf %321 : vector<64x128xf32> to vector<64x128xbf16>
    %c0_177 = arith.constant 0 : index
    %c1_178 = arith.constant 1 : index
    %c0_179 = arith.constant 0 : index
    %c0_180 = arith.constant 0 : index
    %323 = vector.load %arg2[%c0_177, %c1_178, %c0_179, %c0_180] : memref<2x2x128x128xbf16, #tpu.memory_space<vmem>>, vector<1x1x128x128xbf16>
    %324 = vector.shape_cast %323 : vector<1x1x128x128xbf16> to vector<128x128xbf16>
    %cst_181 = arith.constant dense<0.000000e+00> : vector<64x128xf32>
    %325 = tpu.matmul %322, %324, %cst_181 {dimension_numbers = #tpu.dot_dimension_numbers<[1], [0], [0], [1], [0, 0, 1, 1], [], []>} : vector<64x128xbf16>, vector<128x128xbf16>, vector<64x128xf32> -> vector<64x128xf32>
    %326 = vector.shape_cast %325 : vector<64x128xf32> to vector<8x8x128xf32>
    %c0_182 = arith.constant 0 : index
    %c1_183 = arith.constant 1 : index
    %c0_184 = arith.constant 0 : index
    %c0_185 = arith.constant 0 : index
    %327 = vector.load %arg4[%c0_182, %c1_183, %c0_184, %c0_185] : memref<2x2x1x128xf32, #tpu.memory_space<vmem>>, vector<1x1x1x128xf32>
    %328 = vector.shape_cast %327 : vector<1x1x1x128xf32> to vector<1x128xf32>
    %329 = vector.shape_cast %328 : vector<1x128xf32> to vector<1x1x128xf32>
    %330 = vector.broadcast %329 : vector<1x1x128xf32> to vector<8x8x128xf32>
    %331 = arith.addf %326, %330 : vector<8x8x128xf32>
    %c0_186 = arith.constant 0 : index
    %c0_187 = arith.constant 0 : index
    %c0_188 = arith.constant 0 : index
    %332 = vector.load %arg12[%c0_186, %c0_187, %c0_188] : memref<8x8x128xf32, #tpu.memory_space<vmem>>, vector<8x8x128xf32>
    tpu.vector_store %arg12[%c0_186, %c0_187, %c0_188], %331 {strides = array<i32>} : memref<8x8x128xf32, #tpu.memory_space<vmem>>, vector<8x8x128xf32>,
    %c0_189 = arith.constant 0 : index
    %c0_190 = arith.constant 0 : index
    %c0_191 = arith.constant 0 : index
    %333 = vector.load %arg10[%c0_189, %c0_190, %c0_191] : memref<8x8x128xf32, #tpu.memory_space<vmem>>, vector<8x8x128xf32>
    %334 = vector.shape_cast %333 : vector<8x8x128xf32> to vector<64x128xf32>
    %335 = arith.truncf %334 : vector<64x128xf32> to vector<64x128xbf16>
    %c1_192 = arith.constant 1 : index
    %c1_193 = arith.constant 1 : index
    %c0_194 = arith.constant 0 : index
    %c0_195 = arith.constant 0 : index
    %336 = vector.load %arg2[%c1_192, %c1_193, %c0_194, %c0_195] : memref<2x2x128x128xbf16, #tpu.memory_space<vmem>>, vector<1x1x128x128xbf16>
    %337 = vector.shape_cast %336 : vector<1x1x128x128xbf16> to vector<128x128xbf16>
    %cst_196 = arith.constant dense<0.000000e+00> : vector<64x128xf32>
    %338 = tpu.matmul %335, %337, %cst_196 {dimension_numbers = #tpu.dot_dimension_numbers<[1], [0], [0], [1], [0, 0, 1, 1], [], []>} : vector<64x128xbf16>, vector<128x128xbf16>, vector<64x128xf32> -> vector<64x128xf32>
    %339 = vector.shape_cast %338 : vector<64x128xf32> to vector<8x8x128xf32>
    %c1_197 = arith.constant 1 : index
    %c1_198 = arith.constant 1 : index
    %c0_199 = arith.constant 0 : index
    %c0_200 = arith.constant 0 : index
    %340 = vector.load %arg4[%c1_197, %c1_198, %c0_199, %c0_200] : memref<2x2x1x128xf32, #tpu.memory_space<vmem>>, vector<1x1x1x128xf32>
    %341 = vector.shape_cast %340 : vector<1x1x1x128xf32> to vector<1x128xf32>
    %342 = vector.shape_cast %341 : vector<1x128xf32> to vector<1x1x128xf32>
    %343 = vector.broadcast %342 : vector<1x1x128xf32> to vector<8x8x128xf32>
    %344 = arith.addf %339, %343 : vector<8x8x128xf32>
    %c0_201 = arith.constant 0 : index
    %c0_202 = arith.constant 0 : index
    %c0_203 = arith.constant 0 : index
    %345 = vector.load %arg13[%c0_201, %c0_202, %c0_203] : memref<8x8x128xf32, #tpu.memory_space<vmem>>, vector<8x8x128xf32>
    tpu.vector_store %arg13[%c0_201, %c0_202, %c0_203], %344 {strides = array<i32>} : memref<8x8x128xf32, #tpu.memory_space<vmem>>, vector<8x8x128xf32>,
    %c0_204 = arith.constant 0 : index
    %c1_205 = arith.constant 1 : index
    %c0_206 = arith.constant 0 : index
    %c0_207 = arith.constant 0 : index
    %346 = vector.load %arg3[%c0_204, %c1_205, %c0_206, %c0_207] : memref<2x2x128x128xbf16, #tpu.memory_space<vmem>>, vector<1x1x128x128xbf16>
    %347 = vector.shape_cast %346 : vector<1x1x128x128xbf16> to vector<128x128xbf16>
    %c1_208 = arith.constant 1 : index
    %c1_209 = arith.constant 1 : index
    %c0_210 = arith.constant 0 : index
    %c0_211 = arith.constant 0 : index
    %348 = vector.load %arg3[%c1_208, %c1_209, %c0_210, %c0_211] : memref<2x2x128x128xbf16, #tpu.memory_space<vmem>>, vector<1x1x128x128xbf16>
    %349 = vector.shape_cast %348 : vector<1x1x128x128xbf16> to vector<128x128xbf16>
    %cst_212 = arith.constant 0.000000e+00 : f32
    %350 = vector.broadcast %cst_212 : f32 to vector<8x128xf32>
    %cst_213 = arith.constant 0.000000e+00 : f32
    %351 = vector.broadcast %cst_213 : f32 to vector<8x128xf32>
    %c0_214 = arith.constant 0 : index
    %c0_215 = arith.constant 0 : index
    %c0_216 = arith.constant 0 : index
    %352 = vector.load %arg12[%c0_214, %c0_215, %c0_216] : memref<8x8x128xf32, #tpu.memory_space<vmem>>, vector<1x8x128xf32>
    %353 = vector.shape_cast %352 : vector<1x8x128xf32> to vector<8x128xf32>
    %354 = arith.truncf %350 : vector<8x128xf32> to vector<8x128xbf16>
    %cst_217 = arith.constant dense<0.000000e+00> : vector<8x128xf32>
    %355 = tpu.matmul %354, %347, %cst_217 {dimension_numbers = #tpu.dot_dimension_numbers<[1], [0], [0], [1], [0, 0, 1, 1], [], []>} : vector<8x128xbf16>, vector<128x128xbf16>, vector<8x128xf32> -> vector<8x128xf32>
    %356 = arith.addf %353, %355 : vector<8x128xf32>
    %c7_218 = arith.constant 7 : index
    %c0_219 = arith.constant 0 : index
    %c0_220 = arith.constant 0 : index
    %357 = vector.load %arg13[%c7_218, %c0_219, %c0_220] : memref<8x8x128xf32, #tpu.memory_space<vmem>>, vector<1x8x128xf32>
    %358 = vector.shape_cast %357 : vector<1x8x128xf32> to vector<8x128xf32>
    %359 = arith.truncf %351 : vector<8x128xf32> to vector<8x128xbf16>
    %cst_221 = arith.constant dense<0.000000e+00> : vector<8x128xf32>
    %360 = tpu.matmul %359, %349, %cst_221 {dimension_numbers = #tpu.dot_dimension_numbers<[1], [0], [0], [1], [0, 0, 1, 1], [], []>} : vector<8x128xbf16>, vector<128x128xbf16>, vector<8x128xf32> -> vector<8x128xf32>
    %361 = arith.addf %358, %360 : vector<8x128xf32>
    %362 = arith.negf %356 : vector<8x128xf32>
    %363 = math.exp %362 : vector<8x128xf32>
    %cst_222 = arith.constant 1.000000e+00 : f32
    %364 = vector.broadcast %cst_222 : f32 to vector<8x128xf32>
    %365 = arith.addf %364, %363 : vector<8x128xf32>
    %366 = arith.divf %364, %365 : vector<8x128xf32>
    %367 = arith.negf %361 : vector<8x128xf32>
    %368 = math.exp %367 : vector<8x128xf32>
    %cst_223 = arith.constant 1.000000e+00 : f32
    %369 = vector.broadcast %cst_223 : f32 to vector<8x128xf32>
    %370 = arith.addf %369, %368 : vector<8x128xf32>
    %371 = arith.divf %369, %370 : vector<8x128xf32>
    %372 = math.tanh %356 : vector<8x128xf32>
    %c64_i32_224 = arith.constant 64 : i32
    %373 = tpu.dynamic_rotate %372 by %c64_i32_224 dim 1 : vector<8x128xf32>, i32 -> vector<8x128xf32>
    %374 = math.tanh %361 : vector<8x128xf32>
    %c64_i32_225 = arith.constant 64 : i32
    %375 = tpu.dynamic_rotate %374 by %c64_i32_225 dim 1 : vector<8x128xf32>, i32 -> vector<8x128xf32>
    %376 = arith.subf %350, %373 : vector<8x128xf32>
    %377 = arith.mulf %366, %376 : vector<8x128xf32>
    %378 = arith.addf %373, %377 : vector<8x128xf32>
    %379 = arith.subf %351, %375 : vector<8x128xf32>
    %380 = arith.mulf %371, %379 : vector<8x128xf32>
    %381 = arith.addf %375, %380 : vector<8x128xf32>
    %c1_226 = arith.constant 1 : index
    %c0_227 = arith.constant 0 : index
    %c0_228 = arith.constant 0 : index
    %382 = vector.load %arg12[%c1_226, %c0_227, %c0_228] : memref<8x8x128xf32, #tpu.memory_space<vmem>>, vector<1x8x128xf32>
    %383 = vector.shape_cast %382 : vector<1x8x128xf32> to vector<8x128xf32>
    %384 = arith.truncf %378 : vector<8x128xf32> to vector<8x128xbf16>
    %cst_229 = arith.constant dense<0.000000e+00> : vector<8x128xf32>
    %385 = tpu.matmul %384, %347, %cst_229 {dimension_numbers = #tpu.dot_dimension_numbers<[1], [0], [0], [1], [0, 0, 1, 1], [], []>} : vector<8x128xbf16>, vector<128x128xbf16>, vector<8x128xf32> -> vector<8x128xf32>
    %386 = arith.addf %383, %385 : vector<8x128xf32>
    %387 = arith.negf %386 : vector<8x128xf32>
    %388 = math.exp %387 : vector<8x128xf32>
    %cst_230 = arith.constant 1.000000e+00 : f32
    %389 = vector.broadcast %cst_230 : f32 to vector<8x128xf32>
    %390 = arith.addf %389, %388 : vector<8x128xf32>
    %391 = arith.divf %389, %390 : vector<8x128xf32>
    %392 = math.tanh %386 : vector<8x128xf32>
    %c64_i32_231 = arith.constant 64 : i32
    %393 = tpu.dynamic_rotate %392 by %c64_i32_231 dim 1 : vector<8x128xf32>, i32 -> vector<8x128xf32>
    %394 = arith.subf %378, %393 : vector<8x128xf32>
    %395 = arith.mulf %391, %394 : vector<8x128xf32>
    %396 = arith.addf %393, %395 : vector<8x128xf32>
    %c2_232 = arith.constant 2 : index
    %c0_233 = arith.constant 0 : index
    %c0_234 = arith.constant 0 : index
    %397 = vector.load %arg12[%c2_232, %c0_233, %c0_234] : memref<8x8x128xf32, #tpu.memory_space<vmem>>, vector<1x8x128xf32>
    %398 = vector.shape_cast %397 : vector<1x8x128xf32> to vector<8x128xf32>
    %399 = arith.truncf %396 : vector<8x128xf32> to vector<8x128xbf16>
    %cst_235 = arith.constant dense<0.000000e+00> : vector<8x128xf32>
    %400 = tpu.matmul %399, %347, %cst_235 {dimension_numbers = #tpu.dot_dimension_numbers<[1], [0], [0], [1], [0, 0, 1, 1], [], []>} : vector<8x128xbf16>, vector<128x128xbf16>, vector<8x128xf32> -> vector<8x128xf32>
    %401 = arith.addf %398, %400 : vector<8x128xf32>
    %402 = arith.negf %401 : vector<8x128xf32>
    %403 = math.exp %402 : vector<8x128xf32>
    %cst_236 = arith.constant 1.000000e+00 : f32
    %404 = vector.broadcast %cst_236 : f32 to vector<8x128xf32>
    %405 = arith.addf %404, %403 : vector<8x128xf32>
    %406 = arith.divf %404, %405 : vector<8x128xf32>
    %407 = math.tanh %401 : vector<8x128xf32>
    %c64_i32_237 = arith.constant 64 : i32
    %408 = tpu.dynamic_rotate %407 by %c64_i32_237 dim 1 : vector<8x128xf32>, i32 -> vector<8x128xf32>
    %409 = arith.subf %396, %408 : vector<8x128xf32>
    %410 = arith.mulf %406, %409 : vector<8x128xf32>
    %411 = arith.addf %408, %410 : vector<8x128xf32>
    %c3_238 = arith.constant 3 : index
    %c0_239 = arith.constant 0 : index
    %c0_240 = arith.constant 0 : index
    %412 = vector.load %arg12[%c3_238, %c0_239, %c0_240] : memref<8x8x128xf32, #tpu.memory_space<vmem>>, vector<1x8x128xf32>
    %413 = vector.shape_cast %412 : vector<1x8x128xf32> to vector<8x128xf32>
    %414 = arith.truncf %411 : vector<8x128xf32> to vector<8x128xbf16>
    %cst_241 = arith.constant dense<0.000000e+00> : vector<8x128xf32>
    %415 = tpu.matmul %414, %347, %cst_241 {dimension_numbers = #tpu.dot_dimension_numbers<[1], [0], [0], [1], [0, 0, 1, 1], [], []>} : vector<8x128xbf16>, vector<128x128xbf16>, vector<8x128xf32> -> vector<8x128xf32>
    %416 = arith.addf %413, %415 : vector<8x128xf32>
    %417 = arith.negf %416 : vector<8x128xf32>
    %418 = math.exp %417 : vector<8x128xf32>
    %cst_242 = arith.constant 1.000000e+00 : f32
    %419 = vector.broadcast %cst_242 : f32 to vector<8x128xf32>
    %420 = arith.addf %419, %418 : vector<8x128xf32>
    %421 = arith.divf %419, %420 : vector<8x128xf32>
    %422 = math.tanh %416 : vector<8x128xf32>
    %c64_i32_243 = arith.constant 64 : i32
    %423 = tpu.dynamic_rotate %422 by %c64_i32_243 dim 1 : vector<8x128xf32>, i32 -> vector<8x128xf32>
    %424 = arith.subf %411, %423 : vector<8x128xf32>
    %425 = arith.mulf %421, %424 : vector<8x128xf32>
    %426 = arith.addf %423, %425 : vector<8x128xf32>
    %c4_244 = arith.constant 4 : index
    %c0_245 = arith.constant 0 : index
    %c0_246 = arith.constant 0 : index
    %427 = vector.load %arg12[%c4_244, %c0_245, %c0_246] : memref<8x8x128xf32, #tpu.memory_space<vmem>>, vector<1x8x128xf32>
    %428 = vector.shape_cast %427 : vector<1x8x128xf32> to vector<8x128xf32>
    %429 = arith.truncf %426 : vector<8x128xf32> to vector<8x128xbf16>
    %cst_247 = arith.constant dense<0.000000e+00> : vector<8x128xf32>
    %430 = tpu.matmul %429, %347, %cst_247 {dimension_numbers = #tpu.dot_dimension_numbers<[1], [0], [0], [1], [0, 0, 1, 1], [], []>} : vector<8x128xbf16>, vector<128x128xbf16>, vector<8x128xf32> -> vector<8x128xf32>
    %431 = arith.addf %428, %430 : vector<8x128xf32>
    %432 = arith.negf %431 : vector<8x128xf32>
    %433 = math.exp %432 : vector<8x128xf32>
    %cst_248 = arith.constant 1.000000e+00 : f32
    %434 = vector.broadcast %cst_248 : f32 to vector<8x128xf32>
    %435 = arith.addf %434, %433 : vector<8x128xf32>
    %436 = arith.divf %434, %435 : vector<8x128xf32>
    %437 = math.tanh %431 : vector<8x128xf32>
    %c64_i32_249 = arith.constant 64 : i32
    %438 = tpu.dynamic_rotate %437 by %c64_i32_249 dim 1 : vector<8x128xf32>, i32 -> vector<8x128xf32>
    %439 = arith.subf %426, %438 : vector<8x128xf32>
    %440 = arith.mulf %436, %439 : vector<8x128xf32>
    %441 = arith.addf %438, %440 : vector<8x128xf32>
    %c5_250 = arith.constant 5 : index
    %c0_251 = arith.constant 0 : index
    %c0_252 = arith.constant 0 : index
    %442 = vector.load %arg12[%c5_250, %c0_251, %c0_252] : memref<8x8x128xf32, #tpu.memory_space<vmem>>, vector<1x8x128xf32>
    %443 = vector.shape_cast %442 : vector<1x8x128xf32> to vector<8x128xf32>
    %444 = arith.truncf %441 : vector<8x128xf32> to vector<8x128xbf16>
    %cst_253 = arith.constant dense<0.000000e+00> : vector<8x128xf32>
    %445 = tpu.matmul %444, %347, %cst_253 {dimension_numbers = #tpu.dot_dimension_numbers<[1], [0], [0], [1], [0, 0, 1, 1], [], []>} : vector<8x128xbf16>, vector<128x128xbf16>, vector<8x128xf32> -> vector<8x128xf32>
    %446 = arith.addf %443, %445 : vector<8x128xf32>
    %447 = arith.negf %446 : vector<8x128xf32>
    %448 = math.exp %447 : vector<8x128xf32>
    %cst_254 = arith.constant 1.000000e+00 : f32
    %449 = vector.broadcast %cst_254 : f32 to vector<8x128xf32>
    %450 = arith.addf %449, %448 : vector<8x128xf32>
    %451 = arith.divf %449, %450 : vector<8x128xf32>
    %452 = math.tanh %446 : vector<8x128xf32>
    %c64_i32_255 = arith.constant 64 : i32
    %453 = tpu.dynamic_rotate %452 by %c64_i32_255 dim 1 : vector<8x128xf32>, i32 -> vector<8x128xf32>
    %454 = arith.subf %441, %453 : vector<8x128xf32>
    %455 = arith.mulf %451, %454 : vector<8x128xf32>
    %456 = arith.addf %453, %455 : vector<8x128xf32>
    %c6_256 = arith.constant 6 : index
    %c0_257 = arith.constant 0 : index
    %c0_258 = arith.constant 0 : index
    %457 = vector.load %arg12[%c6_256, %c0_257, %c0_258] : memref<8x8x128xf32, #tpu.memory_space<vmem>>, vector<1x8x128xf32>
    %458 = vector.shape_cast %457 : vector<1x8x128xf32> to vector<8x128xf32>
    %459 = arith.truncf %456 : vector<8x128xf32> to vector<8x128xbf16>
    %cst_259 = arith.constant dense<0.000000e+00> : vector<8x128xf32>
    %460 = tpu.matmul %459, %347, %cst_259 {dimension_numbers = #tpu.dot_dimension_numbers<[1], [0], [0], [1], [0, 0, 1, 1], [], []>} : vector<8x128xbf16>, vector<128x128xbf16>, vector<8x128xf32> -> vector<8x128xf32>
    %461 = arith.addf %458, %460 : vector<8x128xf32>
    %462 = arith.negf %461 : vector<8x128xf32>
    %463 = math.exp %462 : vector<8x128xf32>
    %cst_260 = arith.constant 1.000000e+00 : f32
    %464 = vector.broadcast %cst_260 : f32 to vector<8x128xf32>
    %465 = arith.addf %464, %463 : vector<8x128xf32>
    %466 = arith.divf %464, %465 : vector<8x128xf32>
    %467 = math.tanh %461 : vector<8x128xf32>
    %c64_i32_261 = arith.constant 64 : i32
    %468 = tpu.dynamic_rotate %467 by %c64_i32_261 dim 1 : vector<8x128xf32>, i32 -> vector<8x128xf32>
    %469 = arith.subf %456, %468 : vector<8x128xf32>
    %470 = arith.mulf %466, %469 : vector<8x128xf32>
    %471 = arith.addf %468, %470 : vector<8x128xf32>
    %c7_262 = arith.constant 7 : index
    %c0_263 = arith.constant 0 : index
    %c0_264 = arith.constant 0 : index
    %472 = vector.load %arg12[%c7_262, %c0_263, %c0_264] : memref<8x8x128xf32, #tpu.memory_space<vmem>>, vector<1x8x128xf32>
    %473 = vector.shape_cast %472 : vector<1x8x128xf32> to vector<8x128xf32>
    %474 = arith.truncf %471 : vector<8x128xf32> to vector<8x128xbf16>
    %cst_265 = arith.constant dense<0.000000e+00> : vector<8x128xf32>
    %475 = tpu.matmul %474, %347, %cst_265 {dimension_numbers = #tpu.dot_dimension_numbers<[1], [0], [0], [1], [0, 0, 1, 1], [], []>} : vector<8x128xbf16>, vector<128x128xbf16>, vector<8x128xf32> -> vector<8x128xf32>
    %476 = arith.addf %473, %475 : vector<8x128xf32>
    %477 = arith.negf %476 : vector<8x128xf32>
    %478 = math.exp %477 : vector<8x128xf32>
    %cst_266 = arith.constant 1.000000e+00 : f32
    %479 = vector.broadcast %cst_266 : f32 to vector<8x128xf32>
    %480 = arith.addf %479, %478 : vector<8x128xf32>
    %481 = arith.divf %479, %480 : vector<8x128xf32>
    %482 = math.tanh %476 : vector<8x128xf32>
    %c64_i32_267 = arith.constant 64 : i32
    %483 = tpu.dynamic_rotate %482 by %c64_i32_267 dim 1 : vector<8x128xf32>, i32 -> vector<8x128xf32>
    %484 = arith.subf %471, %483 : vector<8x128xf32>
    %485 = arith.mulf %481, %484 : vector<8x128xf32>
    %486 = arith.addf %483, %485 : vector<8x128xf32>
    %c0_268 = arith.constant 0 : index
    %c0_269 = arith.constant 0 : index
    %c0_270 = arith.constant 0 : index
    %487 = vector.load %arg5[%c0_268, %c0_269, %c0_270] : memref<2x128x128xf32, #tpu.memory_space<vmem>>, vector<1x128x128xf32>
    %488 = vector.shape_cast %487 : vector<1x128x128xf32> to vector<128x128xf32>
    %cst_271 = arith.constant dense<0.000000e+00> : vector<8x128xf32>
    %489 = tpu.matmul %486, %488, %cst_271 {dimension_numbers = #tpu.dot_dimension_numbers<[1], [0], [0], [1], [0, 0, 1, 1], [], []>} : vector<8x128xf32>, vector<128x128xf32>, vector<8x128xf32> -> vector<8x128xf32>
    %c1_272 = arith.constant 1 : index
    %c0_273 = arith.constant 0 : index
    %c0_274 = arith.constant 0 : index
    %490 = vector.load %arg5[%c1_272, %c0_273, %c0_274] : memref<2x128x128xf32, #tpu.memory_space<vmem>>, vector<1x128x128xf32>
    %491 = vector.shape_cast %490 : vector<1x128x128xf32> to vector<128x128xf32>
    %cst_275 = arith.constant dense<0.000000e+00> : vector<8x128xf32>
    %492 = tpu.matmul %381, %491, %cst_275 {dimension_numbers = #tpu.dot_dimension_numbers<[1], [0], [0], [1], [0, 0, 1, 1], [], []>} : vector<8x128xf32>, vector<128x128xf32>, vector<8x128xf32> -> vector<8x128xf32>
    %493 = arith.addf %489, %492 : vector<8x128xf32>
    %c0_276 = arith.constant 0 : index
    %c0_277 = arith.constant 0 : index
    %494 = vector.load %arg6[%c0_276, %c0_277] : memref<1x128xf32, #tpu.memory_space<vmem>>, vector<1x128xf32>
    %495 = vector.broadcast %494 : vector<1x128xf32> to vector<8x128xf32>
    %496 = arith.addf %493, %495 : vector<8x128xf32>
    %c0_278 = arith.constant 0 : index
    %c0_279 = arith.constant 0 : index
    %497 = vector.load %arg7[%c0_278, %c0_279] : memref<8x128xf32, #tpu.memory_space<vmem>>, vector<8x128xf32>
    tpu.vector_store %arg7[%c0_278, %c0_279], %496 {strides = array<i32>} : memref<8x128xf32, #tpu.memory_space<vmem>>, vector<8x128xf32>,
    return
  }
  func.func @transform_0(%arg0: i32) -> (i32, i32, i32) {
    %c0_i32 = arith.constant 0 : i32
    %c0_i32_0 = arith.constant 0 : i32
    %c0_i32_1 = arith.constant 0 : i32
    %c0_i32_2 = arith.constant 0 : i32
    return %c0_i32, %c0_i32_0, %c0_i32_1 : i32, i32, i32
  }
  func.func @transform_1(%arg0: i32) -> (i32, i32, i32, i32) {
    %c0_i32 = arith.constant 0 : i32
    %c0_i32_0 = arith.constant 0 : i32
    %c0_i32_1 = arith.constant 0 : i32
    %c0_i32_2 = arith.constant 0 : i32
    %c0_i32_3 = arith.constant 0 : i32
    return %c0_i32, %c0_i32_0, %c0_i32_1, %c0_i32_2 : i32, i32, i32, i32
  }
  func.func @transform_2(%arg0: i32) -> (i32, i32, i32, i32) {
    %c0_i32 = arith.constant 0 : i32
    %c0_i32_0 = arith.constant 0 : i32
    %c0_i32_1 = arith.constant 0 : i32
    %c0_i32_2 = arith.constant 0 : i32
    %c0_i32_3 = arith.constant 0 : i32
    return %c0_i32, %c0_i32_0, %c0_i32_1, %c0_i32_2 : i32, i32, i32, i32
  }
  func.func @transform_3(%arg0: i32) -> (i32, i32, i32, i32) {
    %c0_i32 = arith.constant 0 : i32
    %c0_i32_0 = arith.constant 0 : i32
    %c0_i32_1 = arith.constant 0 : i32
    %c0_i32_2 = arith.constant 0 : i32
    %c0_i32_3 = arith.constant 0 : i32
    return %c0_i32, %c0_i32_0, %c0_i32_1, %c0_i32_2 : i32, i32, i32, i32
  }
  func.func @transform_4(%arg0: i32) -> (i32, i32, i32) {
    %c0_i32 = arith.constant 0 : i32
    %c0_i32_0 = arith.constant 0 : i32
    %c0_i32_1 = arith.constant 0 : i32
    %c0_i32_2 = arith.constant 0 : i32
    return %c0_i32, %c0_i32_0, %c0_i32_1 : i32, i32, i32
  }
  func.func @transform_5(%arg0: i32) -> (i32, i32) {
    %c0_i32 = arith.constant 0 : i32
    %c0_i32_0 = arith.constant 0 : i32
    %c0_i32_1 = arith.constant 0 : i32
    return %c0_i32, %c0_i32_0 : i32, i32
  }
  func.func @transform_6(%arg0: i32) -> (i32, i32) {
    %c0_i32 = arith.constant 0 : i32
    %c0_i32_0 = arith.constant 0 : i32
    %c0_i32_1 = arith.constant 0 : i32
    return %c0_i32, %c0_i32_0 : i32, i32
  }
}

</mosaic_0001>

<llo_original>
// kernel: forward.1
$region0: #{forward.1}
  #allocation0 [shape = 'u32[]', space=smem, size = 0x4, offset = 0x4, fixed_abs, tag = 'smem constant byte address 0x4 - core index']
  #allocation1 [shape = 'u32[144,128]{1,0:T(1,128)}', space=vmem, size = 0x12000, scoped, tag = 'internal scratch']
  #allocation2 [shape = 'f32[8,8,128]{2,1,0:T(8,128)}', space=vmem, size = 0x8000, scoped, tag = 'scratch operand']
  #allocation3 [shape = 'f32[8,8,128]{2,1,0:T(8,128)}', space=vmem, size = 0x8000, scoped, tag = 'scratch operand']
  #allocation4 [shape = 'f32[8,8,128]{2,1,0:T(8,128)}', space=vmem, size = 0x8000, scoped, tag = 'scratch operand']
  #allocation5 [shape = 'f32[8,8,128]{2,1,0:T(8,128)}', space=vmem, size = 0x8000, scoped, tag = 'scratch operand']
  #allocation6 [shape = 'f32[8,8,128]{2,1,0:T(8,128)}', space=vmem, size = 0x8000, scoped, tag = 'scratch operand']
  #allocation7 [shape = 'f32[8,8,128]{2,1,0:T(8,128)}', space=vmem, size = 0x8000, scoped, tag = 'scratch operand']
  %s0 = inlined_call_operand.vmem [shape: f32[8,8,128], index: 0, kind: input, shape index: {}]
  %s1 = inlined_call_operand.hbm [shape: bf16[2,2,128,128], index: 1, kind: input, shape index: {}]
  %s2 = inlined_call_operand.hbm [shape: bf16[2,2,128,128], index: 2, kind: input, shape index: {}]
  %s3 = inlined_call_operand.vmem [shape: f32[2,2,1,128], index: 3, kind: input, shape index: {}]
  %s4 = inlined_call_operand.hbm [shape: f32[2,128,128], index: 4, kind: input, shape index: {}]
  %s5 = inlined_call_operand.vmem [shape: f32[1,128], index: 5, kind: input, shape index: {}]
  %s6 = inlined_call_operand.vmem [shape: f32[8,128], index: 6, kind: output, shape index: {}]
  %s7 = sld [smem:[#allocation0]]
  $region46: #{forward.1} parent=0
    _
  %s9 = ssub.s32 1, %s7
  %s10 = scalar_select 0, %s9, %s7
  $region1: #{forward.1} parent=0
    #allocation8 [shape = 'u8[131072]{0}', space=vmem, size = 0x20000, scoped, tag = 'input window, operand 1, single buffered']
    #allocation9 [shape = 's32[1]{0}', space=sflag, size = 0x4, scoped, tag = 'scoped memory for forward.1']
    #allocation10 [shape = 'u8[131072]{0}', space=vmem, size = 0x20000, scoped, tag = 'input window, operand 2, single buffered']
    #allocation11 [shape = 's32[1]{0}', space=sflag, size = 0x4, scoped, tag = 'scoped memory for forward.1']
    #allocation12 [shape = 'u8[131072]{0}', space=vmem, size = 0x20000, scoped, tag = 'input window, operand 4, single buffered']
    %11 = vsyncpa [#allocation9], 0
    %12 = vsyncpa [#allocation11], 0
    // Predicated region
    $region2: #{forward.1} parent=1 // pred_check
      _
    $region3: #{forward.1} parent=1 // pred_check_branch
      %14 = sbr.rel (0) target = $region5
    $region4: #{forward.1} parent=1 // pred_region
      _
    $region5: #{forward.1} parent=1 // pred_fallthru
      _
    // Predicated region
    $region6: #{forward.1} parent=1 // pred_check
      _
    $region7: #{forward.1} parent=1 // pred_check_branch
      %16 = sbr.rel (0) target = $region9
    $region8: #{forward.1} parent=1 // pred_region
      %s18 = ssub.s32 4096, 4096
      %19 = vsyncadd [#allocation9], %s18
      %s20 = sshll.u32 [#allocation8], 4
      %s21 = int_to_ptr.vmem [resolvable:$true] %s20
      %26 = dma.hbm_to_vmem [thread:$0]  %s1, 4096, %s21, [#allocation9], 64, 64, 4
    $region9: #{forward.1} parent=1 // pred_fallthru
      _
    // Predicated region
    $region10: #{forward.1} parent=1 // pred_check
      _
    $region11: #{forward.1} parent=1 // pred_check_branch
      %28 = sbr.rel (0) target = $region13
    $region12: #{forward.1} parent=1 // pred_region
      %s30 = ssub.s32 4096, 4096
      %31 = vsyncadd [#allocation11], %s30
      %s32 = sshll.u32 [#allocation10], 4
      %s33 = int_to_ptr.vmem [resolvable:$true] %s32
      %38 = dma.hbm_to_vmem [thread:$0]  %s2, 4096, %s33, [#allocation11], 64, 64, 4
    $region13: #{forward.1} parent=1 // pred_fallthru
      _
    // Predicated region
    $region14: #{forward.1} parent=1 // pred_check
      _
    $region15: #{forward.1} parent=1 // pred_check_branch
      %40 = sbr.rel (0) target = $region17
    $region16: #{forward.1} parent=1 // pred_region
      _
    $region17: #{forward.1} parent=1 // pred_fallthru
      _
    // Predicated region
    $region18: #{forward.1} parent=1 // pred_check
      _
    $region19: #{forward.1} parent=1 // pred_check_branch
      %42 = sbr.rel (0) target = $region21
    $region20: #{forward.1} parent=1 // pred_region
      %s44 = ssub.s32 4096, 4096
      %45 = vsyncadd [#allocation11], %s44
      %s46 = sshll.u32 [#allocation12], 4
      %s47 = int_to_ptr.vmem [resolvable:$true] %s46
      %52 = dma.hbm_to_vmem [thread:$0]  %s4, 4096, %s47, [#allocation11], 128, 128, 8
    $region21: #{forward.1} parent=1 // pred_fallthru
      _
    // Predicated region
    $region22: #{forward.1} parent=1 // pred_check
      _
    $region23: #{forward.1} parent=1 // pred_check_branch
      %54 = sbr.rel (0) target = $region25
    $region24: #{forward.1} parent=1 // pred_region
      _
    $region25: #{forward.1} parent=1 // pred_fallthru
      _
    // Predicated region
    $region26: #{forward.1} parent=1 // pred_check
      _
    $region27: #{forward.1} parent=1 // pred_check_branch
      %56 = sbr.rel (0) target = $region29
    $region28: #{forward.1} parent=1 // pred_region
      %57 = dma.done [#allocation9], 4096
    $region29: #{forward.1} parent=1 // pred_fallthru
      _
    // Predicated region
    $region30: #{forward.1} parent=1 // pred_check
      _
    $region31: #{forward.1} parent=1 // pred_check_branch
      %59 = sbr.rel (0) target = $region33
    $region32: #{forward.1} parent=1 // pred_region
      %60 = dma.done [#allocation11], 4096
    $region33: #{forward.1} parent=1 // pred_fallthru
      _
    // Predicated region
    $region34: #{forward.1} parent=1 // pred_check
      _
    $region35: #{forward.1} parent=1 // pred_check_branch
      %62 = sbr.rel (0) target = $region37
    $region36: #{forward.1} parent=1 // pred_region
      %63 = dma.done [#allocation11], 4096
    $region37: #{forward.1} parent=1 // pred_fallthru
      _
    %v65 = vld [vmem:[%s0] sm:$0xff]
    %v66 = vld [vmem:[%s0 + $0x8] sm:$0xff]
    %v67 = vld [vmem:[%s0 + $0x10] sm:$0xff]
    %v68 = vld [vmem:[%s0 + $0x18] sm:$0xff]
    %v69 = vld [vmem:[%s0 + $0x20] sm:$0xff]
    %v70 = vld [vmem:[%s0 + $0x28] sm:$0xff]
    %v71 = vld [vmem:[%s0 + $0x30] sm:$0xff]
    %v72 = vld [vmem:[%s0 + $0x38] sm:$0xff]
    %v73 = vpack.c.bf16 %v66, %v65
    %v74 = vpack.c.bf16 %v68, %v67
    %v75 = vpack.c.bf16 %v70, %v69
    %v76 = vpack.c.bf16 %v72, %v71
    %v77 = vld [vmem:[#allocation8] sm:$0xf]
    %v78 = vld [vmem:[#allocation8 + $0x4] sm:$0xf]
    %v79 = vld [vmem:[#allocation8 + $0x8] sm:$0xf]
    %v80 = vld [vmem:[#allocation8 + $0xc] sm:$0xf]
    %v81 = vld [vmem:[#allocation8 + $0x10] sm:$0xf]
    %v82 = vld [vmem:[#allocation8 + $0x14] sm:$0xf]
    %v83 = vld [vmem:[#allocation8 + $0x18] sm:$0xf]
    %v84 = vld [vmem:[#allocation8 + $0x1c] sm:$0xf]
    %v85 = vld [vmem:[#allocation8 + $0x20] sm:$0xf]
    %v86 = vld [vmem:[#allocation8 + $0x24] sm:$0xf]
    %v87 = vld [vmem:[#allocation8 + $0x28] sm:$0xf]
    %v88 = vld [vmem:[#allocation8 + $0x2c] sm:$0xf]
    %v89 = vld [vmem:[#allocation8 + $0x30] sm:$0xf]
    %v90 = vld [vmem:[#allocation8 + $0x34] sm:$0xf]
    %v91 = vld [vmem:[#allocation8 + $0x38] sm:$0xf]
    %v92 = vld [vmem:[#allocation8 + $0x3c] sm:$0xf]
    %v109 = vunpack.c.l.b16 %v77
    %v110 = vunpack.c.l.b16 %v78
    %v111 = vunpack.c.l.b16 %v79
    %v112 = vunpack.c.l.b16 %v80
    %v113 = vunpack.c.l.b16 %v81
    %v114 = vunpack.c.l.b16 %v82
    %v115 = vunpack.c.l.b16 %v83
    %v116 = vunpack.c.l.b16 %v84
    %v117 = vunpack.c.l.b16 %v85
    %v118 = vunpack.c.l.b16 %v86
    %v119 = vunpack.c.l.b16 %v87
    %v120 = vunpack.c.l.b16 %v88
    %v121 = vunpack.c.l.b16 %v89
    %v122 = vunpack.c.l.b16 %v90
    %v123 = vunpack.c.l.b16 %v91
    %v124 = vunpack.c.l.b16 %v92
    %v125 = vpack.c.b16 %v110, %v109
    %v126 = vpack.c.b16 %v112, %v111
    %v127 = vpack.c.b16 %v114, %v113
    %v128 = vpack.c.b16 %v116, %v115
    %v129 = vpack.c.b16 %v118, %v117
    %v130 = vpack.c.b16 %v120, %v119
    %v131 = vpack.c.b16 %v122, %v121
    %v132 = vpack.c.b16 %v124, %v123
    %141 = vmatprep.subr.bf16.mxu0 0
    %142 = vmatpush1.bf16.msra.mxu0 %v125
    %143 = vmatprep.subr.bf16.mxu0 0
    %144 = vmatpush1.bf16.msra.mxu0 %v126
    %145 = vmatprep.subr.bf16.mxu0 0
    %146 = vmatpush1.bf16.msra.mxu0 %v127
    %147 = vmatprep.subr.bf16.mxu0 0
    %148 = vmatpush1.bf16.msra.mxu0 %v128
    %149 = vmatprep.subr.bf16.mxu0 0
    %150 = vmatpush1.bf16.msra.mxu0 %v129
    %151 = vmatprep.subr.bf16.mxu0 0
    %152 = vmatpush1.bf16.msra.mxu0 %v130
    %153 = vmatprep.subr.bf16.mxu0 0
    %154 = vmatpush1.bf16.msra.mxu0 %v131
    %155 = vmatprep.subr.bf16.mxu0 0
    %156 = vmatpush1.bf16.msra.mxu0 %v132
    %157 = vmatprep.subr.bf16.mxu0 0
    %158 = vmatpush1.bf16.msra.mxu0 0
    %159 = vmatprep.subr.bf16.mxu0 0
    %160 = vmatpush1.bf16.msra.mxu0 0
    %161 = vmatprep.subr.bf16.mxu0 0
    %162 = vmatpush1.bf16.msra.mxu0 0
    %163 = vmatprep.subr.bf16.mxu0 0
    %164 = vmatpush1.bf16.msra.mxu0 0
    %165 = vmatprep.subr.bf16.mxu0 0
    %166 = vmatpush1.bf16.msra.mxu0 0
    %167 = vmatprep.subr.bf16.mxu0 0
    %168 = vmatpush1.bf16.msra.mxu0 0
    %169 = vmatprep.subr.bf16.mxu0 0
    %170 = vmatpush1.bf16.msra.mxu0 0
    %171 = vmatprep.subr.bf16.mxu0 0
    %172 = vmatpush1.bf16.msra.mxu0 0
    %173 = vmatprep.mubr.bf16.mxu0 0
    %174 = vmatmul.mubr.bf16.gmra.mrb[0].mxu0 %v73
    %v175 = vpop.f32.mrb[0].mxu0
    %v176 = vadd.f32 0.0, %v175
    %v177 = vpop.f32.mrb[0].mxu0
    %v178 = vpop.f32.mrb[0].mxu0
    %v179 = vadd.f32 0.0, %v178
    %v180 = vpop.f32.mrb[0].mxu0
    %181 = vmatprep.mubr.bf16.mxu0 0
    %182 = vmatmul.mubr.bf16.gmra.mrb[0].mxu0 %v74
    %v183 = vpop.f32.mrb[0].mxu0
    %v184 = vadd.f32 0.0, %v183
    %v185 = vpop.f32.mrb[0].mxu0
    %v186 = vpop.f32.mrb[0].mxu0
    %v187 = vadd.f32 0.0, %v186
    %v188 = vpop.f32.mrb[0].mxu0
    %189 = vmatprep.mubr.bf16.mxu0 0
    %190 = vmatmul.mubr.bf16.gmra.mrb[0].mxu0 %v75
    %v191 = vpop.f32.mrb[0].mxu0
    %v192 = vadd.f32 0.0, %v191
    %v193 = vpop.f32.mrb[0].mxu0
    %v194 = vpop.f32.mrb[0].mxu0
    %v195 = vadd.f32 0.0, %v194
    %v196 = vpop.f32.mrb[0].mxu0
    %197 = vmatprep.mubr.bf16.mxu0 0
    %198 = vmatmul.mubr.bf16.gmra.mrb[0].mxu0 %v76
    %v199 = vpop.f32.mrb[0].mxu0
    %v200 = vadd.f32 0.0, %v199
    %v201 = vpop.f32.mrb[0].mxu0
    %v202 = vpop.f32.mrb[0].mxu0
    %v203 = vadd.f32 0.0, %v202
    %v204 = vpop.f32.mrb[0].mxu0
    %205 = vdwg.mxu0
    %v206 = vld [vmem:[%s3] sm:$0x1]
    %v208 = vlaneseq
    %v209 = vshrl.u32 %v208, 7
    %v210 = vsub.s32 0, %v209
    %v211 = vrot.slane %v206, %v210
    %v213 = vadd.f32 %v176, %v211
    %v214 = vadd.f32 %v179, %v211
    %v215 = vadd.f32 %v184, %v211
    %v216 = vadd.f32 %v187, %v211
    %v217 = vadd.f32 %v192, %v211
    %v218 = vadd.f32 %v195, %v211
    %v219 = vadd.f32 %v200, %v211
    %v220 = vadd.f32 %v203, %v211
    %221 = vst [vmem:[#allocation6] sm:$0xff] %v213
    %222 = vst [vmem:[#allocation6 + $0x8] sm:$0xff] %v214
    %223 = vst [vmem:[#allocation6 + $0x10] sm:$0xff] %v215
    %224 = vst [vmem:[#allocation6 + $0x18] sm:$0xff] %v216
    %225 = vst [vmem:[#allocation6 + $0x20] sm:$0xff] %v217
    %226 = vst [vmem:[#allocation6 + $0x28] sm:$0xff] %v218
    %227 = vst [vmem:[#allocation6 + $0x30] sm:$0xff] %v219
    %228 = vst [vmem:[#allocation6 + $0x38] sm:$0xff] %v220
    %v229 = vld [vmem:[%s0] sm:$0xff]
    %v230 = vld [vmem:[%s0 + $0x8] sm:$0xff]
    %v231 = vld [vmem:[%s0 + $0x10] sm:$0xff]
    %v232 = vld [vmem:[%s0 + $0x18] sm:$0xff]
    %v233 = vld [vmem:[%s0 + $0x20] sm:$0xff]
    %v234 = vld [vmem:[%s0 + $0x28] sm:$0xff]
    %v235 = vld [vmem:[%s0 + $0x30] sm:$0xff]
    %v236 = vld [vmem:[%s0 + $0x38] sm:$0xff]
    %v237 = vpack.c.bf16 %v230, %v229
    %v238 = vpack.c.bf16 %v232, %v231
    %v239 = vpack.c.bf16 %v234, %v233
    %v240 = vpack.c.bf16 %v236, %v235
    %s241 = scalar_lea.vmem [#allocation8], 128
    %v242 = vld [vmem:[%s241] sm:$0xf]
    %v243 = vld [vmem:[%s241 + $0x4] sm:$0xf]
    %v244 = vld [vmem:[%s241 + $0x8] sm:$0xf]
    %v245 = vld [vmem:[%s241 + $0xc] sm:$0xf]
    %v246 = vld [vmem:[%s241 + $0x10] sm:$0xf]
    %v247 = vld [vmem:[%s241 + $0x14] sm:$0xf]
    %v248 = vld [vmem:[%s241 + $0x18] sm:$0xf]
    %v249 = vld [vmem:[%s241 + $0x1c] sm:$0xf]
    %v250 = vld [vmem:[%s241 + $0x20] sm:$0xf]
    %v251 = vld [vmem:[%s241 + $0x24] sm:$0xf]
    %v252 = vld [vmem:[%s241 + $0x28] sm:$0xf]
    %v253 = vld [vmem:[%s241 + $0x2c] sm:$0xf]
    %v254 = vld [vmem:[%s241 + $0x30] sm:$0xf]
    %v255 = vld [vmem:[%s241 + $0x34] sm:$0xf]
    %v256 = vld [vmem:[%s241 + $0x38] sm:$0xf]
    %v257 = vld [vmem:[%s241 + $0x3c] sm:$0xf]
    %v274 = vunpack.c.l.b16 %v242
    %v275 = vunpack.c.l.b16 %v243
    %v276 = vunpack.c.l.b16 %v244
    %v277 = vunpack.c.l.b16 %v245
    %v278 = vunpack.c.l.b16 %v246
    %v279 = vunpack.c.l.b16 %v247
    %v280 = vunpack.c.l.b16 %v248
    %v281 = vunpack.c.l.b16 %v249
    %v282 = vunpack.c.l.b16 %v250
    %v283 = vunpack.c.l.b16 %v251
    %v284 = vunpack.c.l.b16 %v252
    %v285 = vunpack.c.l.b16 %v253
    %v286 = vunpack.c.l.b16 %v254
    %v287 = vunpack.c.l.b16 %v255
    %v288 = vunpack.c.l.b16 %v256
    %v289 = vunpack.c.l.b16 %v257
    %v290 = vpack.c.b16 %v275, %v274
    %v291 = vpack.c.b16 %v277, %v276
    %v292 = vpack.c.b16 %v279, %v278
    %v293 = vpack.c.b16 %v281, %v280
    %v294 = vpack.c.b16 %v283, %v282
    %v295 = vpack.c.b16 %v285, %v284
    %v296 = vpack.c.b16 %v287, %v286
    %v297 = vpack.c.b16 %v289, %v288
    %306 = vmatprep.subr.bf16.mxu0 0
    %307 = vmatpush1.bf16.msra.mxu0 %v290
    %308 = vmatprep.subr.bf16.mxu0 0
    %309 = vmatpush1.bf16.msra.mxu0 %v291
    %310 = vmatprep.subr.bf16.mxu0 0
    %311 = vmatpush1.bf16.msra.mxu0 %v292
    %312 = vmatprep.subr.bf16.mxu0 0
    %313 = vmatpush1.bf16.msra.mxu0 %v293
    %314 = vmatprep.subr.bf16.mxu0 0
    %315 = vmatpush1.bf16.msra.mxu0 %v294
    %316 = vmatprep.subr.bf16.mxu0 0
    %317 = vmatpush1.bf16.msra.mxu0 %v295
    %318 = vmatprep.subr.bf16.mxu0 0
    %319 = vmatpush1.bf16.msra.mxu0 %v296
    %320 = vmatprep.subr.bf16.mxu0 0
    %321 = vmatpush1.bf16.msra.mxu0 %v297
    %322 = vmatprep.subr.bf16.mxu0 0
    %323 = vmatpush1.bf16.msra.mxu0 0
    %324 = vmatprep.subr.bf16.mxu0 0
    %325 = vmatpush1.bf16.msra.mxu0 0
    %326 = vmatprep.subr.bf16.mxu0 0
    %327 = vmatpush1.bf16.msra.mxu0 0
    %328 = vmatprep.subr.bf16.mxu0 0
    %329 = vmatpush1.bf16.msra.mxu0 0
    %330 = vmatprep.subr.bf16.mxu0 0
    %331 = vmatpush1.bf16.msra.mxu0 0
    %332 = vmatprep.subr.bf16.mxu0 0
    %333 = vmatpush1.bf16.msra.mxu0 0
    %334 = vmatprep.subr.bf16.mxu0 0
    %335 = vmatpush1.bf16.msra.mxu0 0
    %336 = vmatprep.subr.bf16.mxu0 0
    %337 = vmatpush1.bf16.msra.mxu0 0
    %338 = vmatprep.mubr.bf16.mxu0 0
    %339 = vmatmul.mubr.bf16.gmra.mrb[0].mxu0 %v237
    %v340 = vpop.f32.mrb[0].mxu0
    %v341 = vadd.f32 0.0, %v340
    %v342 = vpop.f32.mrb[0].mxu0
    %v343 = vpop.f32.mrb[0].mxu0
    %v344 = vadd.f32 0.0, %v343
    %v345 = vpop.f32.mrb[0].mxu0
    %346 = vmatprep.mubr.bf16.mxu0 0
    %347 = vmatmul.mubr.bf16.gmra.mrb[0].mxu0 %v238
    %v348 = vpop.f32.mrb[0].mxu0
    %v349 = vadd.f32 0.0, %v348
    %v350 = vpop.f32.mrb[0].mxu0
    %v351 = vpop.f32.mrb[0].mxu0
    %v352 = vadd.f32 0.0, %v351
    %v353 = vpop.f32.mrb[0].mxu0
    %354 = vmatprep.mubr.bf16.mxu0 0
    %355 = vmatmul.mubr.bf16.gmra.mrb[0].mxu0 %v239
    %v356 = vpop.f32.mrb[0].mxu0
    %v357 = vadd.f32 0.0, %v356
    %v358 = vpop.f32.mrb[0].mxu0
    %v359 = vpop.f32.mrb[0].mxu0
    %v360 = vadd.f32 0.0, %v359
    %v361 = vpop.f32.mrb[0].mxu0
    %362 = vmatprep.mubr.bf16.mxu0 0
    %363 = vmatmul.mubr.bf16.gmra.mrb[0].mxu0 %v240
    %v364 = vpop.f32.mrb[0].mxu0
    %v365 = vadd.f32 0.0, %v364
    %v366 = vpop.f32.mrb[0].mxu0
    %v367 = vpop.f32.mrb[0].mxu0
    %v368 = vadd.f32 0.0, %v367
    %v369 = vpop.f32.mrb[0].mxu0
    %370 = vdwg.mxu0
    %s371 = scalar_lea.vmem %s3, 2
    %v372 = vld [vmem:[%s371] sm:$0x1]
    %v374 = vlaneseq
    %v375 = vshrl.u32 %v374, 7
    %v376 = vsub.s32 0, %v375
    %v377 = vrot.slane %v372, %v376
    %v379 = vadd.f32 %v341, %v377
    %v380 = vadd.f32 %v344, %v377
    %v381 = vadd.f32 %v349, %v377
    %v382 = vadd.f32 %v352, %v377
    %v383 = vadd.f32 %v357, %v377
    %v384 = vadd.f32 %v360, %v377
    %v385 = vadd.f32 %v365, %v377
    %v386 = vadd.f32 %v368, %v377
    %387 = vst [vmem:[#allocation7] sm:$0xff] %v379
    %388 = vst [vmem:[#allocation7 + $0x8] sm:$0xff] %v380
    %389 = vst [vmem:[#allocation7 + $0x10] sm:$0xff] %v381
    %390 = vst [vmem:[#allocation7 + $0x18] sm:$0xff] %v382
    %391 = vst [vmem:[#allocation7 + $0x20] sm:$0xff] %v383
    %392 = vst [vmem:[#allocation7 + $0x28] sm:$0xff] %v384
    %393 = vst [vmem:[#allocation7 + $0x30] sm:$0xff] %v385
    %394 = vst [vmem:[#allocation7 + $0x38] sm:$0xff] %v386
    %v395 = vld [vmem:[#allocation10] sm:$0xf]
    %v396 = vld [vmem:[#allocation10 + $0x4] sm:$0xf]
    %v397 = vld [vmem:[#allocation10 + $0x8] sm:$0xf]
    %v398 = vld [vmem:[#allocation10 + $0xc] sm:$0xf]
    %v399 = vld [vmem:[#allocation10 + $0x10] sm:$0xf]
    %v400 = vld [vmem:[#allocation10 + $0x14] sm:$0xf]
    %v401 = vld [vmem:[#allocation10 + $0x18] sm:$0xf]
    %v402 = vld [vmem:[#allocation10 + $0x1c] sm:$0xf]
    %v403 = vld [vmem:[#allocation10 + $0x20] sm:$0xf]
    %v404 = vld [vmem:[#allocation10 + $0x24] sm:$0xf]
    %v405 = vld [vmem:[#allocation10 + $0x28] sm:$0xf]
    %v406 = vld [vmem:[#allocation10 + $0x2c] sm:$0xf]
    %v407 = vld [vmem:[#allocation10 + $0x30] sm:$0xf]
    %v408 = vld [vmem:[#allocation10 + $0x34] sm:$0xf]
    %v409 = vld [vmem:[#allocation10 + $0x38] sm:$0xf]
    %v410 = vld [vmem:[#allocation10 + $0x3c] sm:$0xf]
    %s411 = scalar_lea.vmem [#allocation10], 128
    %v412 = vld [vmem:[%s411] sm:$0xf]
    %v413 = vld [vmem:[%s411 + $0x4] sm:$0xf]
    %v414 = vld [vmem:[%s411 + $0x8] sm:$0xf]
    %v415 = vld [vmem:[%s411 + $0xc] sm:$0xf]
    %v416 = vld [vmem:[%s411 + $0x10] sm:$0xf]
    %v417 = vld [vmem:[%s411 + $0x14] sm:$0xf]
    %v418 = vld [vmem:[%s411 + $0x18] sm:$0xf]
    %v419 = vld [vmem:[%s411 + $0x1c] sm:$0xf]
    %v420 = vld [vmem:[%s411 + $0x20] sm:$0xf]
    %v421 = vld [vmem:[%s411 + $0x24] sm:$0xf]
    %v422 = vld [vmem:[%s411 + $0x28] sm:$0xf]
    %v423 = vld [vmem:[%s411 + $0x2c] sm:$0xf]
    %v424 = vld [vmem:[%s411 + $0x30] sm:$0xf]
    %v425 = vld [vmem:[%s411 + $0x34] sm:$0xf]
    %v426 = vld [vmem:[%s411 + $0x38] sm:$0xf]
    %v427 = vld [vmem:[%s411 + $0x3c] sm:$0xf]
    %v428 = vld [vmem:[#allocation6] sm:$0xff]
    %v445 = vunpack.c.l.b16 %v395
    %v446 = vunpack.c.l.b16 %v396
    %v447 = vunpack.c.l.b16 %v397
    %v448 = vunpack.c.l.b16 %v398
    %v449 = vunpack.c.l.b16 %v399
    %v450 = vunpack.c.l.b16 %v400
    %v451 = vunpack.c.l.b16 %v401
    %v452 = vunpack.c.l.b16 %v402
    %v453 = vunpack.c.l.b16 %v403
    %v454 = vunpack.c.l.b16 %v404
    %v455 = vunpack.c.l.b16 %v405
    %v456 = vunpack.c.l.b16 %v406
    %v457 = vunpack.c.l.b16 %v407
    %v458 = vunpack.c.l.b16 %v408
    %v459 = vunpack.c.l.b16 %v409
    %v460 = vunpack.c.l.b16 %v410
    %v461 = vpack.c.b16 %v446, %v445
    %v462 = vpack.c.b16 %v448, %v447
    %v463 = vpack.c.b16 %v450, %v449
    %v464 = vpack.c.b16 %v452, %v451
    %v465 = vpack.c.b16 %v454, %v453
    %v466 = vpack.c.b16 %v456, %v455
    %v467 = vpack.c.b16 %v458, %v457
    %v468 = vpack.c.b16 %v460, %v459
    %477 = vmatprep.subr.bf16.mxu0 0
    %478 = vmatpush1.bf16.msra.mxu0 %v461
    %479 = vmatprep.subr.bf16.mxu0 0
    %480 = vmatpush1.bf16.msra.mxu0 %v462
    %481 = vmatprep.subr.bf16.mxu0 0
    %482 = vmatpush1.bf16.msra.mxu0 %v463
    %483 = vmatprep.subr.bf16.mxu0 0
    %484 = vmatpush1.bf16.msra.mxu0 %v464
    %485 = vmatprep.subr.bf16.mxu0 0
    %486 = vmatpush1.bf16.msra.mxu0 %v465
    %487 = vmatprep.subr.bf16.mxu0 0
    %488 = vmatpush1.bf16.msra.mxu0 %v466
    %489 = vmatprep.subr.bf16.mxu0 0
    %490 = vmatpush1.bf16.msra.mxu0 %v467
    %491 = vmatprep.subr.bf16.mxu0 0
    %492 = vmatpush1.bf16.msra.mxu0 %v468
    %493 = vmatprep.subr.bf16.mxu0 0
    %494 = vmatpush1.bf16.msra.mxu0 0
    %495 = vmatprep.subr.bf16.mxu0 0
    %496 = vmatpush1.bf16.msra.mxu0 0
    %497 = vmatprep.subr.bf16.mxu0 0
    %498 = vmatpush1.bf16.msra.mxu0 0
    %499 = vmatprep.subr.bf16.mxu0 0
    %500 = vmatpush1.bf16.msra.mxu0 0
    %501 = vmatprep.subr.bf16.mxu0 0
    %502 = vmatpush1.bf16.msra.mxu0 0
    %503 = vmatprep.subr.bf16.mxu0 0
    %504 = vmatpush1.bf16.msra.mxu0 0
    %505 = vmatprep.subr.bf16.mxu0 0
    %506 = vmatpush1.bf16.msra.mxu0 0
    %507 = vmatprep.subr.bf16.mxu0 0
    %508 = vmatpush1.bf16.msra.mxu0 0
    %509 = vmatprep.mubr.bf16.mxu0 0
    %510 = vmatmul.mubr.bf16.gmra.mrb[0].mxu0 0
    %v511 = vpop.f32.mrb[0].mxu0
    %v512 = vadd.f32 0.0, %v511
    %v513 = vpop.f32.mrb[0].mxu0
    %v514 = vpop.f32.mrb[0].mxu0
    %v515 = vpop.f32.mrb[0].mxu0
    %516 = vdwg.mxu0
    %v517 = vadd.f32 %v428, %v512
    %s518 = scalar_lea.vmem [#allocation7], 56
    %v519 = vld [vmem:[%s518] sm:$0xff]
    %v536 = vunpack.c.l.b16 %v412
    %v537 = vunpack.c.l.b16 %v413
    %v538 = vunpack.c.l.b16 %v414
    %v539 = vunpack.c.l.b16 %v415
    %v540 = vunpack.c.l.b16 %v416
    %v541 = vunpack.c.l.b16 %v417
    %v542 = vunpack.c.l.b16 %v418
    %v543 = vunpack.c.l.b16 %v419
    %v544 = vunpack.c.l.b16 %v420
    %v545 = vunpack.c.l.b16 %v421
    %v546 = vunpack.c.l.b16 %v422
    %v547 = vunpack.c.l.b16 %v423
    %v548 = vunpack.c.l.b16 %v424
    %v549 = vunpack.c.l.b16 %v425
    %v550 = vunpack.c.l.b16 %v426
    %v551 = vunpack.c.l.b16 %v427
    %v552 = vpack.c.b16 %v537, %v536
    %v553 = vpack.c.b16 %v539, %v538
    %v554 = vpack.c.b16 %v541, %v540
    %v555 = vpack.c.b16 %v543, %v542
    %v556 = vpack.c.b16 %v545, %v544
    %v557 = vpack.c.b16 %v547, %v546
    %v558 = vpack.c.b16 %v549, %v548
    %v559 = vpack.c.b16 %v551, %v550
    %568 = vmatprep.subr.bf16.mxu0 0
    %569 = vmatpush1.bf16.msra.mxu0 %v552
    %570 = vmatprep.subr.bf16.mxu0 0
    %571 = vmatpush1.bf16.msra.mxu0 %v553
    %572 = vmatprep.subr.bf16.mxu0 0
    %573 = vmatpush1.bf16.msra.mxu0 %v554
    %574 = vmatprep.subr.bf16.mxu0 0
    %575 = vmatpush1.bf16.msra.mxu0 %v555
    %576 = vmatprep.subr.bf16.mxu0 0
    %577 = vmatpush1.bf16.msra.mxu0 %v556
    %578 = vmatprep.subr.bf16.mxu0 0
    %579 = vmatpush1.bf16.msra.mxu0 %v557
    %580 = vmatprep.subr.bf16.mxu0 0
    %581 = vmatpush1.bf16.msra.mxu0 %v558
    %582 = vmatprep.subr.bf16.mxu0 0
    %583 = vmatpush1.bf16.msra.mxu0 %v559
    %584 = vmatprep.subr.bf16.mxu0 0
    %585 = vmatpush1.bf16.msra.mxu0 0
    %586 = vmatprep.subr.bf16.mxu0 0
    %587 = vmatpush1.bf16.msra.mxu0 0
    %588 = vmatprep.subr.bf16.mxu0 0
    %589 = vmatpush1.bf16.msra.mxu0 0
    %590 = vmatprep.subr.bf16.mxu0 0
    %591 = vmatpush1.bf16.msra.mxu0 0
    %592 = vmatprep.subr.bf16.mxu0 0
    %593 = vmatpush1.bf16.msra.mxu0 0
    %594 = vmatprep.subr.bf16.mxu0 0
    %595 = vmatpush1.bf16.msra.mxu0 0
    %596 = vmatprep.subr.bf16.mxu0 0
    %597 = vmatpush1.bf16.msra.mxu0 0
    %598 = vmatprep.subr.bf16.mxu0 0
    %599 = vmatpush1.bf16.msra.mxu0 0
    %600 = vmatprep.mubr.bf16.mxu0 0
    %601 = vmatmul.mubr.bf16.gmra.mrb[0].mxu0 0
    %v602 = vpop.f32.mrb[0].mxu0
    %v603 = vadd.f32 0.0, %v602
    %v604 = vpop.f32.mrb[0].mxu0
    %v605 = vpop.f32.mrb[0].mxu0
    %v606 = vpop.f32.mrb[0].mxu0
    %607 = vdwg.mxu0
    %v608 = vadd.f32 %v519, %v603
    %v609 = vxor.u32 %v517, 2147483648
    %v610 = vmul.f32 %v609, 1.442695
    %v611 = vpow.pop %v610
    %v612 = vadd.f32 %v611, 1.0
    %v613 = vrcp.pop %v612
    %v614 = vmul.f32 1.0, %v613
    %v615 = vxor.u32 %v608, 2147483648
    %v616 = vmul.f32 %v615, 1.442695
    %v617 = vpow.pop %v616
    %v618 = vadd.f32 %v617, 1.0
    %v619 = vrcp.pop %v618
    %v620 = vmul.f32 1.0, %v619
    %v621 = vtanh.pop %v517
    %622 = vrot.lane.b32.xlu0 %v621, 64
    %v623 = vpop.permute.xlu0 %622
    %v624 = vtanh.pop %v608
    %625 = vrot.lane.b32.xlu0 %v624, 64
    %v626 = vpop.permute.xlu0 %625
    %v627 = vsub.f32 0.0, %v623
    %v628 = vmul.f32 %v614, %v627
    %v629 = vadd.f32 %v623, %v628
    %v630 = vsub.f32 0.0, %v626
    %v631 = vmul.f32 %v620, %v630
    %v632 = vadd.f32 %v626, %v631
    %633 = vst [vmem:[#allocation2] sm:$0xff] %v629
    %634 = vst [vmem:[#allocation4] sm:$0xff] %v632
    %s635 = scalar_lea.vmem [#allocation6], 8
    %v636 = vld [vmem:[%s635] sm:$0xff]
    %v637 = vpack.c.bf16 %v629, %v629
    %638 = vmatprep.subr.bf16.mxu0 0
    %639 = vmatpush1.bf16.msra.mxu0 %v461
    %640 = vmatprep.subr.bf16.mxu0 0
    %641 = vmatpush1.bf16.msra.mxu0 %v462
    %642 = vmatprep.subr.bf16.mxu0 0
    %643 = vmatpush1.bf16.msra.mxu0 %v463
    %644 = vmatprep.subr.bf16.mxu0 0
    %645 = vmatpush1.bf16.msra.mxu0 %v464
    %646 = vmatprep.subr.bf16.mxu0 0
    %647 = vmatpush1.bf16.msra.mxu0 %v465
    %648 = vmatprep.subr.bf16.mxu0 0
    %649 = vmatpush1.bf16.msra.mxu0 %v466
    %650 = vmatprep.subr.bf16.mxu0 0
    %651 = vmatpush1.bf16.msra.mxu0 %v467
    %652 = vmatprep.subr.bf16.mxu0 0
    %653 = vmatpush1.bf16.msra.mxu0 %v468
    %654 = vmatprep.subr.bf16.mxu0 0
    %655 = vmatpush1.bf16.msra.mxu0 0
    %656 = vmatprep.subr.bf16.mxu0 0
    %657 = vmatpush1.bf16.msra.mxu0 0
    %658 = vmatprep.subr.bf16.mxu0 0
    %659 = vmatpush1.bf16.msra.mxu0 0
    %660 = vmatprep.subr.bf16.mxu0 0
    %661 = vmatpush1.bf16.msra.mxu0 0
    %662 = vmatprep.subr.bf16.mxu0 0
    %663 = vmatpush1.bf16.msra.mxu0 0
    %664 = vmatprep.subr.bf16.mxu0 0
    %665 = vmatpush1.bf16.msra.mxu0 0
    %666 = vmatprep.subr.bf16.mxu0 0
    %667 = vmatpush1.bf16.msra.mxu0 0
    %668 = vmatprep.subr.bf16.mxu0 0
    %669 = vmatpush1.bf16.msra.mxu0 0
    %670 = vmatprep.mubr.bf16.mxu0 0
    %671 = vmatmul.mubr.bf16.gmra.mrb[0].mxu0 %v637
    %v672 = vpop.f32.mrb[0].mxu0
    %v673 = vadd.f32 0.0, %v672
    %v674 = vpop.f32.mrb[0].mxu0
    %v675 = vpop.f32.mrb[0].mxu0
    %v676 = vpop.f32.mrb[0].mxu0
    %677 = vdwg.mxu0
    %v678 = vadd.f32 %v636, %v673
    %s679 = scalar_lea.vmem [#allocation7], 48
    %v680 = vld [vmem:[%s679] sm:$0xff]
    %v681 = vpack.c.bf16 %v632, %v632
    %682 = vmatprep.subr.bf16.mxu0 0
    %683 = vmatpush1.bf16.msra.mxu0 %v552
    %684 = vmatprep.subr.bf16.mxu0 0
    %685 = vmatpush1.bf16.msra.mxu0 %v553
    %686 = vmatprep.subr.bf16.mxu0 0
    %687 = vmatpush1.bf16.msra.mxu0 %v554
    %688 = vmatprep.subr.bf16.mxu0 0
    %689 = vmatpush1.bf16.msra.mxu0 %v555
    %690 = vmatprep.subr.bf16.mxu0 0
    %691 = vmatpush1.bf16.msra.mxu0 %v556
    %692 = vmatprep.subr.bf16.mxu0 0
    %693 = vmatpush1.bf16.msra.mxu0 %v557
    %694 = vmatprep.subr.bf16.mxu0 0
    %695 = vmatpush1.bf16.msra.mxu0 %v558
    %696 = vmatprep.subr.bf16.mxu0 0
    %697 = vmatpush1.bf16.msra.mxu0 %v559
    %698 = vmatprep.subr.bf16.mxu0 0
    %699 = vmatpush1.bf16.msra.mxu0 0
    %700 = vmatprep.subr.bf16.mxu0 0
    %701 = vmatpush1.bf16.msra.mxu0 0
    %702 = vmatprep.subr.bf16.mxu0 0
    %703 = vmatpush1.bf16.msra.mxu0 0
    %704 = vmatprep.subr.bf16.mxu0 0
    %705 = vmatpush1.bf16.msra.mxu0 0
    %706 = vmatprep.subr.bf16.mxu0 0
    %707 = vmatpush1.bf16.msra.mxu0 0
    %708 = vmatprep.subr.bf16.mxu0 0
    %709 = vmatpush1.bf16.msra.mxu0 0
    %710 = vmatprep.subr.bf16.mxu0 0
    %711 = vmatpush1.bf16.msra.mxu0 0
    %712 = vmatprep.subr.bf16.mxu0 0
    %713 = vmatpush1.bf16.msra.mxu0 0
    %714 = vmatprep.mubr.bf16.mxu0 0
    %715 = vmatmul.mubr.bf16.gmra.mrb[0].mxu0 %v681
    %v716 = vpop.f32.mrb[0].mxu0
    %v717 = vadd.f32 0.0, %v716
    %v718 = vpop.f32.mrb[0].mxu0
    %v719 = vpop.f32.mrb[0].mxu0
    %v720 = vpop.f32.mrb[0].mxu0
    %721 = vdwg.mxu0
    %v722 = vadd.f32 %v680, %v717
    %v723 = vxor.u32 %v678, 2147483648
    %v724 = vmul.f32 %v723, 1.442695
    %v725 = vpow.pop %v724
    %v726 = vadd.f32 %v725, 1.0
    %v727 = vrcp.pop %v726
    %v728 = vmul.f32 1.0, %v727
    %v729 = vxor.u32 %v722, 2147483648
    %v730 = vmul.f32 %v729, 1.442695
    %v731 = vpow.pop %v730
    %v732 = vadd.f32 %v731, 1.0
    %v733 = vrcp.pop %v732
    %v734 = vmul.f32 1.0, %v733
    %v735 = vtanh.pop %v678
    %736 = vrot.lane.b32.xlu0 %v735, 64
    %v737 = vpop.permute.xlu0 %736
    %v738 = vtanh.pop %v722
    %739 = vrot.lane.b32.xlu0 %v738, 64
    %v740 = vpop.permute.xlu0 %739
    %v741 = vsub.f32 %v629, %v737
    %v742 = vmul.f32 %v728, %v741
    %v743 = vadd.f32 %v737, %v742
    %v744 = vsub.f32 %v632, %v740
    %v745 = vmul.f32 %v734, %v744
    %v746 = vadd.f32 %v740, %v745
    %s747 = scalar_lea.vmem [#allocation2], 8
    %748 = vst [vmem:[%s747] sm:$0xff] %v743
    %s749 = scalar_lea.vmem [#allocation4], 8
    %750 = vst [vmem:[%s749] sm:$0xff] %v746
    %s751 = scalar_lea.vmem [#allocation6], 16
    %v752 = vld [vmem:[%s751] sm:$0xff]
    %v753 = vpack.c.bf16 %v743, %v743
    %754 = vmatprep.subr.bf16.mxu0 0
    %755 = vmatpush1.bf16.msra.mxu0 %v461
    %756 = vmatprep.subr.bf16.mxu0 0
    %757 = vmatpush1.bf16.msra.mxu0 %v462
    %758 = vmatprep.subr.bf16.mxu0 0
    %759 = vmatpush1.bf16.msra.mxu0 %v463
    %760 = vmatprep.subr.bf16.mxu0 0
    %761 = vmatpush1.bf16.msra.mxu0 %v464
    %762 = vmatprep.subr.bf16.mxu0 0
    %763 = vmatpush1.bf16.msra.mxu0 %v465
    %764 = vmatprep.subr.bf16.mxu0 0
    %765 = vmatpush1.bf16.msra.mxu0 %v466
    %766 = vmatprep.subr.bf16.mxu0 0
    %767 = vmatpush1.bf16.msra.mxu0 %v467
    %768 = vmatprep.subr.bf16.mxu0 0
    %769 = vmatpush1.bf16.msra.mxu0 %v468
    %770 = vmatprep.subr.bf16.mxu0 0
    %771 = vmatpush1.bf16.msra.mxu0 0
    %772 = vmatprep.subr.bf16.mxu0 0
    %773 = vmatpush1.bf16.msra.mxu0 0
    %774 = vmatprep.subr.bf16.mxu0 0
    %775 = vmatpush1.bf16.msra.mxu0 0
    %776 = vmatprep.subr.bf16.mxu0 0
    %777 = vmatpush1.bf16.msra.mxu0 0
    %778 = vmatprep.subr.bf16.mxu0 0
    %779 = vmatpush1.bf16.msra.mxu0 0
    %780 = vmatprep.subr.bf16.mxu0 0
    %781 = vmatpush1.bf16.msra.mxu0 0
    %782 = vmatprep.subr.bf16.mxu0 0
    %783 = vmatpush1.bf16.msra.mxu0 0
    %784 = vmatprep.subr.bf16.mxu0 0
    %785 = vmatpush1.bf16.msra.mxu0 0
    %786 = vmatprep.mubr.bf16.mxu0 0
    %787 = vmatmul.mubr.bf16.gmra.mrb[0].mxu0 %v753
    %v788 = vpop.f32.mrb[0].mxu0
    %v789 = vadd.f32 0.0, %v788
    %v790 = vpop.f32.mrb[0].mxu0
    %v791 = vpop.f32.mrb[0].mxu0
    %v792 = vpop.f32.mrb[0].mxu0
    %793 = vdwg.mxu0
    %v794 = vadd.f32 %v752, %v789
    %s795 = scalar_lea.vmem [#allocation7], 40
    %v796 = vld [vmem:[%s795] sm:$0xff]
    %v797 = vpack.c.bf16 %v746, %v746
    %798 = vmatprep.subr.bf16.mxu0 0
    %799 = vmatpush1.bf16.msra.mxu0 %v552
    %800 = vmatprep.subr.bf16.mxu0 0
    %801 = vmatpush1.bf16.msra.mxu0 %v553
    %802 = vmatprep.subr.bf16.mxu0 0
    %803 = vmatpush1.bf16.msra.mxu0 %v554
    %804 = vmatprep.subr.bf16.mxu0 0
    %805 = vmatpush1.bf16.msra.mxu0 %v555
    %806 = vmatprep.subr.bf16.mxu0 0
    %807 = vmatpush1.bf16.msra.mxu0 %v556
    %808 = vmatprep.subr.bf16.mxu0 0
    %809 = vmatpush1.bf16.msra.mxu0 %v557
    %810 = vmatprep.subr.bf16.mxu0 0
    %811 = vmatpush1.bf16.msra.mxu0 %v558
    %812 = vmatprep.subr.bf16.mxu0 0
    %813 = vmatpush1.bf16.msra.mxu0 %v559
    %814 = vmatprep.subr.bf16.mxu0 0
    %815 = vmatpush1.bf16.msra.mxu0 0
    %816 = vmatprep.subr.bf16.mxu0 0
    %817 = vmatpush1.bf16.msra.mxu0 0
    %818 = vmatprep.subr.bf16.mxu0 0
    %819 = vmatpush1.bf16.msra.mxu0 0
    %820 = vmatprep.subr.bf16.mxu0 0
    %821 = vmatpush1.bf16.msra.mxu0 0
    %822 = vmatprep.subr.bf16.mxu0 0
    %823 = vmatpush1.bf16.msra.mxu0 0
    %824 = vmatprep.subr.bf16.mxu0 0
    %825 = vmatpush1.bf16.msra.mxu0 0
    %826 = vmatprep.subr.bf16.mxu0 0
    %827 = vmatpush1.bf16.msra.mxu0 0
    %828 = vmatprep.subr.bf16.mxu0 0
    %829 = vmatpush1.bf16.msra.mxu0 0
    %830 = vmatprep.mubr.bf16.mxu0 0
    %831 = vmatmul.mubr.bf16.gmra.mrb[0].mxu0 %v797
    %v832 = vpop.f32.mrb[0].mxu0
    %v833 = vadd.f32 0.0, %v832
    %v834 = vpop.f32.mrb[0].mxu0
    %v835 = vpop.f32.mrb[0].mxu0
    %v836 = vpop.f32.mrb[0].mxu0
    %837 = vdwg.mxu0
    %v838 = vadd.f32 %v796, %v833
    %v839 = vxor.u32 %v794, 2147483648
    %v840 = vmul.f32 %v839, 1.442695
    %v841 = vpow.pop %v840
    %v842 = vadd.f32 %v841, 1.0
    %v843 = vrcp.pop %v842
    %v844 = vmul.f32 1.0, %v843
    %v845 = vxor.u32 %v838, 2147483648
    %v846 = vmul.f32 %v845, 1.442695
    %v847 = vpow.pop %v846
    %v848 = vadd.f32 %v847, 1.0
    %v849 = vrcp.pop %v848
    %v850 = vmul.f32 1.0, %v849
    %v851 = vtanh.pop %v794
    %852 = vrot.lane.b32.xlu0 %v851, 64
    %v853 = vpop.permute.xlu0 %852
    %v854 = vtanh.pop %v838
    %855 = vrot.lane.b32.xlu0 %v854, 64
    %v856 = vpop.permute.xlu0 %855
    %v857 = vsub.f32 %v743, %v853
    %v858 = vmul.f32 %v844, %v857
    %v859 = vadd.f32 %v853, %v858
    %v860 = vsub.f32 %v746, %v856
    %v861 = vmul.f32 %v850, %v860
    %v862 = vadd.f32 %v856, %v861
    %s863 = scalar_lea.vmem [#allocation2], 16
    %864 = vst [vmem:[%s863] sm:$0xff] %v859
    %s865 = scalar_lea.vmem [#allocation4], 16
    %866 = vst [vmem:[%s865] sm:$0xff] %v862
    %s867 = scalar_lea.vmem [#allocation6], 24
    %v868 = vld [vmem:[%s867] sm:$0xff]
    %v869 = vpack.c.bf16 %v859, %v859
    %870 = vmatprep.subr.bf16.mxu0 0
    %871 = vmatpush1.bf16.msra.mxu0 %v461
    %872 = vmatprep.subr.bf16.mxu0 0
    %873 = vmatpush1.bf16.msra.mxu0 %v462
    %874 = vmatprep.subr.bf16.mxu0 0
    %875 = vmatpush1.bf16.msra.mxu0 %v463
    %876 = vmatprep.subr.bf16.mxu0 0
    %877 = vmatpush1.bf16.msra.mxu0 %v464
    %878 = vmatprep.subr.bf16.mxu0 0
    %879 = vmatpush1.bf16.msra.mxu0 %v465
    %880 = vmatprep.subr.bf16.mxu0 0
    %881 = vmatpush1.bf16.msra.mxu0 %v466
    %882 = vmatprep.subr.bf16.mxu0 0
    %883 = vmatpush1.bf16.msra.mxu0 %v467
    %884 = vmatprep.subr.bf16.mxu0 0
    %885 = vmatpush1.bf16.msra.mxu0 %v468
    %886 = vmatprep.subr.bf16.mxu0 0
    %887 = vmatpush1.bf16.msra.mxu0 0
    %888 = vmatprep.subr.bf16.mxu0 0
    %889 = vmatpush1.bf16.msra.mxu0 0
    %890 = vmatprep.subr.bf16.mxu0 0
    %891 = vmatpush1.bf16.msra.mxu0 0
    %892 = vmatprep.subr.bf16.mxu0 0
    %893 = vmatpush1.bf16.msra.mxu0 0
    %894 = vmatprep.subr.bf16.mxu0 0
    %895 = vmatpush1.bf16.msra.mxu0 0
    %896 = vmatprep.subr.bf16.mxu0 0
    %897 = vmatpush1.bf16.msra.mxu0 0
    %898 = vmatprep.subr.bf16.mxu0 0
    %899 = vmatpush1.bf16.msra.mxu0 0
    %900 = vmatprep.subr.bf16.mxu0 0
    %901 = vmatpush1.bf16.msra.mxu0 0
    %902 = vmatprep.mubr.bf16.mxu0 0
    %903 = vmatmul.mubr.bf16.gmra.mrb[0].mxu0 %v869
    %v904 = vpop.f32.mrb[0].mxu0
    %v905 = vadd.f32 0.0, %v904
    %v906 = vpop.f32.mrb[0].mxu0
    %v907 = vpop.f32.mrb[0].mxu0
    %v908 = vpop.f32.mrb[0].mxu0
    %909 = vdwg.mxu0
    %v910 = vadd.f32 %v868, %v905
    %s911 = scalar_lea.vmem [#allocation7], 32
    %v912 = vld [vmem:[%s911] sm:$0xff]
    %v913 = vpack.c.bf16 %v862, %v862
    %914 = vmatprep.subr.bf16.mxu0 0
    %915 = vmatpush1.bf16.msra.mxu0 %v552
    %916 = vmatprep.subr.bf16.mxu0 0
    %917 = vmatpush1.bf16.msra.mxu0 %v553
    %918 = vmatprep.subr.bf16.mxu0 0
    %919 = vmatpush1.bf16.msra.mxu0 %v554
    %920 = vmatprep.subr.bf16.mxu0 0
    %921 = vmatpush1.bf16.msra.mxu0 %v555
    %922 = vmatprep.subr.bf16.mxu0 0
    %923 = vmatpush1.bf16.msra.mxu0 %v556
    %924 = vmatprep.subr.bf16.mxu0 0
    %925 = vmatpush1.bf16.msra.mxu0 %v557
    %926 = vmatprep.subr.bf16.mxu0 0
    %927 = vmatpush1.bf16.msra.mxu0 %v558
    %928 = vmatprep.subr.bf16.mxu0 0
    %929 = vmatpush1.bf16.msra.mxu0 %v559
    %930 = vmatprep.subr.bf16.mxu0 0
    %931 = vmatpush1.bf16.msra.mxu0 0
    %932 = vmatprep.subr.bf16.mxu0 0
    %933 = vmatpush1.bf16.msra.mxu0 0
    %934 = vmatprep.subr.bf16.mxu0 0
    %935 = vmatpush1.bf16.msra.mxu0 0
    %936 = vmatprep.subr.bf16.mxu0 0
    %937 = vmatpush1.bf16.msra.mxu0 0
    %938 = vmatprep.subr.bf16.mxu0 0
    %939 = vmatpush1.bf16.msra.mxu0 0
    %940 = vmatprep.subr.bf16.mxu0 0
    %941 = vmatpush1.bf16.msra.mxu0 0
    %942 = vmatprep.subr.bf16.mxu0 0
    %943 = vmatpush1.bf16.msra.mxu0 0
    %944 = vmatprep.subr.bf16.mxu0 0
    %945 = vmatpush1.bf16.msra.mxu0 0
    %946 = vmatprep.mubr.bf16.mxu0 0
    %947 = vmatmul.mubr.bf16.gmra.mrb[0].mxu0 %v913
    %v948 = vpop.f32.mrb[0].mxu0
    %v949 = vadd.f32 0.0, %v948
    %v950 = vpop.f32.mrb[0].mxu0
    %v951 = vpop.f32.mrb[0].mxu0
    %v952 = vpop.f32.mrb[0].mxu0
    %953 = vdwg.mxu0
    %v954 = vadd.f32 %v912, %v949
    %v955 = vxor.u32 %v910, 2147483648
    %v956 = vmul.f32 %v955, 1.442695
    %v957 = vpow.pop %v956
    %v958 = vadd.f32 %v957, 1.0
    %v959 = vrcp.pop %v958
    %v960 = vmul.f32 1.0, %v959
    %v961 = vxor.u32 %v954, 2147483648
    %v962 = vmul.f32 %v961, 1.442695
    %v963 = vpow.pop %v962
    %v964 = vadd.f32 %v963, 1.0
    %v965 = vrcp.pop %v964
    %v966 = vmul.f32 1.0, %v965
    %v967 = vtanh.pop %v910
    %968 = vrot.lane.b32.xlu0 %v967, 64
    %v969 = vpop.permute.xlu0 %968
    %v970 = vtanh.pop %v954
    %971 = vrot.lane.b32.xlu0 %v970, 64
    %v972 = vpop.permute.xlu0 %971
    %v973 = vsub.f32 %v859, %v969
    %v974 = vmul.f32 %v960, %v973
    %v975 = vadd.f32 %v969, %v974
    %v976 = vsub.f32 %v862, %v972
    %v977 = vmul.f32 %v966, %v976
    %v978 = vadd.f32 %v972, %v977
    %s979 = scalar_lea.vmem [#allocation2], 24
    %980 = vst [vmem:[%s979] sm:$0xff] %v975
    %s981 = scalar_lea.vmem [#allocation4], 24
    %982 = vst [vmem:[%s981] sm:$0xff] %v978
    %s983 = scalar_lea.vmem [#allocation6], 32
    %v984 = vld [vmem:[%s983] sm:$0xff]
    %v985 = vpack.c.bf16 %v975, %v975
    %986 = vmatprep.subr.bf16.mxu0 0
    %987 = vmatpush1.bf16.msra.mxu0 %v461
    %988 = vmatprep.subr.bf16.mxu0 0
    %989 = vmatpush1.bf16.msra.mxu0 %v462
    %990 = vmatprep.subr.bf16.mxu0 0
    %991 = vmatpush1.bf16.msra.mxu0 %v463
    %992 = vmatprep.subr.bf16.mxu0 0
    %993 = vmatpush1.bf16.msra.mxu0 %v464
    %994 = vmatprep.subr.bf16.mxu0 0
    %995 = vmatpush1.bf16.msra.mxu0 %v465
    %996 = vmatprep.subr.bf16.mxu0 0
    %997 = vmatpush1.bf16.msra.mxu0 %v466
    %998 = vmatprep.subr.bf16.mxu0 0
    %999 = vmatpush1.bf16.msra.mxu0 %v467
    %1000 = vmatprep.subr.bf16.mxu0 0
    %1001 = vmatpush1.bf16.msra.mxu0 %v468
    %1002 = vmatprep.subr.bf16.mxu0 0
    %1003 = vmatpush1.bf16.msra.mxu0 0
    %1004 = vmatprep.subr.bf16.mxu0 0
    %1005 = vmatpush1.bf16.msra.mxu0 0
    %1006 = vmatprep.subr.bf16.mxu0 0
    %1007 = vmatpush1.bf16.msra.mxu0 0
    %1008 = vmatprep.subr.bf16.mxu0 0
    %1009 = vmatpush1.bf16.msra.mxu0 0
    %1010 = vmatprep.subr.bf16.mxu0 0
    %1011 = vmatpush1.bf16.msra.mxu0 0
    %1012 = vmatprep.subr.bf16.mxu0 0
    %1013 = vmatpush1.bf16.msra.mxu0 0
    %1014 = vmatprep.subr.bf16.mxu0 0
    %1015 = vmatpush1.bf16.msra.mxu0 0
    %1016 = vmatprep.subr.bf16.mxu0 0
    %1017 = vmatpush1.bf16.msra.mxu0 0
    %1018 = vmatprep.mubr.bf16.mxu0 0
    %1019 = vmatmul.mubr.bf16.gmra.mrb[0].mxu0 %v985
    %v1020 = vpop.f32.mrb[0].mxu0
    %v1021 = vadd.f32 0.0, %v1020
    %v1022 = vpop.f32.mrb[0].mxu0
    %v1023 = vpop.f32.mrb[0].mxu0
    %v1024 = vpop.f32.mrb[0].mxu0
    %1025 = vdwg.mxu0
    %v1026 = vadd.f32 %v984, %v1021
    %s1027 = scalar_lea.vmem [#allocation7], 24
    %v1028 = vld [vmem:[%s1027] sm:$0xff]
    %v1029 = vpack.c.bf16 %v978, %v978
    %1030 = vmatprep.subr.bf16.mxu0 0
    %1031 = vmatpush1.bf16.msra.mxu0 %v552
    %1032 = vmatprep.subr.bf16.mxu0 0
    %1033 = vmatpush1.bf16.msra.mxu0 %v553
    %1034 = vmatprep.subr.bf16.mxu0 0
    %1035 = vmatpush1.bf16.msra.mxu0 %v554
    %1036 = vmatprep.subr.bf16.mxu0 0
    %1037 = vmatpush1.bf16.msra.mxu0 %v555
    %1038 = vmatprep.subr.bf16.mxu0 0
    %1039 = vmatpush1.bf16.msra.mxu0 %v556
    %1040 = vmatprep.subr.bf16.mxu0 0
    %1041 = vmatpush1.bf16.msra.mxu0 %v557
    %1042 = vmatprep.subr.bf16.mxu0 0
    %1043 = vmatpush1.bf16.msra.mxu0 %v558
    %1044 = vmatprep.subr.bf16.mxu0 0
    %1045 = vmatpush1.bf16.msra.mxu0 %v559
    %1046 = vmatprep.subr.bf16.mxu0 0
    %1047 = vmatpush1.bf16.msra.mxu0 0
    %1048 = vmatprep.subr.bf16.mxu0 0
    %1049 = vmatpush1.bf16.msra.mxu0 0
    %1050 = vmatprep.subr.bf16.mxu0 0
    %1051 = vmatpush1.bf16.msra.mxu0 0
    %1052 = vmatprep.subr.bf16.mxu0 0
    %1053 = vmatpush1.bf16.msra.mxu0 0
    %1054 = vmatprep.subr.bf16.mxu0 0
    %1055 = vmatpush1.bf16.msra.mxu0 0
    %1056 = vmatprep.subr.bf16.mxu0 0
    %1057 = vmatpush1.bf16.msra.mxu0 0
    %1058 = vmatprep.subr.bf16.mxu0 0
    %1059 = vmatpush1.bf16.msra.mxu0 0
    %1060 = vmatprep.subr.bf16.mxu0 0
    %1061 = vmatpush1.bf16.msra.mxu0 0
    %1062 = vmatprep.mubr.bf16.mxu0 0
    %1063 = vmatmul.mubr.bf16.gmra.mrb[0].mxu0 %v1029
    %v1064 = vpop.f32.mrb[0].mxu0
    %v1065 = vadd.f32 0.0, %v1064
    %v1066 = vpop.f32.mrb[0].mxu0
    %v1067 = vpop.f32.mrb[0].mxu0
    %v1068 = vpop.f32.mrb[0].mxu0
    %1069 = vdwg.mxu0
    %v1070 = vadd.f32 %v1028, %v1065
    %v1071 = vxor.u32 %v1026, 2147483648
    %v1072 = vmul.f32 %v1071, 1.442695
    %v1073 = vpow.pop %v1072
    %v1074 = vadd.f32 %v1073, 1.0
    %v1075 = vrcp.pop %v1074
    %v1076 = vmul.f32 1.0, %v1075
    %v1077 = vxor.u32 %v1070, 2147483648
    %v1078 = vmul.f32 %v1077, 1.442695
    %v1079 = vpow.pop %v1078
    %v1080 = vadd.f32 %v1079, 1.0
    %v1081 = vrcp.pop %v1080
    %v1082 = vmul.f32 1.0, %v1081
    %v1083 = vtanh.pop %v1026
    %1084 = vrot.lane.b32.xlu0 %v1083, 64
    %v1085 = vpop.permute.xlu0 %1084
    %v1086 = vtanh.pop %v1070
    %1087 = vrot.lane.b32.xlu0 %v1086, 64
    %v1088 = vpop.permute.xlu0 %1087
    %v1089 = vsub.f32 %v975, %v1085
    %v1090 = vmul.f32 %v1076, %v1089
    %v1091 = vadd.f32 %v1085, %v1090
    %v1092 = vsub.f32 %v978, %v1088
    %v1093 = vmul.f32 %v1082, %v1092
    %v1094 = vadd.f32 %v1088, %v1093
    %s1095 = scalar_lea.vmem [#allocation2], 32
    %1096 = vst [vmem:[%s1095] sm:$0xff] %v1091
    %s1097 = scalar_lea.vmem [#allocation4], 32
    %1098 = vst [vmem:[%s1097] sm:$0xff] %v1094
    %s1099 = scalar_lea.vmem [#allocation6], 40
    %v1100 = vld [vmem:[%s1099] sm:$0xff]
    %v1101 = vpack.c.bf16 %v1091, %v1091
    %1102 = vmatprep.subr.bf16.mxu0 0
    %1103 = vmatpush1.bf16.msra.mxu0 %v461
    %1104 = vmatprep.subr.bf16.mxu0 0
    %1105 = vmatpush1.bf16.msra.mxu0 %v462
    %1106 = vmatprep.subr.bf16.mxu0 0
    %1107 = vmatpush1.bf16.msra.mxu0 %v463
    %1108 = vmatprep.subr.bf16.mxu0 0
    %1109 = vmatpush1.bf16.msra.mxu0 %v464
    %1110 = vmatprep.subr.bf16.mxu0 0
    %1111 = vmatpush1.bf16.msra.mxu0 %v465
    %1112 = vmatprep.subr.bf16.mxu0 0
    %1113 = vmatpush1.bf16.msra.mxu0 %v466
    %1114 = vmatprep.subr.bf16.mxu0 0
    %1115 = vmatpush1.bf16.msra.mxu0 %v467
    %1116 = vmatprep.subr.bf16.mxu0 0
    %1117 = vmatpush1.bf16.msra.mxu0 %v468
    %1118 = vmatprep.subr.bf16.mxu0 0
    %1119 = vmatpush1.bf16.msra.mxu0 0
    %1120 = vmatprep.subr.bf16.mxu0 0
    %1121 = vmatpush1.bf16.msra.mxu0 0
    %1122 = vmatprep.subr.bf16.mxu0 0
    %1123 = vmatpush1.bf16.msra.mxu0 0
    %1124 = vmatprep.subr.bf16.mxu0 0
    %1125 = vmatpush1.bf16.msra.mxu0 0
    %1126 = vmatprep.subr.bf16.mxu0 0
    %1127 = vmatpush1.bf16.msra.mxu0 0
    %1128 = vmatprep.subr.bf16.mxu0 0
    %1129 = vmatpush1.bf16.msra.mxu0 0
    %1130 = vmatprep.subr.bf16.mxu0 0
    %1131 = vmatpush1.bf16.msra.mxu0 0
    %1132 = vmatprep.subr.bf16.mxu0 0
    %1133 = vmatpush1.bf16.msra.mxu0 0
    %1134 = vmatprep.mubr.bf16.mxu0 0
    %1135 = vmatmul.mubr.bf16.gmra.mrb[0].mxu0 %v1101
    %v1136 = vpop.f32.mrb[0].mxu0
    %v1137 = vadd.f32 0.0, %v1136
    %v1138 = vpop.f32.mrb[0].mxu0
    %v1139 = vpop.f32.mrb[0].mxu0
    %v1140 = vpop.f32.mrb[0].mxu0
    %1141 = vdwg.mxu0
    %v1142 = vadd.f32 %v1100, %v1137
    %s1143 = scalar_lea.vmem [#allocation7], 16
    %v1144 = vld [vmem:[%s1143] sm:$0xff]
    %v1145 = vpack.c.bf16 %v1094, %v1094
    %1146 = vmatprep.subr.bf16.mxu0 0
    %1147 = vmatpush1.bf16.msra.mxu0 %v552
    %1148 = vmatprep.subr.bf16.mxu0 0
    %1149 = vmatpush1.bf16.msra.mxu0 %v553
    %1150 = vmatprep.subr.bf16.mxu0 0
    %1151 = vmatpush1.bf16.msra.mxu0 %v554
    %1152 = vmatprep.subr.bf16.mxu0 0
    %1153 = vmatpush1.bf16.msra.mxu0 %v555
    %1154 = vmatprep.subr.bf16.mxu0 0
    %1155 = vmatpush1.bf16.msra.mxu0 %v556
    %1156 = vmatprep.subr.bf16.mxu0 0
    %1157 = vmatpush1.bf16.msra.mxu0 %v557
    %1158 = vmatprep.subr.bf16.mxu0 0
    %1159 = vmatpush1.bf16.msra.mxu0 %v558
    %1160 = vmatprep.subr.bf16.mxu0 0
    %1161 = vmatpush1.bf16.msra.mxu0 %v559
    %1162 = vmatprep.subr.bf16.mxu0 0
    %1163 = vmatpush1.bf16.msra.mxu0 0
    %1164 = vmatprep.subr.bf16.mxu0 0
    %1165 = vmatpush1.bf16.msra.mxu0 0
    %1166 = vmatprep.subr.bf16.mxu0 0
    %1167 = vmatpush1.bf16.msra.mxu0 0
    %1168 = vmatprep.subr.bf16.mxu0 0
    %1169 = vmatpush1.bf16.msra.mxu0 0
    %1170 = vmatprep.subr.bf16.mxu0 0
    %1171 = vmatpush1.bf16.msra.mxu0 0
    %1172 = vmatprep.subr.bf16.mxu0 0
    %1173 = vmatpush1.bf16.msra.mxu0 0
    %1174 = vmatprep.subr.bf16.mxu0 0
    %1175 = vmatpush1.bf16.msra.mxu0 0
    %1176 = vmatprep.subr.bf16.mxu0 0
    %1177 = vmatpush1.bf16.msra.mxu0 0
    %1178 = vmatprep.mubr.bf16.mxu0 0
    %1179 = vmatmul.mubr.bf16.gmra.mrb[0].mxu0 %v1145
    %v1180 = vpop.f32.mrb[0].mxu0
    %v1181 = vadd.f32 0.0, %v1180
    %v1182 = vpop.f32.mrb[0].mxu0
    %v1183 = vpop.f32.mrb[0].mxu0
    %v1184 = vpop.f32.mrb[0].mxu0
    %1185 = vdwg.mxu0
    %v1186 = vadd.f32 %v1144, %v1181
    %v1187 = vxor.u32 %v1142, 2147483648
    %v1188 = vmul.f32 %v1187, 1.442695
    %v1189 = vpow.pop %v1188
    %v1190 = vadd.f32 %v1189, 1.0
    %v1191 = vrcp.pop %v1190
    %v1192 = vmul.f32 1.0, %v1191
    %v1193 = vxor.u32 %v1186, 2147483648
    %v1194 = vmul.f32 %v1193, 1.442695
    %v1195 = vpow.pop %v1194
    %v1196 = vadd.f32 %v1195, 1.0
    %v1197 = vrcp.pop %v1196
    %v1198 = vmul.f32 1.0, %v1197
    %v1199 = vtanh.pop %v1142
    %1200 = vrot.lane.b32.xlu0 %v1199, 64
    %v1201 = vpop.permute.xlu0 %1200
    %v1202 = vtanh.pop %v1186
    %1203 = vrot.lane.b32.xlu0 %v1202, 64
    %v1204 = vpop.permute.xlu0 %1203
    %v1205 = vsub.f32 %v1091, %v1201
    %v1206 = vmul.f32 %v1192, %v1205
    %v1207 = vadd.f32 %v1201, %v1206
    %v1208 = vsub.f32 %v1094, %v1204
    %v1209 = vmul.f32 %v1198, %v1208
    %v1210 = vadd.f32 %v1204, %v1209
    %s1211 = scalar_lea.vmem [#allocation2], 40
    %1212 = vst [vmem:[%s1211] sm:$0xff] %v1207
    %s1213 = scalar_lea.vmem [#allocation4], 40
    %1214 = vst [vmem:[%s1213] sm:$0xff] %v1210
    %s1215 = scalar_lea.vmem [#allocation6], 48
    %v1216 = vld [vmem:[%s1215] sm:$0xff]
    %v1217 = vpack.c.bf16 %v1207, %v1207
    %1218 = vmatprep.subr.bf16.mxu0 0
    %1219 = vmatpush1.bf16.msra.mxu0 %v461
    %1220 = vmatprep.subr.bf16.mxu0 0
    %1221 = vmatpush1.bf16.msra.mxu0 %v462
    %1222 = vmatprep.subr.bf16.mxu0 0
    %1223 = vmatpush1.bf16.msra.mxu0 %v463
    %1224 = vmatprep.subr.bf16.mxu0 0
    %1225 = vmatpush1.bf16.msra.mxu0 %v464
    %1226 = vmatprep.subr.bf16.mxu0 0
    %1227 = vmatpush1.bf16.msra.mxu0 %v465
    %1228 = vmatprep.subr.bf16.mxu0 0
    %1229 = vmatpush1.bf16.msra.mxu0 %v466
    %1230 = vmatprep.subr.bf16.mxu0 0
    %1231 = vmatpush1.bf16.msra.mxu0 %v467
    %1232 = vmatprep.subr.bf16.mxu0 0
    %1233 = vmatpush1.bf16.msra.mxu0 %v468
    %1234 = vmatprep.subr.bf16.mxu0 0
    %1235 = vmatpush1.bf16.msra.mxu0 0
    %1236 = vmatprep.subr.bf16.mxu0 0
    %1237 = vmatpush1.bf16.msra.mxu0 0
    %1238 = vmatprep.subr.bf16.mxu0 0
    %1239 = vmatpush1.bf16.msra.mxu0 0
    %1240 = vmatprep.subr.bf16.mxu0 0
    %1241 = vmatpush1.bf16.msra.mxu0 0
    %1242 = vmatprep.subr.bf16.mxu0 0
    %1243 = vmatpush1.bf16.msra.mxu0 0
    %1244 = vmatprep.subr.bf16.mxu0 0
    %1245 = vmatpush1.bf16.msra.mxu0 0
    %1246 = vmatprep.subr.bf16.mxu0 0
    %1247 = vmatpush1.bf16.msra.mxu0 0
    %1248 = vmatprep.subr.bf16.mxu0 0
    %1249 = vmatpush1.bf16.msra.mxu0 0
    %1250 = vmatprep.mubr.bf16.mxu0 0
    %1251 = vmatmul.mubr.bf16.gmra.mrb[0].mxu0 %v1217
    %v1252 = vpop.f32.mrb[0].mxu0
    %v1253 = vadd.f32 0.0, %v1252
    %v1254 = vpop.f32.mrb[0].mxu0
    %v1255 = vpop.f32.mrb[0].mxu0
    %v1256 = vpop.f32.mrb[0].mxu0
    %1257 = vdwg.mxu0
    %v1258 = vadd.f32 %v1216, %v1253
    %s1259 = scalar_lea.vmem [#allocation7], 8
    %v1260 = vld [vmem:[%s1259] sm:$0xff]
    %v1261 = vpack.c.bf16 %v1210, %v1210
    %1262 = vmatprep.subr.bf16.mxu0 0
    %1263 = vmatpush1.bf16.msra.mxu0 %v552
    %1264 = vmatprep.subr.bf16.mxu0 0
    %1265 = vmatpush1.bf16.msra.mxu0 %v553
    %1266 = vmatprep.subr.bf16.mxu0 0
    %1267 = vmatpush1.bf16.msra.mxu0 %v554
    %1268 = vmatprep.subr.bf16.mxu0 0
    %1269 = vmatpush1.bf16.msra.mxu0 %v555
    %1270 = vmatprep.subr.bf16.mxu0 0
    %1271 = vmatpush1.bf16.msra.mxu0 %v556
    %1272 = vmatprep.subr.bf16.mxu0 0
    %1273 = vmatpush1.bf16.msra.mxu0 %v557
    %1274 = vmatprep.subr.bf16.mxu0 0
    %1275 = vmatpush1.bf16.msra.mxu0 %v558
    %1276 = vmatprep.subr.bf16.mxu0 0
    %1277 = vmatpush1.bf16.msra.mxu0 %v559
    %1278 = vmatprep.subr.bf16.mxu0 0
    %1279 = vmatpush1.bf16.msra.mxu0 0
    %1280 = vmatprep.subr.bf16.mxu0 0
    %1281 = vmatpush1.bf16.msra.mxu0 0
    %1282 = vmatprep.subr.bf16.mxu0 0
    %1283 = vmatpush1.bf16.msra.mxu0 0
    %1284 = vmatprep.subr.bf16.mxu0 0
    %1285 = vmatpush1.bf16.msra.mxu0 0
    %1286 = vmatprep.subr.bf16.mxu0 0
    %1287 = vmatpush1.bf16.msra.mxu0 0
    %1288 = vmatprep.subr.bf16.mxu0 0
    %1289 = vmatpush1.bf16.msra.mxu0 0
    %1290 = vmatprep.subr.bf16.mxu0 0
    %1291 = vmatpush1.bf16.msra.mxu0 0
    %1292 = vmatprep.subr.bf16.mxu0 0
    %1293 = vmatpush1.bf16.msra.mxu0 0
    %1294 = vmatprep.mubr.bf16.mxu0 0
    %1295 = vmatmul.mubr.bf16.gmra.mrb[0].mxu0 %v1261
    %v1296 = vpop.f32.mrb[0].mxu0
    %v1297 = vadd.f32 0.0, %v1296
    %v1298 = vpop.f32.mrb[0].mxu0
    %v1299 = vpop.f32.mrb[0].mxu0
    %v1300 = vpop.f32.mrb[0].mxu0
    %1301 = vdwg.mxu0
    %v1302 = vadd.f32 %v1260, %v1297
    %v1303 = vxor.u32 %v1258, 2147483648
    %v1304 = vmul.f32 %v1303, 1.442695
    %v1305 = vpow.pop %v1304
    %v1306 = vadd.f32 %v1305, 1.0
    %v1307 = vrcp.pop %v1306
    %v1308 = vmul.f32 1.0, %v1307
    %v1309 = vxor.u32 %v1302, 2147483648
    %v1310 = vmul.f32 %v1309, 1.442695
    %v1311 = vpow.pop %v1310
    %v1312 = vadd.f32 %v1311, 1.0
    %v1313 = vrcp.pop %v1312
    %v1314 = vmul.f32 1.0, %v1313
    %v1315 = vtanh.pop %v1258
    %1316 = vrot.lane.b32.xlu0 %v1315, 64
    %v1317 = vpop.permute.xlu0 %1316
    %v1318 = vtanh.pop %v1302
    %1319 = vrot.lane.b32.xlu0 %v1318, 64
    %v1320 = vpop.permute.xlu0 %1319
    %v1321 = vsub.f32 %v1207, %v1317
    %v1322 = vmul.f32 %v1308, %v1321
    %v1323 = vadd.f32 %v1317, %v1322
    %v1324 = vsub.f32 %v1210, %v1320
    %v1325 = vmul.f32 %v1314, %v1324
    %v1326 = vadd.f32 %v1320, %v1325
    %s1327 = scalar_lea.vmem [#allocation2], 48
    %1328 = vst [vmem:[%s1327] sm:$0xff] %v1323
    %s1329 = scalar_lea.vmem [#allocation4], 48
    %1330 = vst [vmem:[%s1329] sm:$0xff] %v1326
    %s1331 = scalar_lea.vmem [#allocation6], 56
    %v1332 = vld [vmem:[%s1331] sm:$0xff]
    %v1333 = vpack.c.bf16 %v1323, %v1323
    %1334 = vmatprep.subr.bf16.mxu0 0
    %1335 = vmatpush1.bf16.msra.mxu0 %v461
    %1336 = vmatprep.subr.bf16.mxu0 0
    %1337 = vmatpush1.bf16.msra.mxu0 %v462
    %1338 = vmatprep.subr.bf16.mxu0 0
    %1339 = vmatpush1.bf16.msra.mxu0 %v463
    %1340 = vmatprep.subr.bf16.mxu0 0
    %1341 = vmatpush1.bf16.msra.mxu0 %v464
    %1342 = vmatprep.subr.bf16.mxu0 0
    %1343 = vmatpush1.bf16.msra.mxu0 %v465
    %1344 = vmatprep.subr.bf16.mxu0 0
    %1345 = vmatpush1.bf16.msra.mxu0 %v466
    %1346 = vmatprep.subr.bf16.mxu0 0
    %1347 = vmatpush1.bf16.msra.mxu0 %v467
    %1348 = vmatprep.subr.bf16.mxu0 0
    %1349 = vmatpush1.bf16.msra.mxu0 %v468
    %1350 = vmatprep.subr.bf16.mxu0 0
    %1351 = vmatpush1.bf16.msra.mxu0 0
    %1352 = vmatprep.subr.bf16.mxu0 0
    %1353 = vmatpush1.bf16.msra.mxu0 0
    %1354 = vmatprep.subr.bf16.mxu0 0
    %1355 = vmatpush1.bf16.msra.mxu0 0
    %1356 = vmatprep.subr.bf16.mxu0 0
    %1357 = vmatpush1.bf16.msra.mxu0 0
    %1358 = vmatprep.subr.bf16.mxu0 0
    %1359 = vmatpush1.bf16.msra.mxu0 0
    %1360 = vmatprep.subr.bf16.mxu0 0
    %1361 = vmatpush1.bf16.msra.mxu0 0
    %1362 = vmatprep.subr.bf16.mxu0 0
    %1363 = vmatpush1.bf16.msra.mxu0 0
    %1364 = vmatprep.subr.bf16.mxu0 0
    %1365 = vmatpush1.bf16.msra.mxu0 0
    %1366 = vmatprep.mubr.bf16.mxu0 0
    %1367 = vmatmul.mubr.bf16.gmra.mrb[0].mxu0 %v1333
    %v1368 = vpop.f32.mrb[0].mxu0
    %v1369 = vadd.f32 0.0, %v1368
    %v1370 = vpop.f32.mrb[0].mxu0
    %v1371 = vpop.f32.mrb[0].mxu0
    %v1372 = vpop.f32.mrb[0].mxu0
    %1373 = vdwg.mxu0
    %v1374 = vadd.f32 %v1332, %v1369
    %v1375 = vld [vmem:[#allocation7] sm:$0xff]
    %v1376 = vpack.c.bf16 %v1326, %v1326
    %1377 = vmatprep.subr.bf16.mxu0 0
    %1378 = vmatpush1.bf16.msra.mxu0 %v552
    %1379 = vmatprep.subr.bf16.mxu0 0
    %1380 = vmatpush1.bf16.msra.mxu0 %v553
    %1381 = vmatprep.subr.bf16.mxu0 0
    %1382 = vmatpush1.bf16.msra.mxu0 %v554
    %1383 = vmatprep.subr.bf16.mxu0 0
    %1384 = vmatpush1.bf16.msra.mxu0 %v555
    %1385 = vmatprep.subr.bf16.mxu0 0
    %1386 = vmatpush1.bf16.msra.mxu0 %v556
    %1387 = vmatprep.subr.bf16.mxu0 0
    %1388 = vmatpush1.bf16.msra.mxu0 %v557
    %1389 = vmatprep.subr.bf16.mxu0 0
    %1390 = vmatpush1.bf16.msra.mxu0 %v558
    %1391 = vmatprep.subr.bf16.mxu0 0
    %1392 = vmatpush1.bf16.msra.mxu0 %v559
    %1393 = vmatprep.subr.bf16.mxu0 0
    %1394 = vmatpush1.bf16.msra.mxu0 0
    %1395 = vmatprep.subr.bf16.mxu0 0
    %1396 = vmatpush1.bf16.msra.mxu0 0
    %1397 = vmatprep.subr.bf16.mxu0 0
    %1398 = vmatpush1.bf16.msra.mxu0 0
    %1399 = vmatprep.subr.bf16.mxu0 0
    %1400 = vmatpush1.bf16.msra.mxu0 0
    %1401 = vmatprep.subr.bf16.mxu0 0
    %1402 = vmatpush1.bf16.msra.mxu0 0
    %1403 = vmatprep.subr.bf16.mxu0 0
    %1404 = vmatpush1.bf16.msra.mxu0 0
    %1405 = vmatprep.subr.bf16.mxu0 0
    %1406 = vmatpush1.bf16.msra.mxu0 0
    %1407 = vmatprep.subr.bf16.mxu0 0
    %1408 = vmatpush1.bf16.msra.mxu0 0
    %1409 = vmatprep.mubr.bf16.mxu0 0
    %1410 = vmatmul.mubr.bf16.gmra.mrb[0].mxu0 %v1376
    %v1411 = vpop.f32.mrb[0].mxu0
    %v1412 = vadd.f32 0.0, %v1411
    %v1413 = vpop.f32.mrb[0].mxu0
    %v1414 = vpop.f32.mrb[0].mxu0
    %v1415 = vpop.f32.mrb[0].mxu0
    %1416 = vdwg.mxu0
    %v1417 = vadd.f32 %v1375, %v1412
    %v1418 = vxor.u32 %v1374, 2147483648
    %v1419 = vmul.f32 %v1418, 1.442695
    %v1420 = vpow.pop %v1419
    %v1421 = vadd.f32 %v1420, 1.0
    %v1422 = vrcp.pop %v1421
    %v1423 = vmul.f32 1.0, %v1422
    %v1424 = vxor.u32 %v1417, 2147483648
    %v1425 = vmul.f32 %v1424, 1.442695
    %v1426 = vpow.pop %v1425
    %v1427 = vadd.f32 %v1426, 1.0
    %v1428 = vrcp.pop %v1427
    %v1429 = vmul.f32 1.0, %v1428
    %v1430 = vtanh.pop %v1374
    %1431 = vrot.lane.b32.xlu0 %v1430, 64
    %v1432 = vpop.permute.xlu0 %1431
    %v1433 = vtanh.pop %v1417
    %1434 = vrot.lane.b32.xlu0 %v1433, 64
    %v1435 = vpop.permute.xlu0 %1434
    %v1436 = vsub.f32 %v1323, %v1432
    %v1437 = vmul.f32 %v1423, %v1436
    %v1438 = vadd.f32 %v1432, %v1437
    %v1439 = vsub.f32 %v1326, %v1435
    %v1440 = vmul.f32 %v1429, %v1439
    %v1441 = vadd.f32 %v1435, %v1440
    %s1442 = scalar_lea.vmem [#allocation2], 56
    %1443 = vst [vmem:[%s1442] sm:$0xff] %v1438
    %s1444 = scalar_lea.vmem [#allocation4], 56
    %1445 = vst [vmem:[%s1444] sm:$0xff] %v1441
    %v1446 = vld [vmem:[#allocation2] sm:$0xff]
    %v1447 = vld [vmem:[#allocation2 + $0x8] sm:$0xff]
    %v1448 = vld [vmem:[#allocation2 + $0x10] sm:$0xff]
    %v1449 = vld [vmem:[#allocation2 + $0x18] sm:$0xff]
    %v1450 = vld [vmem:[#allocation2 + $0x20] sm:$0xff]
    %v1451 = vld [vmem:[#allocation2 + $0x28] sm:$0xff]
    %v1452 = vld [vmem:[#allocation2 + $0x30] sm:$0xff]
    %v1453 = vld [vmem:[#allocation2 + $0x38] sm:$0xff]
    %v1454 = vpack.c.bf16 %v1447, %v1446
    %v1455 = vpack.c.bf16 %v1449, %v1448
    %v1456 = vpack.c.bf16 %v1451, %v1450
    %v1457 = vpack.c.bf16 %v1453, %v1452
    %s1458 = scalar_lea.vmem [#allocation8], 64
    %v1459 = vld [vmem:[%s1458] sm:$0xf]
    %v1460 = vld [vmem:[%s1458 + $0x4] sm:$0xf]
    %v1461 = vld [vmem:[%s1458 + $0x8] sm:$0xf]
    %v1462 = vld [vmem:[%s1458 + $0xc] sm:$0xf]
    %v1463 = vld [vmem:[%s1458 + $0x10] sm:$0xf]
    %v1464 = vld [vmem:[%s1458 + $0x14] sm:$0xf]
    %v1465 = vld [vmem:[%s1458 + $0x18] sm:$0xf]
    %v1466 = vld [vmem:[%s1458 + $0x1c] sm:$0xf]
    %v1467 = vld [vmem:[%s1458 + $0x20] sm:$0xf]
    %v1468 = vld [vmem:[%s1458 + $0x24] sm:$0xf]
    %v1469 = vld [vmem:[%s1458 + $0x28] sm:$0xf]
    %v1470 = vld [vmem:[%s1458 + $0x2c] sm:$0xf]
    %v1471 = vld [vmem:[%s1458 + $0x30] sm:$0xf]
    %v1472 = vld [vmem:[%s1458 + $0x34] sm:$0xf]
    %v1473 = vld [vmem:[%s1458 + $0x38] sm:$0xf]
    %v1474 = vld [vmem:[%s1458 + $0x3c] sm:$0xf]
    %v1491 = vunpack.c.l.b16 %v1459
    %v1492 = vunpack.c.l.b16 %v1460
    %v1493 = vunpack.c.l.b16 %v1461
    %v1494 = vunpack.c.l.b16 %v1462
    %v1495 = vunpack.c.l.b16 %v1463
    %v1496 = vunpack.c.l.b16 %v1464
    %v1497 = vunpack.c.l.b16 %v1465
    %v1498 = vunpack.c.l.b16 %v1466
    %v1499 = vunpack.c.l.b16 %v1467
    %v1500 = vunpack.c.l.b16 %v1468
    %v1501 = vunpack.c.l.b16 %v1469
    %v1502 = vunpack.c.l.b16 %v1470
    %v1503 = vunpack.c.l.b16 %v1471
    %v1504 = vunpack.c.l.b16 %v1472
    %v1505 = vunpack.c.l.b16 %v1473
    %v1506 = vunpack.c.l.b16 %v1474
    %v1507 = vpack.c.b16 %v1492, %v1491
    %v1508 = vpack.c.b16 %v1494, %v1493
    %v1509 = vpack.c.b16 %v1496, %v1495
    %v1510 = vpack.c.b16 %v1498, %v1497
    %v1511 = vpack.c.b16 %v1500, %v1499
    %v1512 = vpack.c.b16 %v1502, %v1501
    %v1513 = vpack.c.b16 %v1504, %v1503
    %v1514 = vpack.c.b16 %v1506, %v1505
    %1523 = vmatprep.subr.bf16.mxu0 0
    %1524 = vmatpush1.bf16.msra.mxu0 %v1507
    %1525 = vmatprep.subr.bf16.mxu0 0
    %1526 = vmatpush1.bf16.msra.mxu0 %v1508
    %1527 = vmatprep.subr.bf16.mxu0 0
    %1528 = vmatpush1.bf16.msra.mxu0 %v1509
    %1529 = vmatprep.subr.bf16.mxu0 0
    %1530 = vmatpush1.bf16.msra.mxu0 %v1510
    %1531 = vmatprep.subr.bf16.mxu0 0
    %1532 = vmatpush1.bf16.msra.mxu0 %v1511
    %1533 = vmatprep.subr.bf16.mxu0 0
    %1534 = vmatpush1.bf16.msra.mxu0 %v1512
    %1535 = vmatprep.subr.bf16.mxu0 0
    %1536 = vmatpush1.bf16.msra.mxu0 %v1513
    %1537 = vmatprep.subr.bf16.mxu0 0
    %1538 = vmatpush1.bf16.msra.mxu0 %v1514
    %1539 = vmatprep.subr.bf16.mxu0 0
    %1540 = vmatpush1.bf16.msra.mxu0 0
    %1541 = vmatprep.subr.bf16.mxu0 0
    %1542 = vmatpush1.bf16.msra.mxu0 0
    %1543 = vmatprep.subr.bf16.mxu0 0
    %1544 = vmatpush1.bf16.msra.mxu0 0
    %1545 = vmatprep.subr.bf16.mxu0 0
    %1546 = vmatpush1.bf16.msra.mxu0 0
    %1547 = vmatprep.subr.bf16.mxu0 0
    %1548 = vmatpush1.bf16.msra.mxu0 0
    %1549 = vmatprep.subr.bf16.mxu0 0
    %1550 = vmatpush1.bf16.msra.mxu0 0
    %1551 = vmatprep.subr.bf16.mxu0 0
    %1552 = vmatpush1.bf16.msra.mxu0 0
    %1553 = vmatprep.subr.bf16.mxu0 0
    %1554 = vmatpush1.bf16.msra.mxu0 0
    %1555 = vmatprep.mubr.bf16.mxu0 0
    %1556 = vmatmul.mubr.bf16.gmra.mrb[0].mxu0 %v1454
    %v1557 = vpop.f32.mrb[0].mxu0
    %v1558 = vadd.f32 0.0, %v1557
    %v1559 = vpop.f32.mrb[0].mxu0
    %v1560 = vpop.f32.mrb[0].mxu0
    %v1561 = vadd.f32 0.0, %v1560
    %v1562 = vpop.f32.mrb[0].mxu0
    %1563 = vmatprep.mubr.bf16.mxu0 0
    %1564 = vmatmul.mubr.bf16.gmra.mrb[0].mxu0 %v1455
    %v1565 = vpop.f32.mrb[0].mxu0
    %v1566 = vadd.f32 0.0, %v1565
    %v1567 = vpop.f32.mrb[0].mxu0
    %v1568 = vpop.f32.mrb[0].mxu0
    %v1569 = vadd.f32 0.0, %v1568
    %v1570 = vpop.f32.mrb[0].mxu0
    %1571 = vmatprep.mubr.bf16.mxu0 0
    %1572 = vmatmul.mubr.bf16.gmra.mrb[0].mxu0 %v1456
    %v1573 = vpop.f32.mrb[0].mxu0
    %v1574 = vadd.f32 0.0, %v1573
    %v1575 = vpop.f32.mrb[0].mxu0
    %v1576 = vpop.f32.mrb[0].mxu0
    %v1577 = vadd.f32 0.0, %v1576
    %v1578 = vpop.f32.mrb[0].mxu0
    %1579 = vmatprep.mubr.bf16.mxu0 0
    %1580 = vmatmul.mubr.bf16.gmra.mrb[0].mxu0 %v1457
    %v1581 = vpop.f32.mrb[0].mxu0
    %v1582 = vadd.f32 0.0, %v1581
    %v1583 = vpop.f32.mrb[0].mxu0
    %v1584 = vpop.f32.mrb[0].mxu0
    %v1585 = vadd.f32 0.0, %v1584
    %v1586 = vpop.f32.mrb[0].mxu0
    %1587 = vdwg.mxu0
    %s1588 = scalar_lea.vmem %s3, 1
    %v1589 = vld [vmem:[%s1588] sm:$0x1]
    %v1591 = vlaneseq
    %v1592 = vshrl.u32 %v1591, 7
    %v1593 = vsub.s32 0, %v1592
    %v1594 = vrot.slane %v1589, %v1593
    %v1596 = vadd.f32 %v1558, %v1594
    %v1597 = vadd.f32 %v1561, %v1594
    %v1598 = vadd.f32 %v1566, %v1594
    %v1599 = vadd.f32 %v1569, %v1594
    %v1600 = vadd.f32 %v1574, %v1594
    %v1601 = vadd.f32 %v1577, %v1594
    %v1602 = vadd.f32 %v1582, %v1594
    %v1603 = vadd.f32 %v1585, %v1594
    %1604 = vst [vmem:[#allocation6] sm:$0xff] %v1596
    %1605 = vst [vmem:[#allocation6 + $0x8] sm:$0xff] %v1597
    %1606 = vst [vmem:[#allocation6 + $0x10] sm:$0xff] %v1598
    %1607 = vst [vmem:[#allocation6 + $0x18] sm:$0xff] %v1599
    %1608 = vst [vmem:[#allocation6 + $0x20] sm:$0xff] %v1600
    %1609 = vst [vmem:[#allocation6 + $0x28] sm:$0xff] %v1601
    %1610 = vst [vmem:[#allocation6 + $0x30] sm:$0xff] %v1602
    %1611 = vst [vmem:[#allocation6 + $0x38] sm:$0xff] %v1603
    %v1612 = vld [vmem:[#allocation4] sm:$0xff]
    %v1613 = vld [vmem:[#allocation4 + $0x8] sm:$0xff]
    %v1614 = vld [vmem:[#allocation4 + $0x10] sm:$0xff]
    %v1615 = vld [vmem:[#allocation4 + $0x18] sm:$0xff]
    %v1616 = vld [vmem:[#allocation4 + $0x20] sm:$0xff]
    %v1617 = vld [vmem:[#allocation4 + $0x28] sm:$0xff]
    %v1618 = vld [vmem:[#allocation4 + $0x30] sm:$0xff]
    %v1619 = vld [vmem:[#allocation4 + $0x38] sm:$0xff]
    %v1620 = vpack.c.bf16 %v1613, %v1612
    %v1621 = vpack.c.bf16 %v1615, %v1614
    %v1622 = vpack.c.bf16 %v1617, %v1616
    %v1623 = vpack.c.bf16 %v1619, %v1618
    %s1624 = scalar_lea.vmem [#allocation8], 192
    %v1625 = vld [vmem:[%s1624] sm:$0xf]
    %v1626 = vld [vmem:[%s1624 + $0x4] sm:$0xf]
    %v1627 = vld [vmem:[%s1624 + $0x8] sm:$0xf]
    %v1628 = vld [vmem:[%s1624 + $0xc] sm:$0xf]
    %v1629 = vld [vmem:[%s1624 + $0x10] sm:$0xf]
    %v1630 = vld [vmem:[%s1624 + $0x14] sm:$0xf]
    %v1631 = vld [vmem:[%s1624 + $0x18] sm:$0xf]
    %v1632 = vld [vmem:[%s1624 + $0x1c] sm:$0xf]
    %v1633 = vld [vmem:[%s1624 + $0x20] sm:$0xf]
    %v1634 = vld [vmem:[%s1624 + $0x24] sm:$0xf]
    %v1635 = vld [vmem:[%s1624 + $0x28] sm:$0xf]
    %v1636 = vld [vmem:[%s1624 + $0x2c] sm:$0xf]
    %v1637 = vld [vmem:[%s1624 + $0x30] sm:$0xf]
    %v1638 = vld [vmem:[%s1624 + $0x34] sm:$0xf]
    %v1639 = vld [vmem:[%s1624 + $0x38] sm:$0xf]
    %v1640 = vld [vmem:[%s1624 + $0x3c] sm:$0xf]
    %v1657 = vunpack.c.l.b16 %v1625
    %v1658 = vunpack.c.l.b16 %v1626
    %v1659 = vunpack.c.l.b16 %v1627
    %v1660 = vunpack.c.l.b16 %v1628
    %v1661 = vunpack.c.l.b16 %v1629
    %v1662 = vunpack.c.l.b16 %v1630
    %v1663 = vunpack.c.l.b16 %v1631
    %v1664 = vunpack.c.l.b16 %v1632
    %v1665 = vunpack.c.l.b16 %v1633
    %v1666 = vunpack.c.l.b16 %v1634
    %v1667 = vunpack.c.l.b16 %v1635
    %v1668 = vunpack.c.l.b16 %v1636
    %v1669 = vunpack.c.l.b16 %v1637
    %v1670 = vunpack.c.l.b16 %v1638
    %v1671 = vunpack.c.l.b16 %v1639
    %v1672 = vunpack.c.l.b16 %v1640
    %v1673 = vpack.c.b16 %v1658, %v1657
    %v1674 = vpack.c.b16 %v1660, %v1659
    %v1675 = vpack.c.b16 %v1662, %v1661
    %v1676 = vpack.c.b16 %v1664, %v1663
    %v1677 = vpack.c.b16 %v1666, %v1665
    %v1678 = vpack.c.b16 %v1668, %v1667
    %v1679 = vpack.c.b16 %v1670, %v1669
    %v1680 = vpack.c.b16 %v1672, %v1671
    %1689 = vmatprep.subr.bf16.mxu0 0
    %1690 = vmatpush1.bf16.msra.mxu0 %v1673
    %1691 = vmatprep.subr.bf16.mxu0 0
    %1692 = vmatpush1.bf16.msra.mxu0 %v1674
    %1693 = vmatprep.subr.bf16.mxu0 0
    %1694 = vmatpush1.bf16.msra.mxu0 %v1675
    %1695 = vmatprep.subr.bf16.mxu0 0
    %1696 = vmatpush1.bf16.msra.mxu0 %v1676
    %1697 = vmatprep.subr.bf16.mxu0 0
    %1698 = vmatpush1.bf16.msra.mxu0 %v1677
    %1699 = vmatprep.subr.bf16.mxu0 0
    %1700 = vmatpush1.bf16.msra.mxu0 %v1678
    %1701 = vmatprep.subr.bf16.mxu0 0
    %1702 = vmatpush1.bf16.msra.mxu0 %v1679
    %1703 = vmatprep.subr.bf16.mxu0 0
    %1704 = vmatpush1.bf16.msra.mxu0 %v1680
    %1705 = vmatprep.subr.bf16.mxu0 0
    %1706 = vmatpush1.bf16.msra.mxu0 0
    %1707 = vmatprep.subr.bf16.mxu0 0
    %1708 = vmatpush1.bf16.msra.mxu0 0
    %1709 = vmatprep.subr.bf16.mxu0 0
    %1710 = vmatpush1.bf16.msra.mxu0 0
    %1711 = vmatprep.subr.bf16.mxu0 0
    %1712 = vmatpush1.bf16.msra.mxu0 0
    %1713 = vmatprep.subr.bf16.mxu0 0
    %1714 = vmatpush1.bf16.msra.mxu0 0
    %1715 = vmatprep.subr.bf16.mxu0 0
    %1716 = vmatpush1.bf16.msra.mxu0 0
    %1717 = vmatprep.subr.bf16.mxu0 0
    %1718 = vmatpush1.bf16.msra.mxu0 0
    %1719 = vmatprep.subr.bf16.mxu0 0
    %1720 = vmatpush1.bf16.msra.mxu0 0
    %1721 = vmatprep.mubr.bf16.mxu0 0
    %1722 = vmatmul.mubr.bf16.gmra.mrb[0].mxu0 %v1620
    %v1723 = vpop.f32.mrb[0].mxu0
    %v1724 = vadd.f32 0.0, %v1723
    %v1725 = vpop.f32.mrb[0].mxu0
    %v1726 = vpop.f32.mrb[0].mxu0
    %v1727 = vadd.f32 0.0, %v1726
    %v1728 = vpop.f32.mrb[0].mxu0
    %1729 = vmatprep.mubr.bf16.mxu0 0
    %1730 = vmatmul.mubr.bf16.gmra.mrb[0].mxu0 %v1621
    %v1731 = vpop.f32.mrb[0].mxu0
    %v1732 = vadd.f32 0.0, %v1731
    %v1733 = vpop.f32.mrb[0].mxu0
    %v1734 = vpop.f32.mrb[0].mxu0
    %v1735 = vadd.f32 0.0, %v1734
    %v1736 = vpop.f32.mrb[0].mxu0
    %1737 = vmatprep.mubr.bf16.mxu0 0
    %1738 = vmatmul.mubr.bf16.gmra.mrb[0].mxu0 %v1622
    %v1739 = vpop.f32.mrb[0].mxu0
    %v1740 = vadd.f32 0.0, %v1739
    %v1741 = vpop.f32.mrb[0].mxu0
    %v1742 = vpop.f32.mrb[0].mxu0
    %v1743 = vadd.f32 0.0, %v1742
    %v1744 = vpop.f32.mrb[0].mxu0
    %1745 = vmatprep.mubr.bf16.mxu0 0
    %1746 = vmatmul.mubr.bf16.gmra.mrb[0].mxu0 %v1623
    %v1747 = vpop.f32.mrb[0].mxu0
    %v1748 = vadd.f32 0.0, %v1747
    %v1749 = vpop.f32.mrb[0].mxu0
    %v1750 = vpop.f32.mrb[0].mxu0
    %v1751 = vadd.f32 0.0, %v1750
    %v1752 = vpop.f32.mrb[0].mxu0
    %1753 = vdwg.mxu0
    %s1754 = scalar_lea.vmem %s3, 3
    %v1755 = vld [vmem:[%s1754] sm:$0x1]
    %v1757 = vlaneseq
    %v1758 = vshrl.u32 %v1757, 7
    %v1759 = vsub.s32 0, %v1758
    %v1760 = vrot.slane %v1755, %v1759
    %v1762 = vadd.f32 %v1724, %v1760
    %v1763 = vadd.f32 %v1727, %v1760
    %v1764 = vadd.f32 %v1732, %v1760
    %v1765 = vadd.f32 %v1735, %v1760
    %v1766 = vadd.f32 %v1740, %v1760
    %v1767 = vadd.f32 %v1743, %v1760
    %v1768 = vadd.f32 %v1748, %v1760
    %v1769 = vadd.f32 %v1751, %v1760
    %1770 = vst [vmem:[#allocation7] sm:$0xff] %v1762
    %1771 = vst [vmem:[#allocation7 + $0x8] sm:$0xff] %v1763
    %1772 = vst [vmem:[#allocation7 + $0x10] sm:$0xff] %v1764
    %1773 = vst [vmem:[#allocation7 + $0x18] sm:$0xff] %v1765
    %1774 = vst [vmem:[#allocation7 + $0x20] sm:$0xff] %v1766
    %1775 = vst [vmem:[#allocation7 + $0x28] sm:$0xff] %v1767
    %1776 = vst [vmem:[#allocation7 + $0x30] sm:$0xff] %v1768
    %1777 = vst [vmem:[#allocation7 + $0x38] sm:$0xff] %v1769
    %s1778 = scalar_lea.vmem [#allocation10], 64
    %v1779 = vld [vmem:[%s1778] sm:$0xf]
    %v1780 = vld [vmem:[%s1778 + $0x4] sm:$0xf]
    %v1781 = vld [vmem:[%s1778 + $0x8] sm:$0xf]
    %v1782 = vld [vmem:[%s1778 + $0xc] sm:$0xf]
    %v1783 = vld [vmem:[%s1778 + $0x10] sm:$0xf]
    %v1784 = vld [vmem:[%s1778 + $0x14] sm:$0xf]
    %v1785 = vld [vmem:[%s1778 + $0x18] sm:$0xf]
    %v1786 = vld [vmem:[%s1778 + $0x1c] sm:$0xf]
    %v1787 = vld [vmem:[%s1778 + $0x20] sm:$0xf]
    %v1788 = vld [vmem:[%s1778 + $0x24] sm:$0xf]
    %v1789 = vld [vmem:[%s1778 + $0x28] sm:$0xf]
    %v1790 = vld [vmem:[%s1778 + $0x2c] sm:$0xf]
    %v1791 = vld [vmem:[%s1778 + $0x30] sm:$0xf]
    %v1792 = vld [vmem:[%s1778 + $0x34] sm:$0xf]
    %v1793 = vld [vmem:[%s1778 + $0x38] sm:$0xf]
    %v1794 = vld [vmem:[%s1778 + $0x3c] sm:$0xf]
    %s1795 = scalar_lea.vmem [#allocation10], 192
    %v1796 = vld [vmem:[%s1795] sm:$0xf]
    %v1797 = vld [vmem:[%s1795 + $0x4] sm:$0xf]
    %v1798 = vld [vmem:[%s1795 + $0x8] sm:$0xf]
    %v1799 = vld [vmem:[%s1795 + $0xc] sm:$0xf]
    %v1800 = vld [vmem:[%s1795 + $0x10] sm:$0xf]
    %v1801 = vld [vmem:[%s1795 + $0x14] sm:$0xf]
    %v1802 = vld [vmem:[%s1795 + $0x18] sm:$0xf]
    %v1803 = vld [vmem:[%s1795 + $0x1c] sm:$0xf]
    %v1804 = vld [vmem:[%s1795 + $0x20] sm:$0xf]
    %v1805 = vld [vmem:[%s1795 + $0x24] sm:$0xf]
    %v1806 = vld [vmem:[%s1795 + $0x28] sm:$0xf]
    %v1807 = vld [vmem:[%s1795 + $0x2c] sm:$0xf]
    %v1808 = vld [vmem:[%s1795 + $0x30] sm:$0xf]
    %v1809 = vld [vmem:[%s1795 + $0x34] sm:$0xf]
    %v1810 = vld [vmem:[%s1795 + $0x38] sm:$0xf]
    %v1811 = vld [vmem:[%s1795 + $0x3c] sm:$0xf]
    %v1812 = vld [vmem:[#allocation6] sm:$0xff]
    %v1829 = vunpack.c.l.b16 %v1779
    %v1830 = vunpack.c.l.b16 %v1780
    %v1831 = vunpack.c.l.b16 %v1781
    %v1832 = vunpack.c.l.b16 %v1782
    %v1833 = vunpack.c.l.b16 %v1783
    %v1834 = vunpack.c.l.b16 %v1784
    %v1835 = vunpack.c.l.b16 %v1785
    %v1836 = vunpack.c.l.b16 %v1786
    %v1837 = vunpack.c.l.b16 %v1787
    %v1838 = vunpack.c.l.b16 %v1788
    %v1839 = vunpack.c.l.b16 %v1789
    %v1840 = vunpack.c.l.b16 %v1790
    %v1841 = vunpack.c.l.b16 %v1791
    %v1842 = vunpack.c.l.b16 %v1792
    %v1843 = vunpack.c.l.b16 %v1793
    %v1844 = vunpack.c.l.b16 %v1794
    %v1845 = vpack.c.b16 %v1830, %v1829
    %v1846 = vpack.c.b16 %v1832, %v1831
    %v1847 = vpack.c.b16 %v1834, %v1833
    %v1848 = vpack.c.b16 %v1836, %v1835
    %v1849 = vpack.c.b16 %v1838, %v1837
    %v1850 = vpack.c.b16 %v1840, %v1839
    %v1851 = vpack.c.b16 %v1842, %v1841
    %v1852 = vpack.c.b16 %v1844, %v1843
    %1861 = vmatprep.subr.bf16.mxu0 0
    %1862 = vmatpush1.bf16.msra.mxu0 %v1845
    %1863 = vmatprep.subr.bf16.mxu0 0
    %1864 = vmatpush1.bf16.msra.mxu0 %v1846
    %1865 = vmatprep.subr.bf16.mxu0 0
    %1866 = vmatpush1.bf16.msra.mxu0 %v1847
    %1867 = vmatprep.subr.bf16.mxu0 0
    %1868 = vmatpush1.bf16.msra.mxu0 %v1848
    %1869 = vmatprep.subr.bf16.mxu0 0
    %1870 = vmatpush1.bf16.msra.mxu0 %v1849
    %1871 = vmatprep.subr.bf16.mxu0 0
    %1872 = vmatpush1.bf16.msra.mxu0 %v1850
    %1873 = vmatprep.subr.bf16.mxu0 0
    %1874 = vmatpush1.bf16.msra.mxu0 %v1851
    %1875 = vmatprep.subr.bf16.mxu0 0
    %1876 = vmatpush1.bf16.msra.mxu0 %v1852
    %1877 = vmatprep.subr.bf16.mxu0 0
    %1878 = vmatpush1.bf16.msra.mxu0 0
    %1879 = vmatprep.subr.bf16.mxu0 0
    %1880 = vmatpush1.bf16.msra.mxu0 0
    %1881 = vmatprep.subr.bf16.mxu0 0
    %1882 = vmatpush1.bf16.msra.mxu0 0
    %1883 = vmatprep.subr.bf16.mxu0 0
    %1884 = vmatpush1.bf16.msra.mxu0 0
    %1885 = vmatprep.subr.bf16.mxu0 0
    %1886 = vmatpush1.bf16.msra.mxu0 0
    %1887 = vmatprep.subr.bf16.mxu0 0
    %1888 = vmatpush1.bf16.msra.mxu0 0
    %1889 = vmatprep.subr.bf16.mxu0 0
    %1890 = vmatpush1.bf16.msra.mxu0 0
    %1891 = vmatprep.subr.bf16.mxu0 0
    %1892 = vmatpush1.bf16.msra.mxu0 0
    %1893 = vmatprep.mubr.bf16.mxu0 0
    %1894 = vmatmul.mubr.bf16.gmra.mrb[0].mxu0 0
    %v1895 = vpop.f32.mrb[0].mxu0
    %v1896 = vadd.f32 0.0, %v1895
    %v1897 = vpop.f32.mrb[0].mxu0
    %v1898 = vpop.f32.mrb[0].mxu0
    %v1899 = vpop.f32.mrb[0].mxu0
    %1900 = vdwg.mxu0
    %v1901 = vadd.f32 %v1812, %v1896
    %v1902 = vld [vmem:[%s518] sm:$0xff]
    %v1919 = vunpack.c.l.b16 %v1796
    %v1920 = vunpack.c.l.b16 %v1797
    %v1921 = vunpack.c.l.b16 %v1798
    %v1922 = vunpack.c.l.b16 %v1799
    %v1923 = vunpack.c.l.b16 %v1800
    %v1924 = vunpack.c.l.b16 %v1801
    %v1925 = vunpack.c.l.b16 %v1802
    %v1926 = vunpack.c.l.b16 %v1803
    %v1927 = vunpack.c.l.b16 %v1804
    %v1928 = vunpack.c.l.b16 %v1805
    %v1929 = vunpack.c.l.b16 %v1806
    %v1930 = vunpack.c.l.b16 %v1807
    %v1931 = vunpack.c.l.b16 %v1808
    %v1932 = vunpack.c.l.b16 %v1809
    %v1933 = vunpack.c.l.b16 %v1810
    %v1934 = vunpack.c.l.b16 %v1811
    %v1935 = vpack.c.b16 %v1920, %v1919
    %v1936 = vpack.c.b16 %v1922, %v1921
    %v1937 = vpack.c.b16 %v1924, %v1923
    %v1938 = vpack.c.b16 %v1926, %v1925
    %v1939 = vpack.c.b16 %v1928, %v1927
    %v1940 = vpack.c.b16 %v1930, %v1929
    %v1941 = vpack.c.b16 %v1932, %v1931
    %v1942 = vpack.c.b16 %v1934, %v1933
    %1951 = vmatprep.subr.bf16.mxu0 0
    %1952 = vmatpush1.bf16.msra.mxu0 %v1935
    %1953 = vmatprep.subr.bf16.mxu0 0
    %1954 = vmatpush1.bf16.msra.mxu0 %v1936
    %1955 = vmatprep.subr.bf16.mxu0 0
    %1956 = vmatpush1.bf16.msra.mxu0 %v1937
    %1957 = vmatprep.subr.bf16.mxu0 0
    %1958 = vmatpush1.bf16.msra.mxu0 %v1938
    %1959 = vmatprep.subr.bf16.mxu0 0
    %1960 = vmatpush1.bf16.msra.mxu0 %v1939
    %1961 = vmatprep.subr.bf16.mxu0 0
    %1962 = vmatpush1.bf16.msra.mxu0 %v1940
    %1963 = vmatprep.subr.bf16.mxu0 0
    %1964 = vmatpush1.bf16.msra.mxu0 %v1941
    %1965 = vmatprep.subr.bf16.mxu0 0
    %1966 = vmatpush1.bf16.msra.mxu0 %v1942
    %1967 = vmatprep.subr.bf16.mxu0 0
    %1968 = vmatpush1.bf16.msra.mxu0 0
    %1969 = vmatprep.subr.bf16.mxu0 0
    %1970 = vmatpush1.bf16.msra.mxu0 0
    %1971 = vmatprep.subr.bf16.mxu0 0
    %1972 = vmatpush1.bf16.msra.mxu0 0
    %1973 = vmatprep.subr.bf16.mxu0 0
    %1974 = vmatpush1.bf16.msra.mxu0 0
    %1975 = vmatprep.subr.bf16.mxu0 0
    %1976 = vmatpush1.bf16.msra.mxu0 0
    %1977 = vmatprep.subr.bf16.mxu0 0
    %1978 = vmatpush1.bf16.msra.mxu0 0
    %1979 = vmatprep.subr.bf16.mxu0 0
    %1980 = vmatpush1.bf16.msra.mxu0 0
    %1981 = vmatprep.subr.bf16.mxu0 0
    %1982 = vmatpush1.bf16.msra.mxu0 0
    %1983 = vmatprep.mubr.bf16.mxu0 0
    %1984 = vmatmul.mubr.bf16.gmra.mrb[0].mxu0 0
    %v1985 = vpop.f32.mrb[0].mxu0
    %v1986 = vadd.f32 0.0, %v1985
    %v1987 = vpop.f32.mrb[0].mxu0
    %v1988 = vpop.f32.mrb[0].mxu0
    %v1989 = vpop.f32.mrb[0].mxu0
    %1990 = vdwg.mxu0
    %v1991 = vadd.f32 %v1902, %v1986
    %v1992 = vxor.u32 %v1901, 2147483648
    %v1993 = vmul.f32 %v1992, 1.442695
    %v1994 = vpow.pop %v1993
    %v1995 = vadd.f32 %v1994, 1.0
    %v1996 = vrcp.pop %v1995
    %v1997 = vmul.f32 1.0, %v1996
    %v1998 = vxor.u32 %v1991, 2147483648
    %v1999 = vmul.f32 %v1998, 1.442695
    %v2000 = vpow.pop %v1999
    %v2001 = vadd.f32 %v2000, 1.0
    %v2002 = vrcp.pop %v2001
    %v2003 = vmul.f32 1.0, %v2002
    %v2004 = vtanh.pop %v1901
    %2005 = vrot.lane.b32.xlu0 %v2004, 64
    %v2006 = vpop.permute.xlu0 %2005
    %v2007 = vtanh.pop %v1991
    %2008 = vrot.lane.b32.xlu0 %v2007, 64
    %v2009 = vpop.permute.xlu0 %2008
    %v2010 = vsub.f32 0.0, %v2006
    %v2011 = vmul.f32 %v1997, %v2010
    %v2012 = vadd.f32 %v2006, %v2011
    %v2013 = vsub.f32 0.0, %v2009
    %v2014 = vmul.f32 %v2003, %v2013
    %v2015 = vadd.f32 %v2009, %v2014
    %v2016 = vld [vmem:[%s635] sm:$0xff]
    %v2017 = vpack.c.bf16 %v2012, %v2012
    %2018 = vmatprep.subr.bf16.mxu0 0
    %2019 = vmatpush1.bf16.msra.mxu0 %v1845
    %2020 = vmatprep.subr.bf16.mxu0 0
    %2021 = vmatpush1.bf16.msra.mxu0 %v1846
    %2022 = vmatprep.subr.bf16.mxu0 0
    %2023 = vmatpush1.bf16.msra.mxu0 %v1847
    %2024 = vmatprep.subr.bf16.mxu0 0
    %2025 = vmatpush1.bf16.msra.mxu0 %v1848
    %2026 = vmatprep.subr.bf16.mxu0 0
    %2027 = vmatpush1.bf16.msra.mxu0 %v1849
    %2028 = vmatprep.subr.bf16.mxu0 0
    %2029 = vmatpush1.bf16.msra.mxu0 %v1850
    %2030 = vmatprep.subr.bf16.mxu0 0
    %2031 = vmatpush1.bf16.msra.mxu0 %v1851
    %2032 = vmatprep.subr.bf16.mxu0 0
    %2033 = vmatpush1.bf16.msra.mxu0 %v1852
    %2034 = vmatprep.subr.bf16.mxu0 0
    %2035 = vmatpush1.bf16.msra.mxu0 0
    %2036 = vmatprep.subr.bf16.mxu0 0
    %2037 = vmatpush1.bf16.msra.mxu0 0
    %2038 = vmatprep.subr.bf16.mxu0 0
    %2039 = vmatpush1.bf16.msra.mxu0 0
    %2040 = vmatprep.subr.bf16.mxu0 0
    %2041 = vmatpush1.bf16.msra.mxu0 0
    %2042 = vmatprep.subr.bf16.mxu0 0
    %2043 = vmatpush1.bf16.msra.mxu0 0
    %2044 = vmatprep.subr.bf16.mxu0 0
    %2045 = vmatpush1.bf16.msra.mxu0 0
    %2046 = vmatprep.subr.bf16.mxu0 0
    %2047 = vmatpush1.bf16.msra.mxu0 0
    %2048 = vmatprep.subr.bf16.mxu0 0
    %2049 = vmatpush1.bf16.msra.mxu0 0
    %2050 = vmatprep.mubr.bf16.mxu0 0
    %2051 = vmatmul.mubr.bf16.gmra.mrb[0].mxu0 %v2017
    %v2052 = vpop.f32.mrb[0].mxu0
    %v2053 = vadd.f32 0.0, %v2052
    %v2054 = vpop.f32.mrb[0].mxu0
    %v2055 = vpop.f32.mrb[0].mxu0
    %v2056 = vpop.f32.mrb[0].mxu0
    %2057 = vdwg.mxu0
    %v2058 = vadd.f32 %v2016, %v2053
    %v2059 = vxor.u32 %v2058, 2147483648
    %v2060 = vmul.f32 %v2059, 1.442695
    %v2061 = vpow.pop %v2060
    %v2062 = vadd.f32 %v2061, 1.0
    %v2063 = vrcp.pop %v2062
    %v2064 = vmul.f32 1.0, %v2063
    %v2065 = vtanh.pop %v2058
    %2066 = vrot.lane.b32.xlu0 %v2065, 64
    %v2067 = vpop.permute.xlu0 %2066
    %v2068 = vsub.f32 %v2012, %v2067
    %v2069 = vmul.f32 %v2064, %v2068
    %v2070 = vadd.f32 %v2067, %v2069
    %v2071 = vld [vmem:[%s751] sm:$0xff]
    %v2072 = vpack.c.bf16 %v2070, %v2070
    %2073 = vmatprep.subr.bf16.mxu0 0
    %2074 = vmatpush1.bf16.msra.mxu0 %v1845
    %2075 = vmatprep.subr.bf16.mxu0 0
    %2076 = vmatpush1.bf16.msra.mxu0 %v1846
    %2077 = vmatprep.subr.bf16.mxu0 0
    %2078 = vmatpush1.bf16.msra.mxu0 %v1847
    %2079 = vmatprep.subr.bf16.mxu0 0
    %2080 = vmatpush1.bf16.msra.mxu0 %v1848
    %2081 = vmatprep.subr.bf16.mxu0 0
    %2082 = vmatpush1.bf16.msra.mxu0 %v1849
    %2083 = vmatprep.subr.bf16.mxu0 0
    %2084 = vmatpush1.bf16.msra.mxu0 %v1850
    %2085 = vmatprep.subr.bf16.mxu0 0
    %2086 = vmatpush1.bf16.msra.mxu0 %v1851
    %2087 = vmatprep.subr.bf16.mxu0 0
    %2088 = vmatpush1.bf16.msra.mxu0 %v1852
    %2089 = vmatprep.subr.bf16.mxu0 0
    %2090 = vmatpush1.bf16.msra.mxu0 0
    %2091 = vmatprep.subr.bf16.mxu0 0
    %2092 = vmatpush1.bf16.msra.mxu0 0
    %2093 = vmatprep.subr.bf16.mxu0 0
    %2094 = vmatpush1.bf16.msra.mxu0 0
    %2095 = vmatprep.subr.bf16.mxu0 0
    %2096 = vmatpush1.bf16.msra.mxu0 0
    %2097 = vmatprep.subr.bf16.mxu0 0
    %2098 = vmatpush1.bf16.msra.mxu0 0
    %2099 = vmatprep.subr.bf16.mxu0 0
    %2100 = vmatpush1.bf16.msra.mxu0 0
    %2101 = vmatprep.subr.bf16.mxu0 0
    %2102 = vmatpush1.bf16.msra.mxu0 0
    %2103 = vmatprep.subr.bf16.mxu0 0
    %2104 = vmatpush1.bf16.msra.mxu0 0
    %2105 = vmatprep.mubr.bf16.mxu0 0
    %2106 = vmatmul.mubr.bf16.gmra.mrb[0].mxu0 %v2072
    %v2107 = vpop.f32.mrb[0].mxu0
    %v2108 = vadd.f32 0.0, %v2107
    %v2109 = vpop.f32.mrb[0].mxu0
    %v2110 = vpop.f32.mrb[0].mxu0
    %v2111 = vpop.f32.mrb[0].mxu0
    %2112 = vdwg.mxu0
    %v2113 = vadd.f32 %v2071, %v2108
    %v2114 = vxor.u32 %v2113, 2147483648
    %v2115 = vmul.f32 %v2114, 1.442695
    %v2116 = vpow.pop %v2115
    %v2117 = vadd.f32 %v2116, 1.0
    %v2118 = vrcp.pop %v2117
    %v2119 = vmul.f32 1.0, %v2118
    %v2120 = vtanh.pop %v2113
    %2121 = vrot.lane.b32.xlu0 %v2120, 64
    %v2122 = vpop.permute.xlu0 %2121
    %v2123 = vsub.f32 %v2070, %v2122
    %v2124 = vmul.f32 %v2119, %v2123
    %v2125 = vadd.f32 %v2122, %v2124
    %v2126 = vld [vmem:[%s867] sm:$0xff]
    %v2127 = vpack.c.bf16 %v2125, %v2125
    %2128 = vmatprep.subr.bf16.mxu0 0
    %2129 = vmatpush1.bf16.msra.mxu0 %v1845
    %2130 = vmatprep.subr.bf16.mxu0 0
    %2131 = vmatpush1.bf16.msra.mxu0 %v1846
    %2132 = vmatprep.subr.bf16.mxu0 0
    %2133 = vmatpush1.bf16.msra.mxu0 %v1847
    %2134 = vmatprep.subr.bf16.mxu0 0
    %2135 = vmatpush1.bf16.msra.mxu0 %v1848
    %2136 = vmatprep.subr.bf16.mxu0 0
    %2137 = vmatpush1.bf16.msra.mxu0 %v1849
    %2138 = vmatprep.subr.bf16.mxu0 0
    %2139 = vmatpush1.bf16.msra.mxu0 %v1850
    %2140 = vmatprep.subr.bf16.mxu0 0
    %2141 = vmatpush1.bf16.msra.mxu0 %v1851
    %2142 = vmatprep.subr.bf16.mxu0 0
    %2143 = vmatpush1.bf16.msra.mxu0 %v1852
    %2144 = vmatprep.subr.bf16.mxu0 0
    %2145 = vmatpush1.bf16.msra.mxu0 0
    %2146 = vmatprep.subr.bf16.mxu0 0
    %2147 = vmatpush1.bf16.msra.mxu0 0
    %2148 = vmatprep.subr.bf16.mxu0 0
    %2149 = vmatpush1.bf16.msra.mxu0 0
    %2150 = vmatprep.subr.bf16.mxu0 0
    %2151 = vmatpush1.bf16.msra.mxu0 0
    %2152 = vmatprep.subr.bf16.mxu0 0
    %2153 = vmatpush1.bf16.msra.mxu0 0
    %2154 = vmatprep.subr.bf16.mxu0 0
    %2155 = vmatpush1.bf16.msra.mxu0 0
    %2156 = vmatprep.subr.bf16.mxu0 0
    %2157 = vmatpush1.bf16.msra.mxu0 0
    %2158 = vmatprep.subr.bf16.mxu0 0
    %2159 = vmatpush1.bf16.msra.mxu0 0
    %2160 = vmatprep.mubr.bf16.mxu0 0
    %2161 = vmatmul.mubr.bf16.gmra.mrb[0].mxu0 %v2127
    %v2162 = vpop.f32.mrb[0].mxu0
    %v2163 = vadd.f32 0.0, %v2162
    %v2164 = vpop.f32.mrb[0].mxu0
    %v2165 = vpop.f32.mrb[0].mxu0
    %v2166 = vpop.f32.mrb[0].mxu0
    %2167 = vdwg.mxu0
    %v2168 = vadd.f32 %v2126, %v2163
    %v2169 = vxor.u32 %v2168, 2147483648
    %v2170 = vmul.f32 %v2169, 1.442695
    %v2171 = vpow.pop %v2170
    %v2172 = vadd.f32 %v2171, 1.0
    %v2173 = vrcp.pop %v2172
    %v2174 = vmul.f32 1.0, %v2173
    %v2175 = vtanh.pop %v2168
    %2176 = vrot.lane.b32.xlu0 %v2175, 64
    %v2177 = vpop.permute.xlu0 %2176
    %v2178 = vsub.f32 %v2125, %v2177
    %v2179 = vmul.f32 %v2174, %v2178
    %v2180 = vadd.f32 %v2177, %v2179
    %v2181 = vld [vmem:[%s983] sm:$0xff]
    %v2182 = vpack.c.bf16 %v2180, %v2180
    %2183 = vmatprep.subr.bf16.mxu0 0
    %2184 = vmatpush1.bf16.msra.mxu0 %v1845
    %2185 = vmatprep.subr.bf16.mxu0 0
    %2186 = vmatpush1.bf16.msra.mxu0 %v1846
    %2187 = vmatprep.subr.bf16.mxu0 0
    %2188 = vmatpush1.bf16.msra.mxu0 %v1847
    %2189 = vmatprep.subr.bf16.mxu0 0
    %2190 = vmatpush1.bf16.msra.mxu0 %v1848
    %2191 = vmatprep.subr.bf16.mxu0 0
    %2192 = vmatpush1.bf16.msra.mxu0 %v1849
    %2193 = vmatprep.subr.bf16.mxu0 0
    %2194 = vmatpush1.bf16.msra.mxu0 %v1850
    %2195 = vmatprep.subr.bf16.mxu0 0
    %2196 = vmatpush1.bf16.msra.mxu0 %v1851
    %2197 = vmatprep.subr.bf16.mxu0 0
    %2198 = vmatpush1.bf16.msra.mxu0 %v1852
    %2199 = vmatprep.subr.bf16.mxu0 0
    %2200 = vmatpush1.bf16.msra.mxu0 0
    %2201 = vmatprep.subr.bf16.mxu0 0
    %2202 = vmatpush1.bf16.msra.mxu0 0
    %2203 = vmatprep.subr.bf16.mxu0 0
    %2204 = vmatpush1.bf16.msra.mxu0 0
    %2205 = vmatprep.subr.bf16.mxu0 0
    %2206 = vmatpush1.bf16.msra.mxu0 0
    %2207 = vmatprep.subr.bf16.mxu0 0
    %2208 = vmatpush1.bf16.msra.mxu0 0
    %2209 = vmatprep.subr.bf16.mxu0 0
    %2210 = vmatpush1.bf16.msra.mxu0 0
    %2211 = vmatprep.subr.bf16.mxu0 0
    %2212 = vmatpush1.bf16.msra.mxu0 0
    %2213 = vmatprep.subr.bf16.mxu0 0
    %2214 = vmatpush1.bf16.msra.mxu0 0
    %2215 = vmatprep.mubr.bf16.mxu0 0
    %2216 = vmatmul.mubr.bf16.gmra.mrb[0].mxu0 %v2182
    %v2217 = vpop.f32.mrb[0].mxu0
    %v2218 = vadd.f32 0.0, %v2217
    %v2219 = vpop.f32.mrb[0].mxu0
    %v2220 = vpop.f32.mrb[0].mxu0
    %v2221 = vpop.f32.mrb[0].mxu0
    %2222 = vdwg.mxu0
    %v2223 = vadd.f32 %v2181, %v2218
    %v2224 = vxor.u32 %v2223, 2147483648
    %v2225 = vmul.f32 %v2224, 1.442695
    %v2226 = vpow.pop %v2225
    %v2227 = vadd.f32 %v2226, 1.0
    %v2228 = vrcp.pop %v2227
    %v2229 = vmul.f32 1.0, %v2228
    %v2230 = vtanh.pop %v2223
    %2231 = vrot.lane.b32.xlu0 %v2230, 64
    %v2232 = vpop.permute.xlu0 %2231
    %v2233 = vsub.f32 %v2180, %v2232
    %v2234 = vmul.f32 %v2229, %v2233
    %v2235 = vadd.f32 %v2232, %v2234
    %v2236 = vld [vmem:[%s1099] sm:$0xff]
    %v2237 = vpack.c.bf16 %v2235, %v2235
    %2238 = vmatprep.subr.bf16.mxu0 0
    %2239 = vmatpush1.bf16.msra.mxu0 %v1845
    %2240 = vmatprep.subr.bf16.mxu0 0
    %2241 = vmatpush1.bf16.msra.mxu0 %v1846
    %2242 = vmatprep.subr.bf16.mxu0 0
    %2243 = vmatpush1.bf16.msra.mxu0 %v1847
    %2244 = vmatprep.subr.bf16.mxu0 0
    %2245 = vmatpush1.bf16.msra.mxu0 %v1848
    %2246 = vmatprep.subr.bf16.mxu0 0
    %2247 = vmatpush1.bf16.msra.mxu0 %v1849
    %2248 = vmatprep.subr.bf16.mxu0 0
    %2249 = vmatpush1.bf16.msra.mxu0 %v1850
    %2250 = vmatprep.subr.bf16.mxu0 0
    %2251 = vmatpush1.bf16.msra.mxu0 %v1851
    %2252 = vmatprep.subr.bf16.mxu0 0
    %2253 = vmatpush1.bf16.msra.mxu0 %v1852
    %2254 = vmatprep.subr.bf16.mxu0 0
    %2255 = vmatpush1.bf16.msra.mxu0 0
    %2256 = vmatprep.subr.bf16.mxu0 0
    %2257 = vmatpush1.bf16.msra.mxu0 0
    %2258 = vmatprep.subr.bf16.mxu0 0
    %2259 = vmatpush1.bf16.msra.mxu0 0
    %2260 = vmatprep.subr.bf16.mxu0 0
    %2261 = vmatpush1.bf16.msra.mxu0 0
    %2262 = vmatprep.subr.bf16.mxu0 0
    %2263 = vmatpush1.bf16.msra.mxu0 0
    %2264 = vmatprep.subr.bf16.mxu0 0
    %2265 = vmatpush1.bf16.msra.mxu0 0
    %2266 = vmatprep.subr.bf16.mxu0 0
    %2267 = vmatpush1.bf16.msra.mxu0 0
    %2268 = vmatprep.subr.bf16.mxu0 0
    %2269 = vmatpush1.bf16.msra.mxu0 0
    %2270 = vmatprep.mubr.bf16.mxu0 0
    %2271 = vmatmul.mubr.bf16.gmra.mrb[0].mxu0 %v2237
    %v2272 = vpop.f32.mrb[0].mxu0
    %v2273 = vadd.f32 0.0, %v2272
    %v2274 = vpop.f32.mrb[0].mxu0
    %v2275 = vpop.f32.mrb[0].mxu0
    %v2276 = vpop.f32.mrb[0].mxu0
    %2277 = vdwg.mxu0
    %v2278 = vadd.f32 %v2236, %v2273
    %v2279 = vxor.u32 %v2278, 2147483648
    %v2280 = vmul.f32 %v2279, 1.442695
    %v2281 = vpow.pop %v2280
    %v2282 = vadd.f32 %v2281, 1.0
    %v2283 = vrcp.pop %v2282
    %v2284 = vmul.f32 1.0, %v2283
    %v2285 = vtanh.pop %v2278
    %2286 = vrot.lane.b32.xlu0 %v2285, 64
    %v2287 = vpop.permute.xlu0 %2286
    %v2288 = vsub.f32 %v2235, %v2287
    %v2289 = vmul.f32 %v2284, %v2288
    %v2290 = vadd.f32 %v2287, %v2289
    %v2291 = vld [vmem:[%s1215] sm:$0xff]
    %v2292 = vpack.c.bf16 %v2290, %v2290
    %2293 = vmatprep.subr.bf16.mxu0 0
    %2294 = vmatpush1.bf16.msra.mxu0 %v1845
    %2295 = vmatprep.subr.bf16.mxu0 0
    %2296 = vmatpush1.bf16.msra.mxu0 %v1846
    %2297 = vmatprep.subr.bf16.mxu0 0
    %2298 = vmatpush1.bf16.msra.mxu0 %v1847
    %2299 = vmatprep.subr.bf16.mxu0 0
    %2300 = vmatpush1.bf16.msra.mxu0 %v1848
    %2301 = vmatprep.subr.bf16.mxu0 0
    %2302 = vmatpush1.bf16.msra.mxu0 %v1849
    %2303 = vmatprep.subr.bf16.mxu0 0
    %2304 = vmatpush1.bf16.msra.mxu0 %v1850
    %2305 = vmatprep.subr.bf16.mxu0 0
    %2306 = vmatpush1.bf16.msra.mxu0 %v1851
    %2307 = vmatprep.subr.bf16.mxu0 0
    %2308 = vmatpush1.bf16.msra.mxu0 %v1852
    %2309 = vmatprep.subr.bf16.mxu0 0
    %2310 = vmatpush1.bf16.msra.mxu0 0
    %2311 = vmatprep.subr.bf16.mxu0 0
    %2312 = vmatpush1.bf16.msra.mxu0 0
    %2313 = vmatprep.subr.bf16.mxu0 0
    %2314 = vmatpush1.bf16.msra.mxu0 0
    %2315 = vmatprep.subr.bf16.mxu0 0
    %2316 = vmatpush1.bf16.msra.mxu0 0
    %2317 = vmatprep.subr.bf16.mxu0 0
    %2318 = vmatpush1.bf16.msra.mxu0 0
    %2319 = vmatprep.subr.bf16.mxu0 0
    %2320 = vmatpush1.bf16.msra.mxu0 0
    %2321 = vmatprep.subr.bf16.mxu0 0
    %2322 = vmatpush1.bf16.msra.mxu0 0
    %2323 = vmatprep.subr.bf16.mxu0 0
    %2324 = vmatpush1.bf16.msra.mxu0 0
    %2325 = vmatprep.mubr.bf16.mxu0 0
    %2326 = vmatmul.mubr.bf16.gmra.mrb[0].mxu0 %v2292
    %v2327 = vpop.f32.mrb[0].mxu0
    %v2328 = vadd.f32 0.0, %v2327
    %v2329 = vpop.f32.mrb[0].mxu0
    %v2330 = vpop.f32.mrb[0].mxu0
    %v2331 = vpop.f32.mrb[0].mxu0
    %2332 = vdwg.mxu0
    %v2333 = vadd.f32 %v2291, %v2328
    %v2334 = vxor.u32 %v2333, 2147483648
    %v2335 = vmul.f32 %v2334, 1.442695
    %v2336 = vpow.pop %v2335
    %v2337 = vadd.f32 %v2336, 1.0
    %v2338 = vrcp.pop %v2337
    %v2339 = vmul.f32 1.0, %v2338
    %v2340 = vtanh.pop %v2333
    %2341 = vrot.lane.b32.xlu0 %v2340, 64
    %v2342 = vpop.permute.xlu0 %2341
    %v2343 = vsub.f32 %v2290, %v2342
    %v2344 = vmul.f32 %v2339, %v2343
    %v2345 = vadd.f32 %v2342, %v2344
    %v2346 = vld [vmem:[%s1331] sm:$0xff]
    %v2347 = vpack.c.bf16 %v2345, %v2345
    %2348 = vmatprep.subr.bf16.mxu0 0
    %2349 = vmatpush1.bf16.msra.mxu0 %v1845
    %2350 = vmatprep.subr.bf16.mxu0 0
    %2351 = vmatpush1.bf16.msra.mxu0 %v1846
    %2352 = vmatprep.subr.bf16.mxu0 0
    %2353 = vmatpush1.bf16.msra.mxu0 %v1847
    %2354 = vmatprep.subr.bf16.mxu0 0
    %2355 = vmatpush1.bf16.msra.mxu0 %v1848
    %2356 = vmatprep.subr.bf16.mxu0 0
    %2357 = vmatpush1.bf16.msra.mxu0 %v1849
    %2358 = vmatprep.subr.bf16.mxu0 0
    %2359 = vmatpush1.bf16.msra.mxu0 %v1850
    %2360 = vmatprep.subr.bf16.mxu0 0
    %2361 = vmatpush1.bf16.msra.mxu0 %v1851
    %2362 = vmatprep.subr.bf16.mxu0 0
    %2363 = vmatpush1.bf16.msra.mxu0 %v1852
    %2364 = vmatprep.subr.bf16.mxu0 0
    %2365 = vmatpush1.bf16.msra.mxu0 0
    %2366 = vmatprep.subr.bf16.mxu0 0
    %2367 = vmatpush1.bf16.msra.mxu0 0
    %2368 = vmatprep.subr.bf16.mxu0 0
    %2369 = vmatpush1.bf16.msra.mxu0 0
    %2370 = vmatprep.subr.bf16.mxu0 0
    %2371 = vmatpush1.bf16.msra.mxu0 0
    %2372 = vmatprep.subr.bf16.mxu0 0
    %2373 = vmatpush1.bf16.msra.mxu0 0
    %2374 = vmatprep.subr.bf16.mxu0 0
    %2375 = vmatpush1.bf16.msra.mxu0 0
    %2376 = vmatprep.subr.bf16.mxu0 0
    %2377 = vmatpush1.bf16.msra.mxu0 0
    %2378 = vmatprep.subr.bf16.mxu0 0
    %2379 = vmatpush1.bf16.msra.mxu0 0
    %2380 = vmatprep.mubr.bf16.mxu0 0
    %2381 = vmatmul.mubr.bf16.gmra.mrb[0].mxu0 %v2347
    %v2382 = vpop.f32.mrb[0].mxu0
    %v2383 = vadd.f32 0.0, %v2382
    %v2384 = vpop.f32.mrb[0].mxu0
    %v2385 = vpop.f32.mrb[0].mxu0
    %v2386 = vpop.f32.mrb[0].mxu0
    %2387 = vdwg.mxu0
    %v2388 = vadd.f32 %v2346, %v2383
    %v2389 = vxor.u32 %v2388, 2147483648
    %v2390 = vmul.f32 %v2389, 1.442695
    %v2391 = vpow.pop %v2390
    %v2392 = vadd.f32 %v2391, 1.0
    %v2393 = vrcp.pop %v2392
    %v2394 = vmul.f32 1.0, %v2393
    %v2395 = vtanh.pop %v2388
    %2396 = vrot.lane.b32.xlu0 %v2395, 64
    %v2397 = vpop.permute.xlu0 %2396
    %v2398 = vsub.f32 %v2345, %v2397
    %v2399 = vmul.f32 %v2394, %v2398
    %v2400 = vadd.f32 %v2397, %v2399
    %v2401 = vld [vmem:[#allocation12] sm:$0xff]
    %v2402 = vld [vmem:[#allocation12 + $0x8] sm:$0xff]
    %v2403 = vld [vmem:[#allocation12 + $0x10] sm:$0xff]
    %v2404 = vld [vmem:[#allocation12 + $0x18] sm:$0xff]
    %v2405 = vld [vmem:[#allocation12 + $0x20] sm:$0xff]
    %v2406 = vld [vmem:[#allocation12 + $0x28] sm:$0xff]
    %v2407 = vld [vmem:[#allocation12 + $0x30] sm:$0xff]
    %v2408 = vld [vmem:[#allocation12 + $0x38] sm:$0xff]
    %v2409 = vld [vmem:[#allocation12 + $0x40] sm:$0xff]
    %v2410 = vld [vmem:[#allocation12 + $0x48] sm:$0xff]
    %v2411 = vld [vmem:[#allocation12 + $0x50] sm:$0xff]
    %v2412 = vld [vmem:[#allocation12 + $0x58] sm:$0xff]
    %v2413 = vld [vmem:[#allocation12 + $0x60] sm:$0xff]
    %v2414 = vld [vmem:[#allocation12 + $0x68] sm:$0xff]
    %v2415 = vld [vmem:[#allocation12 + $0x70] sm:$0xff]
    %v2416 = vld [vmem:[#allocation12 + $0x78] sm:$0xff]
    %s2417 = scalar_lea.vmem [#allocation12], 128
    %v2418 = vld [vmem:[%s2417] sm:$0xff]
    %v2419 = vld [vmem:[%s2417 + $0x8] sm:$0xff]
    %v2420 = vld [vmem:[%s2417 + $0x10] sm:$0xff]
    %v2421 = vld [vmem:[%s2417 + $0x18] sm:$0xff]
    %v2422 = vld [vmem:[%s2417 + $0x20] sm:$0xff]
    %v2423 = vld [vmem:[%s2417 + $0x28] sm:$0xff]
    %v2424 = vld [vmem:[%s2417 + $0x30] sm:$0xff]
    %v2425 = vld [vmem:[%s2417 + $0x38] sm:$0xff]
    %v2426 = vld [vmem:[%s2417 + $0x40] sm:$0xff]
    %v2427 = vld [vmem:[%s2417 + $0x48] sm:$0xff]
    %v2428 = vld [vmem:[%s2417 + $0x50] sm:$0xff]
    %v2429 = vld [vmem:[%s2417 + $0x58] sm:$0xff]
    %v2430 = vld [vmem:[%s2417 + $0x60] sm:$0xff]
    %v2431 = vld [vmem:[%s2417 + $0x68] sm:$0xff]
    %v2432 = vld [vmem:[%s2417 + $0x70] sm:$0xff]
    %v2433 = vld [vmem:[%s2417 + $0x78] sm:$0xff]
    %2434 = vmatprep.subr.mxu0 0.0
    %2435 = vmatpush1.msra.mxu0 %v2418
    %2436 = vmatprep.subr.mxu0 0.0
    %2437 = vmatpush1.msra.mxu0 %v2419
    %2438 = vmatprep.subr.mxu0 0.0
    %2439 = vmatpush1.msra.mxu0 %v2420
    %2440 = vmatprep.subr.mxu0 0.0
    %2441 = vmatpush1.msra.mxu0 %v2421
    %2442 = vmatprep.subr.mxu0 0.0
    %2443 = vmatpush1.msra.mxu0 %v2422
    %2444 = vmatprep.subr.mxu0 0.0
    %2445 = vmatpush1.msra.mxu0 %v2423
    %2446 = vmatprep.subr.mxu0 0.0
    %2447 = vmatpush1.msra.mxu0 %v2424
    %2448 = vmatprep.subr.mxu0 0.0
    %2449 = vmatpush1.msra.mxu0 %v2425
    %2450 = vmatprep.subr.mxu0 0.0
    %2451 = vmatpush1.msra.mxu0 %v2426
    %2452 = vmatprep.subr.mxu0 0.0
    %2453 = vmatpush1.msra.mxu0 %v2427
    %2454 = vmatprep.subr.mxu0 0.0
    %2455 = vmatpush1.msra.mxu0 %v2428
    %2456 = vmatprep.subr.mxu0 0.0
    %2457 = vmatpush1.msra.mxu0 %v2429
    %2458 = vmatprep.subr.mxu0 0.0
    %2459 = vmatpush1.msra.mxu0 %v2430
    %2460 = vmatprep.subr.mxu0 0.0
    %2461 = vmatpush1.msra.mxu0 %v2431
    %2462 = vmatprep.subr.mxu0 0.0
    %2463 = vmatpush1.msra.mxu0 %v2432
    %2464 = vmatprep.subr.mxu0 0.0
    %2465 = vmatpush1.msra.mxu0 %v2433
    %2466 = vmatprep.subr.mxu0 0.0
    %2467 = vmatpush1.msra.mxu0 0.0
    %2468 = vmatprep.subr.mxu0 0.0
    %2469 = vmatpush1.msra.mxu0 0.0
    %2470 = vmatprep.subr.mxu0 0.0
    %2471 = vmatpush1.msra.mxu0 0.0
    %2472 = vmatprep.subr.mxu0 0.0
    %2473 = vmatpush1.msra.mxu0 0.0
    %2474 = vmatprep.subr.mxu0 0.0
    %2475 = vmatpush1.msra.mxu0 0.0
    %2476 = vmatprep.subr.mxu0 0.0
    %2477 = vmatpush1.msra.mxu0 0.0
    %2478 = vmatprep.subr.mxu0 0.0
    %2479 = vmatpush1.msra.mxu0 0.0
    %2480 = vmatprep.subr.mxu0 0.0
    %2481 = vmatpush1.msra.mxu0 0.0
    %2482 = vmatprep.subr.mxu0 0.0
    %2483 = vmatpush1.msra.mxu0 0.0
    %2484 = vmatprep.subr.mxu0 0.0
    %2485 = vmatpush1.msra.mxu0 0.0
    %2486 = vmatprep.subr.mxu0 0.0
    %2487 = vmatpush1.msra.mxu0 0.0
    %2488 = vmatprep.subr.mxu0 0.0
    %2489 = vmatpush1.msra.mxu0 0.0
    %2490 = vmatprep.subr.mxu0 0.0
    %2491 = vmatpush1.msra.mxu0 0.0
    %2492 = vmatprep.subr.mxu0 0.0
    %2493 = vmatpush1.msra.mxu0 0.0
    %2494 = vmatprep.subr.mxu0 0.0
    %2495 = vmatpush1.msra.mxu0 0.0
    %2496 = vmatprep.subr.mxu0 0.0
    %2497 = vmatpush1.msra.mxu0 0.0
    %2498 = vmatprep.mubr.f32.mxu0 0.0
    %2499 = vmatmul.mubr.f32.gmra.mrb[0].mxu0 %v2015
    %v2500 = vpop.f32.mrb[0].mxu0
    %v2501 = vadd.f32 0.0, %v2500
    %v2502 = vpop.f32.mrb[0].mxu0
    %2503 = vdwg.mxu0
    %2504 = vmatprep.subr.mxu0 0.0
    %2505 = vmatpush1.msra.mxu0 %v2401
    %2506 = vmatprep.subr.mxu0 0.0
    %2507 = vmatpush1.msra.mxu0 %v2402
    %2508 = vmatprep.subr.mxu0 0.0
    %2509 = vmatpush1.msra.mxu0 %v2403
    %2510 = vmatprep.subr.mxu0 0.0
    %2511 = vmatpush1.msra.mxu0 %v2404
    %2512 = vmatprep.subr.mxu0 0.0
    %2513 = vmatpush1.msra.mxu0 %v2405
    %2514 = vmatprep.subr.mxu0 0.0
    %2515 = vmatpush1.msra.mxu0 %v2406
    %2516 = vmatprep.subr.mxu0 0.0
    %2517 = vmatpush1.msra.mxu0 %v2407
    %2518 = vmatprep.subr.mxu0 0.0
    %2519 = vmatpush1.msra.mxu0 %v2408
    %2520 = vmatprep.subr.mxu0 0.0
    %2521 = vmatpush1.msra.mxu0 %v2409
    %2522 = vmatprep.subr.mxu0 0.0
    %2523 = vmatpush1.msra.mxu0 %v2410
    %2524 = vmatprep.subr.mxu0 0.0
    %2525 = vmatpush1.msra.mxu0 %v2411
    %2526 = vmatprep.subr.mxu0 0.0
    %2527 = vmatpush1.msra.mxu0 %v2412
    %2528 = vmatprep.subr.mxu0 0.0
    %2529 = vmatpush1.msra.mxu0 %v2413
    %2530 = vmatprep.subr.mxu0 0.0
    %2531 = vmatpush1.msra.mxu0 %v2414
    %2532 = vmatprep.subr.mxu0 0.0
    %2533 = vmatpush1.msra.mxu0 %v2415
    %2534 = vmatprep.subr.mxu0 0.0
    %2535 = vmatpush1.msra.mxu0 %v2416
    %2536 = vmatprep.subr.mxu0 0.0
    %2537 = vmatpush1.msra.mxu0 0.0
    %2538 = vmatprep.subr.mxu0 0.0
    %2539 = vmatpush1.msra.mxu0 0.0
    %2540 = vmatprep.subr.mxu0 0.0
    %2541 = vmatpush1.msra.mxu0 0.0
    %2542 = vmatprep.subr.mxu0 0.0
    %2543 = vmatpush1.msra.mxu0 0.0
    %2544 = vmatprep.subr.mxu0 0.0
    %2545 = vmatpush1.msra.mxu0 0.0
    %2546 = vmatprep.subr.mxu0 0.0
    %2547 = vmatpush1.msra.mxu0 0.0
    %2548 = vmatprep.subr.mxu0 0.0
    %2549 = vmatpush1.msra.mxu0 0.0
    %2550 = vmatprep.subr.mxu0 0.0
    %2551 = vmatpush1.msra.mxu0 0.0
    %2552 = vmatprep.subr.mxu0 0.0
    %2553 = vmatpush1.msra.mxu0 0.0
    %2554 = vmatprep.subr.mxu0 0.0
    %2555 = vmatpush1.msra.mxu0 0.0
    %2556 = vmatprep.subr.mxu0 0.0
    %2557 = vmatpush1.msra.mxu0 0.0
    %2558 = vmatprep.subr.mxu0 0.0
    %2559 = vmatpush1.msra.mxu0 0.0
    %2560 = vmatprep.subr.mxu0 0.0
    %2561 = vmatpush1.msra.mxu0 0.0
    %2562 = vmatprep.subr.mxu0 0.0
    %2563 = vmatpush1.msra.mxu0 0.0
    %2564 = vmatprep.subr.mxu0 0.0
    %2565 = vmatpush1.msra.mxu0 0.0
    %2566 = vmatprep.subr.mxu0 0.0
    %2567 = vmatpush1.msra.mxu0 0.0
    %2568 = vmatprep.mubr.f32.mxu0 0.0
    %2569 = vmatmul.mubr.f32.gmra.mrb[0].mxu0 %v2400
    %v2570 = vpop.f32.mrb[0].mxu0
    %v2571 = vadd.f32 %v2501, %v2570
    %v2572 = vpop.f32.mrb[0].mxu0
    %2573 = vdwg.mxu0
    %v2574 = vld [vmem:[%s5] sm:$0x1]
    %v2576 = vlaneseq
    %v2577 = vshrl.u32 %v2576, 7
    %v2578 = vsub.s32 0, %v2577
    %v2579 = vrot.slane %v2574, %v2578
    %v2581 = vadd.f32 %v2571, %v2579
    %2582 = vst [vmem:[%s6] sm:$0xff] %v2581
    // Predicated region
    $region38: #{forward.1} parent=1 // pred_check
      _
    $region39: #{forward.1} parent=1 // pred_check_branch
      %2584 = sbr.rel (0) target = $region41
    $region40: #{forward.1} parent=1 // pred_region
      _
    $region41: #{forward.1} parent=1 // pred_fallthru
      _
    // Predicated region
    $region42: #{forward.1} parent=1 // pred_check
      _
    $region43: #{forward.1} parent=1 // pred_check_branch
      %2586 = sbr.rel (0) target = $region45
    $region44: #{forward.1} parent=1 // pred_region
      _
    $region45: #{forward.1} parent=1 // pred_fallthru
      _
    %2587 = vsyncpa [#allocation9], 1
    %2588 = vsyncpa [#allocation11], 1

</llo_original>
